<compile_context>
chip_gen: v7x
topology: tpu7x:2x2x1
jax: 0.10.0
libtpu: 0.0.40
codegen_flags: <defaults>
</compile_context>

<pallas_src>
import functools

import jax
import jax.numpy as jnp
from jax.experimental import pallas as pl
from jax.experimental.pallas import tpu as pltpu

D_IN_FC = 768 * 2   # 1536
D_FC    = 768
D_H1    = 512
D_H2    = 256
D_OUT   = 256

_W_DTYPE = jnp.bfloat16   # weight / activation / matmul-input dtype (accumulate in f32)


def _round_up(x, m):
    return ((x + m - 1) // m) * m


def _cdiv(a, b):
    return -(-a // b)


# ----------------------------- Pallas kernels -----------------------------

def _fused_fc_mlp_kernel(x_ref, wfc_ref, bfc_ref,
                         w1_ref, b1_ref, w2_ref, b2_ref, w3_ref, b3_ref,
                         o_ref):
    # fc: Linear(1536 -> 768) + ReLU   (Dropout is identity in eval mode)
    h = jnp.dot(x_ref[...], wfc_ref[...], preferred_element_type=jnp.float32)
    h = jnp.maximum(h + bfc_ref[...], 0.0).astype(_W_DTYPE)
    # mlp: Linear(768 -> 512) + ReLU
    h = jnp.dot(h, w1_ref[...], preferred_element_type=jnp.float32)
    h = jnp.maximum(h + b1_ref[...], 0.0).astype(_W_DTYPE)
    # mlp: Linear(512 -> 256) + ReLU
    h = jnp.dot(h, w2_ref[...], preferred_element_type=jnp.float32)
    h = jnp.maximum(h + b2_ref[...], 0.0).astype(_W_DTYPE)
    # mlp: Linear(256 -> 256)  (no activation)
    h = jnp.dot(h, w3_ref[...], preferred_element_type=jnp.float32)
    o_ref[...] = (h + b3_ref[...]).astype(o_ref.dtype)


def _fused_mlp_kernel(x_ref, w1_ref, b1_ref, w2_ref, b2_ref, w3_ref, b3_ref,
                      o_ref):
    # is_classname=True path: skip self.fc, run only the mlp stack.
    h = jnp.dot(x_ref[...], w1_ref[...], preferred_element_type=jnp.float32)
    h = jnp.maximum(h + b1_ref[...], 0.0).astype(_W_DTYPE)
    h = jnp.dot(h, w2_ref[...], preferred_element_type=jnp.float32)
    h = jnp.maximum(h + b2_ref[...], 0.0).astype(_W_DTYPE)
    h = jnp.dot(h, w3_ref[...], preferred_element_type=jnp.float32)
    o_ref[...] = (h + b3_ref[...]).astype(o_ref.dtype)


# ------------------------------- wrapper ----------------------------------

def _const_spec(shape):
    # Weight / bias: whole array, constant block index -> DMA'd once and stays
    # VMEM-resident across all batch tiles. Single-buffered (never re-DMA'd),
    # which avoids a dead second buffer (~3.5 MB of weights).
    nd = len(shape)
    return pl.BlockSpec(shape, lambda i, _nd=nd: (0,) * _nd,
                        pipeline_mode=pl.Buffered(1))


@functools.partial(jax.jit, static_argnames=("is_classname", "tile_m"))
def mymodel_forward(x, params, is_classname=False, tile_m=512):
    """params: dict with 'fc_w','fc_b','w1','b1','w2','b2','w3','b3'.

    Weights are [in, out] bf16, biases are [1, out] f32, x is [B, in].
    Returns f32 [B, 256].
    """
    B = x.shape[0]
    d_in = D_FC if is_classname else D_IN_FC
    assert x.shape[1] == d_in, (x.shape, d_in)

    # bf16 activation I/O: halves the dominant per-step HBM stream.
    x = x.astype(_W_DTYPE)

    # Tile selection:
    #  * padding-aware: choose the number of tiles first, then the smallest
    #    8-aligned tile that covers B (no blind round-up-to-tile_m padding).
    #  * v7x: when B >= 128, force >= 2 tiles so the "parallel" axis can shard
    #    across the two TensorCores (free on single-TC v5e/v6e).
    n_tiles = max(_cdiv(B, tile_m), 2 if B >= 128 else 1)
    TM = _round_up(_cdiv(B, n_tiles), 8)
    B_pad = TM * n_tiles
    if B_pad != B:
        x = jnp.pad(x, ((0, B_pad - B), (0, 0)))
    grid = (n_tiles,)

    if is_classname:
        kernel = _fused_mlp_kernel
        weights = (params["w1"], params["b1"],
                   params["w2"], params["b2"],
                   params["w3"], params["b3"])
        flops = 2 * B_pad * (D_FC * D_H1 + D_H1 * D_H2 + D_H2 * D_OUT)
    else:
        kernel = _fused_fc_mlp_kernel
        weights = (params["fc_w"], params["fc_b"],
                   params["w1"], params["b1"],
                   params["w2"], params["b2"],
                   params["w3"], params["b3"])
        flops = 2 * B_pad * (D_IN_FC * D_FC + D_FC * D_H1 + D_H1 * D_H2
                             + D_H2 * D_OUT)

    weight_bytes = sum(int(w.size) * w.dtype.itemsize for w in weights)
    bytes_accessed = (weight_bytes
                      + B_pad * d_in * 2       # x (bf16)
                      + B_pad * D_OUT * 4)     # out (f32)

    in_specs = ([pl.BlockSpec((TM, d_in), lambda i: (i, 0))]
                + [_const_spec(w.shape) for w in weights])
    out_spec = pl.BlockSpec((TM, D_OUT), lambda i: (i, 0))

    out = pl.pallas_call(
        kernel,
        grid=grid,
        in_specs=in_specs,
        out_specs=out_spec,
        out_shape=jax.ShapeDtypeStruct((B_pad, D_OUT), jnp.float32),
        compiler_params=pltpu.CompilerParams(
            dimension_semantics=("parallel",),
            vmem_limit_bytes=32 << 20,          # legal on v5e/v6e/v7x; >> working set
        ),
        cost_estimate=pl.CostEstimate(
            flops=flops, transcendentals=0, bytes_accessed=bytes_accessed),
    )(x, *weights)

    return out[:B] if B_pad != B else out


# ----------------------- deterministic parameter init ----------------------

def init_params(key):
    ks = jax.random.split(key, 8)

    def lin(kw, kb, fan_in, fan_out):
        # Kaiming-uniform-ish, deterministic; stored as [in, out] (pre-transposed).
        bound = 1.0 / jnp.sqrt(fan_in)
        w = jax.random.uniform(kw, (fan_in, fan_out), jnp.float32, -bound, bound)
        b = jax.random.uniform(kb, (1, fan_out), jnp.float32, -bound, bound)
        return w.astype(_W_DTYPE), b          # bf16 weights, f32 biases

    fc_w, fc_b = lin(ks[0], ks[1], D_IN_FC, D_FC)
    w1, b1 = lin(ks[2], ks[3], D_FC, D_H1)
    w2, b2 = lin(ks[4], ks[5], D_H1, D_H2)
    w3, b3 = lin(ks[6], ks[7], D_H2, D_OUT)
    return dict(fc_w=fc_w, fc_b=fc_b, w1=w1, b1=b1, w2=w2, b2=b2, w3=w3, b3=b3)


def reference_forward(x, p, is_classname=False):
    """Pure-JAX reference with identical numerics (bf16 matmul inputs, f32 acc).

    Note: intermediate activations are bf16 (inference-grade); drift vs a pure
    f32 PyTorch run is covered by the 2e-2 tolerance.
    """
    def mm(a, w):
        return jnp.dot(a.astype(_W_DTYPE), w.astype(_W_DTYPE),
                       preferred_element_type=jnp.float32)
    h = x
    if not is_classname:
        h = jnp.maximum(mm(h, p["fc_w"]) + p["fc_b"], 0.0)
    h = jnp.maximum(mm(h, p["w1"]) + p["b1"], 0.0)
    h = jnp.maximum(mm(h, p["w2"]) + p["b2"], 0.0)
    return mm(h, p["w3"]) + p["b3"]


if __name__ == "__main__":
    key = jax.random.PRNGKey(0)
    kp, kx1, kx2, kx3 = jax.random.split(key, 4)
    params = init_params(kp)

    B = 8  # small batch (e.g. N*K support examples)

    # is_classname=False path: fc(1536->768) + mlp
    x = jax.random.normal(kx1, (B, D_IN_FC), jnp.float32)
    out = jax.block_until_ready(mymodel_forward(x, params, is_classname=False))
    ref = reference_forward(x, params, is_classname=False)
    assert out.shape == (B, D_OUT), out.shape
    assert jnp.allclose(out, ref, atol=2e-2, rtol=2e-2), "mismatch vs reference (fc+mlp)"

    # is_classname=True path: mlp only (input dim 768)
    xc = jax.random.normal(kx2, (B, D_FC), jnp.float32)
    outc = jax.block_until_ready(mymodel_forward(xc, params, is_classname=True))
    refc = reference_forward(xc, params, is_classname=True)
    assert outc.shape == (B, D_OUT), outc.shape
    assert jnp.allclose(outc, refc, atol=2e-2, rtol=2e-2), "mismatch vs reference (mlp)"

    # Multi-tile + padding path (n_tiles=2, TM=104, B_pad=208): exercises the
    # >=2-step parallel grid and the padded-row slicing.
    Bq = 200
    xq = jax.random.normal(kx3, (Bq, D_FC), jnp.float32)
    outq = jax.block_until_ready(mymodel_forward(xq, params, is_classname=True))
    refq = reference_forward(xq, params, is_classname=True)
    assert outq.shape == (Bq, D_OUT), outq.shape
    assert jnp.allclose(outq, refq, atol=2e-2, rtol=2e-2), "mismatch vs reference (mlp, tiled)"

    print("KERNEL_OK")
</pallas_src>

<mosaic_0001>
module attributes {stable_mosaic.version = 11 : i64} {
  func.func @_fused_fc_mlp_kernel(%arg0: i32, %arg1: memref<8x1536xbf16, #tpu.memory_space<vmem>>, %arg2: memref<1536x768xbf16, #tpu.memory_space<vmem>>, %arg3: memref<1x768xf32, #tpu.memory_space<vmem>>, %arg4: memref<768x512xbf16, #tpu.memory_space<vmem>>, %arg5: memref<1x512xf32, #tpu.memory_space<vmem>>, %arg6: memref<512x256xbf16, #tpu.memory_space<vmem>>, %arg7: memref<1x256xf32, #tpu.memory_space<vmem>>, %arg8: memref<256x256xbf16, #tpu.memory_space<vmem>>, %arg9: memref<1x256xf32, #tpu.memory_space<vmem>>, %arg10: memref<8x256xf32, #tpu.memory_space<vmem>>) attributes {dimension_semantics = [#tpu.dimension_semantics<parallel>], iteration_bounds = array<i64: 1>, scalar_prefetch = 0 : i64, scratch_operands = 0 : i64, tpu.core_type = #tpu.core_type<tc>, window_params = [{transform_indices = @transform_0, window_bounds = array<i64: 8, 1536>}, {pipeline_mode = #tpu.pipeline_mode<synchronous>, transform_indices = @transform_1, window_bounds = array<i64: 1536, 768>}, {pipeline_mode = #tpu.pipeline_mode<synchronous>, transform_indices = @transform_2, window_bounds = array<i64: 1, 768>}, {pipeline_mode = #tpu.pipeline_mode<synchronous>, transform_indices = @transform_3, window_bounds = array<i64: 768, 512>}, {pipeline_mode = #tpu.pipeline_mode<synchronous>, transform_indices = @transform_4, window_bounds = array<i64: 1, 512>}, {pipeline_mode = #tpu.pipeline_mode<synchronous>, transform_indices = @transform_5, window_bounds = array<i64: 512, 256>}, {pipeline_mode = #tpu.pipeline_mode<synchronous>, transform_indices = @transform_6, window_bounds = array<i64: 1, 256>}, {pipeline_mode = #tpu.pipeline_mode<synchronous>, transform_indices = @transform_7, window_bounds = array<i64: 256, 256>}, {pipeline_mode = #tpu.pipeline_mode<synchronous>, transform_indices = @transform_8, window_bounds = array<i64: 1, 256>}, {transform_indices = @transform_9, window_bounds = array<i64: 8, 256>}]} {
    %c0 = arith.constant 0 : index
    %c0_0 = arith.constant 0 : index
    %0 = vector.load %arg1[%c0, %c0_0] : memref<8x1536xbf16, #tpu.memory_space<vmem>>, vector<8x1536xbf16>
    %c0_1 = arith.constant 0 : index
    %c0_2 = arith.constant 0 : index
    %1 = vector.load %arg2[%c0_1, %c0_2] : memref<1536x768xbf16, #tpu.memory_space<vmem>>, vector<1536x768xbf16>
    %cst = arith.constant dense<0.000000e+00> : vector<8x768xf32>
    %2 = tpu.matmul %0, %1, %cst {dimension_numbers = #tpu.dot_dimension_numbers<[1], [0], [0], [1], [0, 0, 1, 1], [], []>} : vector<8x1536xbf16>, vector<1536x768xbf16>, vector<8x768xf32> -> vector<8x768xf32>
    %c0_3 = arith.constant 0 : index
    %c0_4 = arith.constant 0 : index
    %3 = vector.load %arg3[%c0_3, %c0_4] : memref<1x768xf32, #tpu.memory_space<vmem>>, vector<1x768xf32>
    %4 = vector.broadcast %3 : vector<1x768xf32> to vector<8x768xf32>
    %5 = arith.addf %2, %4 : vector<8x768xf32>
    %cst_5 = arith.constant 0.000000e+00 : f32
    %6 = vector.broadcast %cst_5 : f32 to vector<8x768xf32>
    %7 = arith.maximumf %5, %6 : vector<8x768xf32>
    %8 = arith.truncf %7 : vector<8x768xf32> to vector<8x768xbf16>
    %c0_6 = arith.constant 0 : index
    %c0_7 = arith.constant 0 : index
    %9 = vector.load %arg4[%c0_6, %c0_7] : memref<768x512xbf16, #tpu.memory_space<vmem>>, vector<768x512xbf16>
    %cst_8 = arith.constant dense<0.000000e+00> : vector<8x512xf32>
    %10 = tpu.matmul %8, %9, %cst_8 {dimension_numbers = #tpu.dot_dimension_numbers<[1], [0], [0], [1], [0, 0, 1, 1], [], []>} : vector<8x768xbf16>, vector<768x512xbf16>, vector<8x512xf32> -> vector<8x512xf32>
    %c0_9 = arith.constant 0 : index
    %c0_10 = arith.constant 0 : index
    %11 = vector.load %arg5[%c0_9, %c0_10] : memref<1x512xf32, #tpu.memory_space<vmem>>, vector<1x512xf32>
    %12 = vector.broadcast %11 : vector<1x512xf32> to vector<8x512xf32>
    %13 = arith.addf %10, %12 : vector<8x512xf32>
    %cst_11 = arith.constant 0.000000e+00 : f32
    %14 = vector.broadcast %cst_11 : f32 to vector<8x512xf32>
    %15 = arith.maximumf %13, %14 : vector<8x512xf32>
    %16 = arith.truncf %15 : vector<8x512xf32> to vector<8x512xbf16>
    %c0_12 = arith.constant 0 : index
    %c0_13 = arith.constant 0 : index
    %17 = vector.load %arg6[%c0_12, %c0_13] : memref<512x256xbf16, #tpu.memory_space<vmem>>, vector<512x256xbf16>
    %cst_14 = arith.constant dense<0.000000e+00> : vector<8x256xf32>
    %18 = tpu.matmul %16, %17, %cst_14 {dimension_numbers = #tpu.dot_dimension_numbers<[1], [0], [0], [1], [0, 0, 1, 1], [], []>} : vector<8x512xbf16>, vector<512x256xbf16>, vector<8x256xf32> -> vector<8x256xf32>
    %c0_15 = arith.constant 0 : index
    %c0_16 = arith.constant 0 : index
    %19 = vector.load %arg7[%c0_15, %c0_16] : memref<1x256xf32, #tpu.memory_space<vmem>>, vector<1x256xf32>
    %20 = vector.broadcast %19 : vector<1x256xf32> to vector<8x256xf32>
    %21 = arith.addf %18, %20 : vector<8x256xf32>
    %cst_17 = arith.constant 0.000000e+00 : f32
    %22 = vector.broadcast %cst_17 : f32 to vector<8x256xf32>
    %23 = arith.maximumf %21, %22 : vector<8x256xf32>
    %24 = arith.truncf %23 : vector<8x256xf32> to vector<8x256xbf16>
    %c0_18 = arith.constant 0 : index
    %c0_19 = arith.constant 0 : index
    %25 = vector.load %arg8[%c0_18, %c0_19] : memref<256x256xbf16, #tpu.memory_space<vmem>>, vector<256x256xbf16>
    %cst_20 = arith.constant dense<0.000000e+00> : vector<8x256xf32>
    %26 = tpu.matmul %24, %25, %cst_20 {dimension_numbers = #tpu.dot_dimension_numbers<[1], [0], [0], [1], [0, 0, 1, 1], [], []>} : vector<8x256xbf16>, vector<256x256xbf16>, vector<8x256xf32> -> vector<8x256xf32>
    %c0_21 = arith.constant 0 : index
    %c0_22 = arith.constant 0 : index
    %27 = vector.load %arg9[%c0_21, %c0_22] : memref<1x256xf32, #tpu.memory_space<vmem>>, vector<1x256xf32>
    %28 = vector.broadcast %27 : vector<1x256xf32> to vector<8x256xf32>
    %29 = arith.addf %26, %28 : vector<8x256xf32>
    %c0_23 = arith.constant 0 : index
    %c0_24 = arith.constant 0 : index
    %30 = vector.load %arg10[%c0_23, %c0_24] : memref<8x256xf32, #tpu.memory_space<vmem>>, vector<8x256xf32>
    tpu.vector_store %arg10[%c0_23, %c0_24], %29 {strides = array<i32>} : memref<8x256xf32, #tpu.memory_space<vmem>>, vector<8x256xf32>,
    return
  }
  func.func @transform_0(%arg0: i32) -> (i32, i32) {
    %c0_i32 = arith.constant 0 : i32
    %c0_i32_0 = arith.constant 0 : i32
    return %arg0, %c0_i32 : i32, i32
  }
  func.func @transform_1(%arg0: i32) -> (i32, i32) {
    %c0_i32 = arith.constant 0 : i32
    %c0_i32_0 = arith.constant 0 : i32
    %c0_i32_1 = arith.constant 0 : i32
    return %c0_i32, %c0_i32_0 : i32, i32
  }
  func.func @transform_2(%arg0: i32) -> (i32, i32) {
    %c0_i32 = arith.constant 0 : i32
    %c0_i32_0 = arith.constant 0 : i32
    %c0_i32_1 = arith.constant 0 : i32
    return %c0_i32, %c0_i32_0 : i32, i32
  }
  func.func @transform_3(%arg0: i32) -> (i32, i32) {
    %c0_i32 = arith.constant 0 : i32
    %c0_i32_0 = arith.constant 0 : i32
    %c0_i32_1 = arith.constant 0 : i32
    return %c0_i32, %c0_i32_0 : i32, i32
  }
  func.func @transform_4(%arg0: i32) -> (i32, i32) {
    %c0_i32 = arith.constant 0 : i32
    %c0_i32_0 = arith.constant 0 : i32
    %c0_i32_1 = arith.constant 0 : i32
    return %c0_i32, %c0_i32_0 : i32, i32
  }
  func.func @transform_5(%arg0: i32) -> (i32, i32) {
    %c0_i32 = arith.constant 0 : i32
    %c0_i32_0 = arith.constant 0 : i32
    %c0_i32_1 = arith.constant 0 : i32
    return %c0_i32, %c0_i32_0 : i32, i32
  }
  func.func @transform_6(%arg0: i32) -> (i32, i32) {
    %c0_i32 = arith.constant 0 : i32
    %c0_i32_0 = arith.constant 0 : i32
    %c0_i32_1 = arith.constant 0 : i32
    return %c0_i32, %c0_i32_0 : i32, i32
  }
  func.func @transform_7(%arg0: i32) -> (i32, i32) {
    %c0_i32 = arith.constant 0 : i32
    %c0_i32_0 = arith.constant 0 : i32
    %c0_i32_1 = arith.constant 0 : i32
    return %c0_i32, %c0_i32_0 : i32, i32
  }
  func.func @transform_8(%arg0: i32) -> (i32, i32) {
    %c0_i32 = arith.constant 0 : i32
    %c0_i32_0 = arith.constant 0 : i32
    %c0_i32_1 = arith.constant 0 : i32
    return %c0_i32, %c0_i32_0 : i32, i32
  }
  func.func @transform_9(%arg0: i32) -> (i32, i32) {
    %c0_i32 = arith.constant 0 : i32
    %c0_i32_0 = arith.constant 0 : i32
    return %arg0, %c0_i32 : i32, i32
  }
}

</mosaic_0001>

<llo_original>
// kernel: mymodel_forward.1
$region0: #{mymodel_forward.1}
  #allocation0 [shape = 'u32[]', space=smem, size = 0x4, offset = 0x4, fixed_abs, tag = 'smem constant byte address 0x4 - core index']
  #allocation1 [shape = 'u32[144,128]{1,0:T(1,128)}', space=vmem, size = 0x12000, scoped, tag = 'internal scratch']
  %s0 = inlined_call_operand.vmem [shape: bf16[8,1536], index: 0, kind: input, shape index: {}]
  %s1 = inlined_call_operand.hbm [shape: bf16[1536,768], index: 1, kind: input, shape index: {}]
  %s2 = inlined_call_operand.hbm [shape: f32[1,768], index: 2, kind: input, shape index: {}]
  %s3 = inlined_call_operand.hbm [shape: bf16[768,512], index: 3, kind: input, shape index: {}]
  %s4 = inlined_call_operand.hbm [shape: f32[1,512], index: 4, kind: input, shape index: {}]
  %s5 = inlined_call_operand.hbm [shape: bf16[512,256], index: 5, kind: input, shape index: {}]
  %s6 = inlined_call_operand.hbm [shape: f32[1,256], index: 6, kind: input, shape index: {}]
  %s7 = inlined_call_operand.hbm [shape: bf16[256,256], index: 7, kind: input, shape index: {}]
  %s8 = inlined_call_operand.hbm [shape: f32[1,256], index: 8, kind: input, shape index: {}]
  %s9 = inlined_call_operand.hbm [shape: f32[8,256], index: 9, kind: output, shape index: {}]
  %s10 = sld [smem:[#allocation0]]
  $region78: #{mymodel_forward.1} parent=0
    _
  %s12 = ssub.s32 1, %s10
  %s13 = scalar_select 0, %s12, %s10
  $region1: #{mymodel_forward.1} parent=0
    #allocation2 [shape = 'u8[2359296]{0}', space=vmem, size = 0x240000, scoped, tag = 'input window, operand 1, single buffered']
    #allocation3 [shape = 's32[1]{0}', space=sflag, size = 0x4, scoped, tag = 'scoped memory for mymodel_forward.1']
    #allocation4 [shape = 's32[1]{0}', space=sflag, size = 0x4, scoped, tag = 'scoped memory for mymodel_forward.1']
    #allocation5 [shape = 'u8[3072]{0}', space=vmem, size = 0xc00, scoped, tag = 'input window, operand 2, single buffered']
    #allocation6 [shape = 's32[1]{0}', space=sflag, size = 0x4, scoped, tag = 'scoped memory for mymodel_forward.1']
    #allocation7 [shape = 'u8[786432]{0}', space=vmem, size = 0xc0000, scoped, tag = 'input window, operand 3, single buffered']
    #allocation8 [shape = 'u8[2048]{0}', space=vmem, size = 0x800, scoped, tag = 'input window, operand 4, single buffered']
    #allocation9 [shape = 's32[1]{0}', space=sflag, size = 0x4, scoped, tag = 'scoped memory for mymodel_forward.1']
    #allocation10 [shape = 'u8[262144]{0}', space=vmem, size = 0x40000, scoped, tag = 'input window, operand 5, single buffered']
    #allocation11 [shape = 'u8[1024]{0}', space=vmem, size = 0x400, scoped, tag = 'input window, operand 6, single buffered']
    #allocation12 [shape = 's32[1]{0}', space=sflag, size = 0x4, scoped, tag = 'scoped memory for mymodel_forward.1']
    #allocation13 [shape = 'u8[131072]{0}', space=vmem, size = 0x20000, scoped, tag = 'input window, operand 7, single buffered']
    #allocation14 [shape = 'u8[1024]{0}', space=vmem, size = 0x400, scoped, tag = 'input window, operand 8, single buffered']
    #allocation15 [shape = 's32[1]{0}', space=sflag, size = 0x4, scoped, tag = 'scoped memory for mymodel_forward.1']
    #allocation16 [shape = 'u8[8192]{0}', space=vmem, size = 0x2000, scoped, tag = 'output window, operand 0, single buffered']
    %14 = vsyncpa [#allocation3], 0
    %15 = vsyncpa [#allocation6], 0
    %16 = vsyncpa [#allocation9], 0
    %17 = vsyncpa [#allocation12], 0
    %18 = vsyncpa [#allocation15], 0
    %19 = vsyncpa [#allocation4], 0
    // Predicated region
    $region2: #{mymodel_forward.1} parent=1 // pred_check
      _
    $region3: #{mymodel_forward.1} parent=1 // pred_check_branch
      %21 = sbr.rel (0) target = $region5
    $region4: #{mymodel_forward.1} parent=1 // pred_region
      _
    $region5: #{mymodel_forward.1} parent=1 // pred_fallthru
      _
    // Predicated region
    $region6: #{mymodel_forward.1} parent=1 // pred_check
      _
    $region7: #{mymodel_forward.1} parent=1 // pred_check_branch
      %23 = sbr.rel (0) target = $region9
    $region8: #{mymodel_forward.1} parent=1 // pred_region
      %s25 = ssub.s32 73728, 73728
      %26 = vsyncadd [#allocation3], %s25
      %s27 = sshll.u32 [#allocation2], 4
      %s28 = int_to_ptr.vmem [resolvable:$true] %s27
      %33 = dma.hbm_to_vmem [thread:$0]  %s1, 73728, %s28, [#allocation3], 384, 384, 24
    $region9: #{mymodel_forward.1} parent=1 // pred_fallthru
      _
    // Predicated region
    $region10: #{mymodel_forward.1} parent=1 // pred_check
      _
    $region11: #{mymodel_forward.1} parent=1 // pred_check_branch
      %35 = sbr.rel (0) target = $region13
    $region12: #{mymodel_forward.1} parent=1 // pred_region
      %s37 = ssub.s32 96, 96
      %38 = vsyncadd [#allocation6], %s37
      %s40 = sshll.u32 [#allocation5], 4
      %s41 = int_to_ptr.vmem [resolvable:$true] %s40
      %43 = dma.hbm_to_vmem [thread:$0]  %s2, 96, %s41, [#allocation6]
    $region13: #{mymodel_forward.1} parent=1 // pred_fallthru
      _
    // Predicated region
    $region14: #{mymodel_forward.1} parent=1 // pred_check
      _
    $region15: #{mymodel_forward.1} parent=1 // pred_check_branch
      %45 = sbr.rel (0) target = $region17
    $region16: #{mymodel_forward.1} parent=1 // pred_region
      %s47 = ssub.s32 24576, 24576
      %48 = vsyncadd [#allocation6], %s47
      %s49 = sshll.u32 [#allocation7], 4
      %s50 = int_to_ptr.vmem [resolvable:$true] %s49
      %55 = dma.hbm_to_vmem [thread:$0]  %s3, 24576, %s50, [#allocation6], 256, 256, 16
    $region17: #{mymodel_forward.1} parent=1 // pred_fallthru
      _
    // Predicated region
    $region18: #{mymodel_forward.1} parent=1 // pred_check
      _
    $region19: #{mymodel_forward.1} parent=1 // pred_check_branch
      %57 = sbr.rel (0) target = $region21
    $region20: #{mymodel_forward.1} parent=1 // pred_region
      %s59 = ssub.s32 64, 64
      %60 = vsyncadd [#allocation9], %s59
      %s62 = sshll.u32 [#allocation8], 4
      %s63 = int_to_ptr.vmem [resolvable:$true] %s62
      %65 = dma.hbm_to_vmem [thread:$0]  %s4, 64, %s63, [#allocation9]
    $region21: #{mymodel_forward.1} parent=1 // pred_fallthru
      _
    // Predicated region
    $region22: #{mymodel_forward.1} parent=1 // pred_check
      _
    $region23: #{mymodel_forward.1} parent=1 // pred_check_branch
      %67 = sbr.rel (0) target = $region25
    $region24: #{mymodel_forward.1} parent=1 // pred_region
      %s69 = ssub.s32 8192, 8192
      %70 = vsyncadd [#allocation9], %s69
      %s71 = sshll.u32 [#allocation10], 4
      %s72 = int_to_ptr.vmem [resolvable:$true] %s71
      %77 = dma.hbm_to_vmem [thread:$0]  %s5, 8192, %s72, [#allocation9], 128, 128, 8
    $region25: #{mymodel_forward.1} parent=1 // pred_fallthru
      _
    // Predicated region
    $region26: #{mymodel_forward.1} parent=1 // pred_check
      _
    $region27: #{mymodel_forward.1} parent=1 // pred_check_branch
      %79 = sbr.rel (0) target = $region29
    $region28: #{mymodel_forward.1} parent=1 // pred_region
      %s81 = ssub.s32 32, 32
      %82 = vsyncadd [#allocation12], %s81
      %s84 = sshll.u32 [#allocation11], 4
      %s85 = int_to_ptr.vmem [resolvable:$true] %s84
      %87 = dma.hbm_to_vmem [thread:$0]  %s6, 32, %s85, [#allocation12]
    $region29: #{mymodel_forward.1} parent=1 // pred_fallthru
      _
    // Predicated region
    $region30: #{mymodel_forward.1} parent=1 // pred_check
      _
    $region31: #{mymodel_forward.1} parent=1 // pred_check_branch
      %89 = sbr.rel (0) target = $region33
    $region32: #{mymodel_forward.1} parent=1 // pred_region
      %s91 = ssub.s32 4096, 4096
      %92 = vsyncadd [#allocation12], %s91
      %s93 = sshll.u32 [#allocation13], 4
      %s94 = int_to_ptr.vmem [resolvable:$true] %s93
      %99 = dma.hbm_to_vmem [thread:$0]  %s7, 4096, %s94, [#allocation12], 128, 128, 8
    $region33: #{mymodel_forward.1} parent=1 // pred_fallthru
      _
    // Predicated region
    $region34: #{mymodel_forward.1} parent=1 // pred_check
      _
    $region35: #{mymodel_forward.1} parent=1 // pred_check_branch
      %101 = sbr.rel (0) target = $region37
    $region36: #{mymodel_forward.1} parent=1 // pred_region
      %s103 = ssub.s32 32, 32
      %104 = vsyncadd [#allocation15], %s103
      %s106 = sshll.u32 [#allocation14], 4
      %s107 = int_to_ptr.vmem [resolvable:$true] %s106
      %109 = dma.hbm_to_vmem [thread:$0]  %s8, 32, %s107, [#allocation15]
    $region37: #{mymodel_forward.1} parent=1 // pred_fallthru
      _
    // Predicated region
    $region38: #{mymodel_forward.1} parent=1 // pred_check
      _
    $region39: #{mymodel_forward.1} parent=1 // pred_check_branch
      %111 = sbr.rel (0) target = $region41
    $region40: #{mymodel_forward.1} parent=1 // pred_region
      %112 = dma.done [#allocation3], 73728
    $region41: #{mymodel_forward.1} parent=1 // pred_fallthru
      _
    // Predicated region
    $region42: #{mymodel_forward.1} parent=1 // pred_check
      _
    $region43: #{mymodel_forward.1} parent=1 // pred_check_branch
      %114 = sbr.rel (0) target = $region45
    $region44: #{mymodel_forward.1} parent=1 // pred_region
      %115 = dma.done [#allocation6], 96
    $region45: #{mymodel_forward.1} parent=1 // pred_fallthru
      _
    // Predicated region
    $region46: #{mymodel_forward.1} parent=1 // pred_check
      _
    $region47: #{mymodel_forward.1} parent=1 // pred_check_branch
      %117 = sbr.rel (0) target = $region49
    $region48: #{mymodel_forward.1} parent=1 // pred_region
      %118 = dma.done [#allocation6], 24576
    $region49: #{mymodel_forward.1} parent=1 // pred_fallthru
      _
    // Predicated region
    $region50: #{mymodel_forward.1} parent=1 // pred_check
      _
    $region51: #{mymodel_forward.1} parent=1 // pred_check_branch
      %120 = sbr.rel (0) target = $region53
    $region52: #{mymodel_forward.1} parent=1 // pred_region
      %121 = dma.done [#allocation9], 64
    $region53: #{mymodel_forward.1} parent=1 // pred_fallthru
      _
    // Predicated region
    $region54: #{mymodel_forward.1} parent=1 // pred_check
      _
    $region55: #{mymodel_forward.1} parent=1 // pred_check_branch
      %123 = sbr.rel (0) target = $region57
    $region56: #{mymodel_forward.1} parent=1 // pred_region
      %124 = dma.done [#allocation9], 8192
    $region57: #{mymodel_forward.1} parent=1 // pred_fallthru
      _
    // Predicated region
    $region58: #{mymodel_forward.1} parent=1 // pred_check
      _
    $region59: #{mymodel_forward.1} parent=1 // pred_check_branch
      %126 = sbr.rel (0) target = $region61
    $region60: #{mymodel_forward.1} parent=1 // pred_region
      %127 = dma.done [#allocation12], 32
    $region61: #{mymodel_forward.1} parent=1 // pred_fallthru
      _
    // Predicated region
    $region62: #{mymodel_forward.1} parent=1 // pred_check
      _
    $region63: #{mymodel_forward.1} parent=1 // pred_check_branch
      %129 = sbr.rel (0) target = $region65
    $region64: #{mymodel_forward.1} parent=1 // pred_region
      %130 = dma.done [#allocation12], 4096
    $region65: #{mymodel_forward.1} parent=1 // pred_fallthru
      _
    // Predicated region
    $region66: #{mymodel_forward.1} parent=1 // pred_check
      _
    $region67: #{mymodel_forward.1} parent=1 // pred_check_branch
      %132 = sbr.rel (0) target = $region69
    $region68: #{mymodel_forward.1} parent=1 // pred_region
      %133 = dma.done [#allocation15], 32
    $region69: #{mymodel_forward.1} parent=1 // pred_fallthru
      _
    %v134 = vld [vmem:[%s0] sm:$0xff]
    %v135 = vld [vmem:[%s0 + $0x8] sm:$0xff]
    %v136 = vld [vmem:[%s0 + $0x10] sm:$0xff]
    %v137 = vld [vmem:[%s0 + $0x18] sm:$0xff]
    %v138 = vld [vmem:[%s0 + $0x20] sm:$0xff]
    %v139 = vld [vmem:[%s0 + $0x28] sm:$0xff]
    %v140 = vld [vmem:[#allocation2] sm:$0xff]
    %v141 = vld [vmem:[#allocation2 + $0x8] sm:$0xff]
    %v142 = vld [vmem:[#allocation2 + $0x10] sm:$0xff]
    %v143 = vld [vmem:[#allocation2 + $0x18] sm:$0xff]
    %v144 = vld [vmem:[#allocation2 + $0x20] sm:$0xff]
    %v145 = vld [vmem:[#allocation2 + $0x28] sm:$0xff]
    %v146 = vld [vmem:[#allocation2 + $0x30] sm:$0xff]
    %v147 = vld [vmem:[#allocation2 + $0x38] sm:$0xff]
    %v148 = vld [vmem:[#allocation2 + $0x40] sm:$0xff]
    %v149 = vld [vmem:[#allocation2 + $0x48] sm:$0xff]
    %v150 = vld [vmem:[#allocation2 + $0x50] sm:$0xff]
    %v151 = vld [vmem:[#allocation2 + $0x58] sm:$0xff]
    %v152 = vld [vmem:[#allocation2 + $0x60] sm:$0xff]
    %v153 = vld [vmem:[#allocation2 + $0x68] sm:$0xff]
    %v154 = vld [vmem:[#allocation2 + $0x70] sm:$0xff]
    %v155 = vld [vmem:[#allocation2 + $0x78] sm:$0xff]
    %v156 = vld [vmem:[#allocation2 + $0x80] sm:$0xff]
    %v157 = vld [vmem:[#allocation2 + $0x88] sm:$0xff]
    %v158 = vld [vmem:[#allocation2 + $0x90] sm:$0xff]
    %v159 = vld [vmem:[#allocation2 + $0x98] sm:$0xff]
    %v160 = vld [vmem:[#allocation2 + $0xa0] sm:$0xff]
    %v161 = vld [vmem:[#allocation2 + $0xa8] sm:$0xff]
    %v162 = vld [vmem:[#allocation2 + $0xb0] sm:$0xff]
    %v163 = vld [vmem:[#allocation2 + $0xb8] sm:$0xff]
    %v164 = vld [vmem:[#allocation2 + $0xc0] sm:$0xff]
    %v165 = vld [vmem:[#allocation2 + $0xc8] sm:$0xff]
    %v166 = vld [vmem:[#allocation2 + $0xd0] sm:$0xff]
    %v167 = vld [vmem:[#allocation2 + $0xd8] sm:$0xff]
    %v168 = vld [vmem:[#allocation2 + $0xe0] sm:$0xff]
    %v169 = vld [vmem:[#allocation2 + $0xe8] sm:$0xff]
    %v170 = vld [vmem:[#allocation2 + $0xf0] sm:$0xff]
    %v171 = vld [vmem:[#allocation2 + $0xf8] sm:$0xff]
    %v172 = vld [vmem:[#allocation2 + $0x100] sm:$0xff]
    %v173 = vld [vmem:[#allocation2 + $0x108] sm:$0xff]
    %v174 = vld [vmem:[#allocation2 + $0x110] sm:$0xff]
    %v175 = vld [vmem:[#allocation2 + $0x118] sm:$0xff]
    %v176 = vld [vmem:[#allocation2 + $0x120] sm:$0xff]
    %v177 = vld [vmem:[#allocation2 + $0x128] sm:$0xff]
    %v178 = vld [vmem:[#allocation2 + $0x130] sm:$0xff]
    %v179 = vld [vmem:[#allocation2 + $0x138] sm:$0xff]
    %v180 = vld [vmem:[#allocation2 + $0x140] sm:$0xff]
    %v181 = vld [vmem:[#allocation2 + $0x148] sm:$0xff]
    %v182 = vld [vmem:[#allocation2 + $0x150] sm:$0xff]
    %v183 = vld [vmem:[#allocation2 + $0x158] sm:$0xff]
    %v184 = vld [vmem:[#allocation2 + $0x160] sm:$0xff]
    %v185 = vld [vmem:[#allocation2 + $0x168] sm:$0xff]
    %v186 = vld [vmem:[#allocation2 + $0x170] sm:$0xff]
    %v187 = vld [vmem:[#allocation2 + $0x178] sm:$0xff]
    %v188 = vld [vmem:[#allocation2 + $0x180] sm:$0xff]
    %v189 = vld [vmem:[#allocation2 + $0x188] sm:$0xff]
    %v190 = vld [vmem:[#allocation2 + $0x190] sm:$0xff]
    %v191 = vld [vmem:[#allocation2 + $0x198] sm:$0xff]
    %v192 = vld [vmem:[#allocation2 + $0x1a0] sm:$0xff]
    %v193 = vld [vmem:[#allocation2 + $0x1a8] sm:$0xff]
    %v194 = vld [vmem:[#allocation2 + $0x1b0] sm:$0xff]
    %v195 = vld [vmem:[#allocation2 + $0x1b8] sm:$0xff]
    %v196 = vld [vmem:[#allocation2 + $0x1c0] sm:$0xff]
    %v197 = vld [vmem:[#allocation2 + $0x1c8] sm:$0xff]
    %v198 = vld [vmem:[#allocation2 + $0x1d0] sm:$0xff]
    %v199 = vld [vmem:[#allocation2 + $0x1d8] sm:$0xff]
    %v200 = vld [vmem:[#allocation2 + $0x1e0] sm:$0xff]
    %v201 = vld [vmem:[#allocation2 + $0x1e8] sm:$0xff]
    %v202 = vld [vmem:[#allocation2 + $0x1f0] sm:$0xff]
    %v203 = vld [vmem:[#allocation2 + $0x1f8] sm:$0xff]
    %v204 = vld [vmem:[#allocation2 + $0x200] sm:$0xff]
    %v205 = vld [vmem:[#allocation2 + $0x208] sm:$0xff]
    %v206 = vld [vmem:[#allocation2 + $0x210] sm:$0xff]
    %v207 = vld [vmem:[#allocation2 + $0x218] sm:$0xff]
    %v208 = vld [vmem:[#allocation2 + $0x220] sm:$0xff]
    %v209 = vld [vmem:[#allocation2 + $0x228] sm:$0xff]
    %v210 = vld [vmem:[#allocation2 + $0x230] sm:$0xff]
    %v211 = vld [vmem:[#allocation2 + $0x238] sm:$0xff]
    %v212 = vld [vmem:[#allocation2 + $0x240] sm:$0xff]
    %v213 = vld [vmem:[#allocation2 + $0x248] sm:$0xff]
    %v214 = vld [vmem:[#allocation2 + $0x250] sm:$0xff]
    %v215 = vld [vmem:[#allocation2 + $0x258] sm:$0xff]
    %v216 = vld [vmem:[#allocation2 + $0x260] sm:$0xff]
    %v217 = vld [vmem:[#allocation2 + $0x268] sm:$0xff]
    %v218 = vld [vmem:[#allocation2 + $0x270] sm:$0xff]
    %v219 = vld [vmem:[#allocation2 + $0x278] sm:$0xff]
    %v220 = vld [vmem:[#allocation2 + $0x280] sm:$0xff]
    %v221 = vld [vmem:[#allocation2 + $0x288] sm:$0xff]
    %v222 = vld [vmem:[#allocation2 + $0x290] sm:$0xff]
    %v223 = vld [vmem:[#allocation2 + $0x298] sm:$0xff]
    %v224 = vld [vmem:[#allocation2 + $0x2a0] sm:$0xff]
    %v225 = vld [vmem:[#allocation2 + $0x2a8] sm:$0xff]
    %v226 = vld [vmem:[#allocation2 + $0x2b0] sm:$0xff]
    %v227 = vld [vmem:[#allocation2 + $0x2b8] sm:$0xff]
    %v228 = vld [vmem:[#allocation2 + $0x2c0] sm:$0xff]
    %v229 = vld [vmem:[#allocation2 + $0x2c8] sm:$0xff]
    %v230 = vld [vmem:[#allocation2 + $0x2d0] sm:$0xff]
    %v231 = vld [vmem:[#allocation2 + $0x2d8] sm:$0xff]
    %v232 = vld [vmem:[#allocation2 + $0x2e0] sm:$0xff]
    %v233 = vld [vmem:[#allocation2 + $0x2e8] sm:$0xff]
    %v234 = vld [vmem:[#allocation2 + $0x2f0] sm:$0xff]
    %v235 = vld [vmem:[#allocation2 + $0x2f8] sm:$0xff]
    %v236 = vld [vmem:[#allocation2 + $0x300] sm:$0xff]
    %v237 = vld [vmem:[#allocation2 + $0x308] sm:$0xff]
    %v238 = vld [vmem:[#allocation2 + $0x310] sm:$0xff]
    %v239 = vld [vmem:[#allocation2 + $0x318] sm:$0xff]
    %v240 = vld [vmem:[#allocation2 + $0x320] sm:$0xff]
    %v241 = vld [vmem:[#allocation2 + $0x328] sm:$0xff]
    %v242 = vld [vmem:[#allocation2 + $0x330] sm:$0xff]
    %v243 = vld [vmem:[#allocation2 + $0x338] sm:$0xff]
    %v244 = vld [vmem:[#allocation2 + $0x340] sm:$0xff]
    %v245 = vld [vmem:[#allocation2 + $0x348] sm:$0xff]
    %v246 = vld [vmem:[#allocation2 + $0x350] sm:$0xff]
    %v247 = vld [vmem:[#allocation2 + $0x358] sm:$0xff]
    %v248 = vld [vmem:[#allocation2 + $0x360] sm:$0xff]
    %v249 = vld [vmem:[#allocation2 + $0x368] sm:$0xff]
    %v250 = vld [vmem:[#allocation2 + $0x370] sm:$0xff]
    %v251 = vld [vmem:[#allocation2 + $0x378] sm:$0xff]
    %v252 = vld [vmem:[#allocation2 + $0x380] sm:$0xff]
    %v253 = vld [vmem:[#allocation2 + $0x388] sm:$0xff]
    %v254 = vld [vmem:[#allocation2 + $0x390] sm:$0xff]
    %v255 = vld [vmem:[#allocation2 + $0x398] sm:$0xff]
    %v256 = vld [vmem:[#allocation2 + $0x3a0] sm:$0xff]
    %v257 = vld [vmem:[#allocation2 + $0x3a8] sm:$0xff]
    %v258 = vld [vmem:[#allocation2 + $0x3b0] sm:$0xff]
    %v259 = vld [vmem:[#allocation2 + $0x3b8] sm:$0xff]
    %v260 = vld [vmem:[#allocation2 + $0x3c0] sm:$0xff]
    %v261 = vld [vmem:[#allocation2 + $0x3c8] sm:$0xff]
    %v262 = vld [vmem:[#allocation2 + $0x3d0] sm:$0xff]
    %v263 = vld [vmem:[#allocation2 + $0x3d8] sm:$0xff]
    %v264 = vld [vmem:[#allocation2 + $0x3e0] sm:$0xff]
    %v265 = vld [vmem:[#allocation2 + $0x3e8] sm:$0xff]
    %v266 = vld [vmem:[#allocation2 + $0x3f0] sm:$0xff]
    %v267 = vld [vmem:[#allocation2 + $0x3f8] sm:$0xff]
    %v268 = vld [vmem:[#allocation2 + $0x400] sm:$0xff]
    %v269 = vld [vmem:[#allocation2 + $0x408] sm:$0xff]
    %v270 = vld [vmem:[#allocation2 + $0x410] sm:$0xff]
    %v271 = vld [vmem:[#allocation2 + $0x418] sm:$0xff]
    %v272 = vld [vmem:[#allocation2 + $0x420] sm:$0xff]
    %v273 = vld [vmem:[#allocation2 + $0x428] sm:$0xff]
    %v274 = vld [vmem:[#allocation2 + $0x430] sm:$0xff]
    %v275 = vld [vmem:[#allocation2 + $0x438] sm:$0xff]
    %v276 = vld [vmem:[#allocation2 + $0x440] sm:$0xff]
    %v277 = vld [vmem:[#allocation2 + $0x448] sm:$0xff]
    %v278 = vld [vmem:[#allocation2 + $0x450] sm:$0xff]
    %v279 = vld [vmem:[#allocation2 + $0x458] sm:$0xff]
    %v280 = vld [vmem:[#allocation2 + $0x460] sm:$0xff]
    %v281 = vld [vmem:[#allocation2 + $0x468] sm:$0xff]
    %v282 = vld [vmem:[#allocation2 + $0x470] sm:$0xff]
    %v283 = vld [vmem:[#allocation2 + $0x478] sm:$0xff]
    %v284 = vld [vmem:[#allocation2 + $0x480] sm:$0xff]
    %v285 = vld [vmem:[#allocation2 + $0x488] sm:$0xff]
    %v286 = vld [vmem:[#allocation2 + $0x490] sm:$0xff]
    %v287 = vld [vmem:[#allocation2 + $0x498] sm:$0xff]
    %v288 = vld [vmem:[#allocation2 + $0x4a0] sm:$0xff]
    %v289 = vld [vmem:[#allocation2 + $0x4a8] sm:$0xff]
    %v290 = vld [vmem:[#allocation2 + $0x4b0] sm:$0xff]
    %v291 = vld [vmem:[#allocation2 + $0x4b8] sm:$0xff]
    %v292 = vld [vmem:[#allocation2 + $0x4c0] sm:$0xff]
    %v293 = vld [vmem:[#allocation2 + $0x4c8] sm:$0xff]
    %v294 = vld [vmem:[#allocation2 + $0x4d0] sm:$0xff]
    %v295 = vld [vmem:[#allocation2 + $0x4d8] sm:$0xff]
    %v296 = vld [vmem:[#allocation2 + $0x4e0] sm:$0xff]
    %v297 = vld [vmem:[#allocation2 + $0x4e8] sm:$0xff]
    %v298 = vld [vmem:[#allocation2 + $0x4f0] sm:$0xff]
    %v299 = vld [vmem:[#allocation2 + $0x4f8] sm:$0xff]
    %v300 = vld [vmem:[#allocation2 + $0x500] sm:$0xff]
    %v301 = vld [vmem:[#allocation2 + $0x508] sm:$0xff]
    %v302 = vld [vmem:[#allocation2 + $0x510] sm:$0xff]
    %v303 = vld [vmem:[#allocation2 + $0x518] sm:$0xff]
    %v304 = vld [vmem:[#allocation2 + $0x520] sm:$0xff]
    %v305 = vld [vmem:[#allocation2 + $0x528] sm:$0xff]
    %v306 = vld [vmem:[#allocation2 + $0x530] sm:$0xff]
    %v307 = vld [vmem:[#allocation2 + $0x538] sm:$0xff]
    %v308 = vld [vmem:[#allocation2 + $0x540] sm:$0xff]
    %v309 = vld [vmem:[#allocation2 + $0x548] sm:$0xff]
    %v310 = vld [vmem:[#allocation2 + $0x550] sm:$0xff]
    %v311 = vld [vmem:[#allocation2 + $0x558] sm:$0xff]
    %v312 = vld [vmem:[#allocation2 + $0x560] sm:$0xff]
    %v313 = vld [vmem:[#allocation2 + $0x568] sm:$0xff]
    %v314 = vld [vmem:[#allocation2 + $0x570] sm:$0xff]
    %v315 = vld [vmem:[#allocation2 + $0x578] sm:$0xff]
    %v316 = vld [vmem:[#allocation2 + $0x580] sm:$0xff]
    %v317 = vld [vmem:[#allocation2 + $0x588] sm:$0xff]
    %v318 = vld [vmem:[#allocation2 + $0x590] sm:$0xff]
    %v319 = vld [vmem:[#allocation2 + $0x598] sm:$0xff]
    %v320 = vld [vmem:[#allocation2 + $0x5a0] sm:$0xff]
    %v321 = vld [vmem:[#allocation2 + $0x5a8] sm:$0xff]
    %v322 = vld [vmem:[#allocation2 + $0x5b0] sm:$0xff]
    %v323 = vld [vmem:[#allocation2 + $0x5b8] sm:$0xff]
    %v324 = vld [vmem:[#allocation2 + $0x5c0] sm:$0xff]
    %v325 = vld [vmem:[#allocation2 + $0x5c8] sm:$0xff]
    %v326 = vld [vmem:[#allocation2 + $0x5d0] sm:$0xff]
    %v327 = vld [vmem:[#allocation2 + $0x5d8] sm:$0xff]
    %v328 = vld [vmem:[#allocation2 + $0x5e0] sm:$0xff]
    %v329 = vld [vmem:[#allocation2 + $0x5e8] sm:$0xff]
    %v330 = vld [vmem:[#allocation2 + $0x5f0] sm:$0xff]
    %v331 = vld [vmem:[#allocation2 + $0x5f8] sm:$0xff]
    %v332 = vld [vmem:[#allocation2 + $0x600] sm:$0xff]
    %v333 = vld [vmem:[#allocation2 + $0x608] sm:$0xff]
    %v334 = vld [vmem:[#allocation2 + $0x610] sm:$0xff]
    %v335 = vld [vmem:[#allocation2 + $0x618] sm:$0xff]
    %v336 = vld [vmem:[#allocation2 + $0x620] sm:$0xff]
    %v337 = vld [vmem:[#allocation2 + $0x628] sm:$0xff]
    %v338 = vld [vmem:[#allocation2 + $0x630] sm:$0xff]
    %v339 = vld [vmem:[#allocation2 + $0x638] sm:$0xff]
    %v340 = vld [vmem:[#allocation2 + $0x640] sm:$0xff]
    %v341 = vld [vmem:[#allocation2 + $0x648] sm:$0xff]
    %v342 = vld [vmem:[#allocation2 + $0x650] sm:$0xff]
    %v343 = vld [vmem:[#allocation2 + $0x658] sm:$0xff]
    %v344 = vld [vmem:[#allocation2 + $0x660] sm:$0xff]
    %v345 = vld [vmem:[#allocation2 + $0x668] sm:$0xff]
    %v346 = vld [vmem:[#allocation2 + $0x670] sm:$0xff]
    %v347 = vld [vmem:[#allocation2 + $0x678] sm:$0xff]
    %v348 = vld [vmem:[#allocation2 + $0x680] sm:$0xff]
    %v349 = vld [vmem:[#allocation2 + $0x688] sm:$0xff]
    %v350 = vld [vmem:[#allocation2 + $0x690] sm:$0xff]
    %v351 = vld [vmem:[#allocation2 + $0x698] sm:$0xff]
    %v352 = vld [vmem:[#allocation2 + $0x6a0] sm:$0xff]
    %v353 = vld [vmem:[#allocation2 + $0x6a8] sm:$0xff]
    %v354 = vld [vmem:[#allocation2 + $0x6b0] sm:$0xff]
    %v355 = vld [vmem:[#allocation2 + $0x6b8] sm:$0xff]
    %v356 = vld [vmem:[#allocation2 + $0x6c0] sm:$0xff]
    %v357 = vld [vmem:[#allocation2 + $0x6c8] sm:$0xff]
    %v358 = vld [vmem:[#allocation2 + $0x6d0] sm:$0xff]
    %v359 = vld [vmem:[#allocation2 + $0x6d8] sm:$0xff]
    %v360 = vld [vmem:[#allocation2 + $0x6e0] sm:$0xff]
    %v361 = vld [vmem:[#allocation2 + $0x6e8] sm:$0xff]
    %v362 = vld [vmem:[#allocation2 + $0x6f0] sm:$0xff]
    %v363 = vld [vmem:[#allocation2 + $0x6f8] sm:$0xff]
    %v364 = vld [vmem:[#allocation2 + $0x700] sm:$0xff]
    %v365 = vld [vmem:[#allocation2 + $0x708] sm:$0xff]
    %v366 = vld [vmem:[#allocation2 + $0x710] sm:$0xff]
    %v367 = vld [vmem:[#allocation2 + $0x718] sm:$0xff]
    %v368 = vld [vmem:[#allocation2 + $0x720] sm:$0xff]
    %v369 = vld [vmem:[#allocation2 + $0x728] sm:$0xff]
    %v370 = vld [vmem:[#allocation2 + $0x730] sm:$0xff]
    %v371 = vld [vmem:[#allocation2 + $0x738] sm:$0xff]
    %v372 = vld [vmem:[#allocation2 + $0x740] sm:$0xff]
    %v373 = vld [vmem:[#allocation2 + $0x748] sm:$0xff]
    %v374 = vld [vmem:[#allocation2 + $0x750] sm:$0xff]
    %v375 = vld [vmem:[#allocation2 + $0x758] sm:$0xff]
    %v376 = vld [vmem:[#allocation2 + $0x760] sm:$0xff]
    %v377 = vld [vmem:[#allocation2 + $0x768] sm:$0xff]
    %v378 = vld [vmem:[#allocation2 + $0x770] sm:$0xff]
    %v379 = vld [vmem:[#allocation2 + $0x778] sm:$0xff]
    %v380 = vld [vmem:[#allocation2 + $0x780] sm:$0xff]
    %v381 = vld [vmem:[#allocation2 + $0x788] sm:$0xff]
    %v382 = vld [vmem:[#allocation2 + $0x790] sm:$0xff]
    %v383 = vld [vmem:[#allocation2 + $0x798] sm:$0xff]
    %v384 = vld [vmem:[#allocation2 + $0x7a0] sm:$0xff]
    %v385 = vld [vmem:[#allocation2 + $0x7a8] sm:$0xff]
    %v386 = vld [vmem:[#allocation2 + $0x7b0] sm:$0xff]
    %v387 = vld [vmem:[#allocation2 + $0x7b8] sm:$0xff]
    %v388 = vld [vmem:[#allocation2 + $0x7c0] sm:$0xff]
    %v389 = vld [vmem:[#allocation2 + $0x7c8] sm:$0xff]
    %v390 = vld [vmem:[#allocation2 + $0x7d0] sm:$0xff]
    %v391 = vld [vmem:[#allocation2 + $0x7d8] sm:$0xff]
    %v392 = vld [vmem:[#allocation2 + $0x7e0] sm:$0xff]
    %v393 = vld [vmem:[#allocation2 + $0x7e8] sm:$0xff]
    %v394 = vld [vmem:[#allocation2 + $0x7f0] sm:$0xff]
    %v395 = vld [vmem:[#allocation2 + $0x7f8] sm:$0xff]
    %v396 = vld [vmem:[#allocation2 + $0x800] sm:$0xff]
    %v397 = vld [vmem:[#allocation2 + $0x808] sm:$0xff]
    %v398 = vld [vmem:[#allocation2 + $0x810] sm:$0xff]
    %v399 = vld [vmem:[#allocation2 + $0x818] sm:$0xff]
    %v400 = vld [vmem:[#allocation2 + $0x820] sm:$0xff]
    %v401 = vld [vmem:[#allocation2 + $0x828] sm:$0xff]
    %v402 = vld [vmem:[#allocation2 + $0x830] sm:$0xff]
    %v403 = vld [vmem:[#allocation2 + $0x838] sm:$0xff]
    %v404 = vld [vmem:[#allocation2 + $0x840] sm:$0xff]
    %v405 = vld [vmem:[#allocation2 + $0x848] sm:$0xff]
    %v406 = vld [vmem:[#allocation2 + $0x850] sm:$0xff]
    %v407 = vld [vmem:[#allocation2 + $0x858] sm:$0xff]
    %v408 = vld [vmem:[#allocation2 + $0x860] sm:$0xff]
    %v409 = vld [vmem:[#allocation2 + $0x868] sm:$0xff]
    %v410 = vld [vmem:[#allocation2 + $0x870] sm:$0xff]
    %v411 = vld [vmem:[#allocation2 + $0x878] sm:$0xff]
    %v412 = vld [vmem:[#allocation2 + $0x880] sm:$0xff]
    %v413 = vld [vmem:[#allocation2 + $0x888] sm:$0xff]
    %v414 = vld [vmem:[#allocation2 + $0x890] sm:$0xff]
    %v415 = vld [vmem:[#allocation2 + $0x898] sm:$0xff]
    %v416 = vld [vmem:[#allocation2 + $0x8a0] sm:$0xff]
    %v417 = vld [vmem:[#allocation2 + $0x8a8] sm:$0xff]
    %v418 = vld [vmem:[#allocation2 + $0x8b0] sm:$0xff]
    %v419 = vld [vmem:[#allocation2 + $0x8b8] sm:$0xff]
    %v420 = vld [vmem:[#allocation2 + $0x8c0] sm:$0xff]
    %v421 = vld [vmem:[#allocation2 + $0x8c8] sm:$0xff]
    %v422 = vld [vmem:[#allocation2 + $0x8d0] sm:$0xff]
    %v423 = vld [vmem:[#allocation2 + $0x8d8] sm:$0xff]
    %v424 = vld [vmem:[#allocation2 + $0x8e0] sm:$0xff]
    %v425 = vld [vmem:[#allocation2 + $0x8e8] sm:$0xff]
    %v426 = vld [vmem:[#allocation2 + $0x8f0] sm:$0xff]
    %v427 = vld [vmem:[#allocation2 + $0x8f8] sm:$0xff]
    %v428 = vld [vmem:[#allocation2 + $0x900] sm:$0xff]
    %v429 = vld [vmem:[#allocation2 + $0x908] sm:$0xff]
    %v430 = vld [vmem:[#allocation2 + $0x910] sm:$0xff]
    %v431 = vld [vmem:[#allocation2 + $0x918] sm:$0xff]
    %v432 = vld [vmem:[#allocation2 + $0x920] sm:$0xff]
    %v433 = vld [vmem:[#allocation2 + $0x928] sm:$0xff]
    %v434 = vld [vmem:[#allocation2 + $0x930] sm:$0xff]
    %v435 = vld [vmem:[#allocation2 + $0x938] sm:$0xff]
    %v436 = vld [vmem:[#allocation2 + $0x940] sm:$0xff]
    %v437 = vld [vmem:[#allocation2 + $0x948] sm:$0xff]
    %v438 = vld [vmem:[#allocation2 + $0x950] sm:$0xff]
    %v439 = vld [vmem:[#allocation2 + $0x958] sm:$0xff]
    %v440 = vld [vmem:[#allocation2 + $0x960] sm:$0xff]
    %v441 = vld [vmem:[#allocation2 + $0x968] sm:$0xff]
    %v442 = vld [vmem:[#allocation2 + $0x970] sm:$0xff]
    %v443 = vld [vmem:[#allocation2 + $0x978] sm:$0xff]
    %v444 = vld [vmem:[#allocation2 + $0x980] sm:$0xff]
    %v445 = vld [vmem:[#allocation2 + $0x988] sm:$0xff]
    %v446 = vld [vmem:[#allocation2 + $0x990] sm:$0xff]
    %v447 = vld [vmem:[#allocation2 + $0x998] sm:$0xff]
    %v448 = vld [vmem:[#allocation2 + $0x9a0] sm:$0xff]
    %v449 = vld [vmem:[#allocation2 + $0x9a8] sm:$0xff]
    %v450 = vld [vmem:[#allocation2 + $0x9b0] sm:$0xff]
    %v451 = vld [vmem:[#allocation2 + $0x9b8] sm:$0xff]
    %v452 = vld [vmem:[#allocation2 + $0x9c0] sm:$0xff]
    %v453 = vld [vmem:[#allocation2 + $0x9c8] sm:$0xff]
    %v454 = vld [vmem:[#allocation2 + $0x9d0] sm:$0xff]
    %v455 = vld [vmem:[#allocation2 + $0x9d8] sm:$0xff]
    %v456 = vld [vmem:[#allocation2 + $0x9e0] sm:$0xff]
    %v457 = vld [vmem:[#allocation2 + $0x9e8] sm:$0xff]
    %v458 = vld [vmem:[#allocation2 + $0x9f0] sm:$0xff]
    %v459 = vld [vmem:[#allocation2 + $0x9f8] sm:$0xff]
    %v460 = vld [vmem:[#allocation2 + $0xa00] sm:$0xff]
    %v461 = vld [vmem:[#allocation2 + $0xa08] sm:$0xff]
    %v462 = vld [vmem:[#allocation2 + $0xa10] sm:$0xff]
    %v463 = vld [vmem:[#allocation2 + $0xa18] sm:$0xff]
    %v464 = vld [vmem:[#allocation2 + $0xa20] sm:$0xff]
    %v465 = vld [vmem:[#allocation2 + $0xa28] sm:$0xff]
    %v466 = vld [vmem:[#allocation2 + $0xa30] sm:$0xff]
    %v467 = vld [vmem:[#allocation2 + $0xa38] sm:$0xff]
    %v468 = vld [vmem:[#allocation2 + $0xa40] sm:$0xff]
    %v469 = vld [vmem:[#allocation2 + $0xa48] sm:$0xff]
    %v470 = vld [vmem:[#allocation2 + $0xa50] sm:$0xff]
    %v471 = vld [vmem:[#allocation2 + $0xa58] sm:$0xff]
    %v472 = vld [vmem:[#allocation2 + $0xa60] sm:$0xff]
    %v473 = vld [vmem:[#allocation2 + $0xa68] sm:$0xff]
    %v474 = vld [vmem:[#allocation2 + $0xa70] sm:$0xff]
    %v475 = vld [vmem:[#allocation2 + $0xa78] sm:$0xff]
    %v476 = vld [vmem:[#allocation2 + $0xa80] sm:$0xff]
    %v477 = vld [vmem:[#allocation2 + $0xa88] sm:$0xff]
    %v478 = vld [vmem:[#allocation2 + $0xa90] sm:$0xff]
    %v479 = vld [vmem:[#allocation2 + $0xa98] sm:$0xff]
    %v480 = vld [vmem:[#allocation2 + $0xaa0] sm:$0xff]
    %v481 = vld [vmem:[#allocation2 + $0xaa8] sm:$0xff]
    %v482 = vld [vmem:[#allocation2 + $0xab0] sm:$0xff]
    %v483 = vld [vmem:[#allocation2 + $0xab8] sm:$0xff]
    %v484 = vld [vmem:[#allocation2 + $0xac0] sm:$0xff]
    %v485 = vld [vmem:[#allocation2 + $0xac8] sm:$0xff]
    %v486 = vld [vmem:[#allocation2 + $0xad0] sm:$0xff]
    %v487 = vld [vmem:[#allocation2 + $0xad8] sm:$0xff]
    %v488 = vld [vmem:[#allocation2 + $0xae0] sm:$0xff]
    %v489 = vld [vmem:[#allocation2 + $0xae8] sm:$0xff]
    %v490 = vld [vmem:[#allocation2 + $0xaf0] sm:$0xff]
    %v491 = vld [vmem:[#allocation2 + $0xaf8] sm:$0xff]
    %v492 = vld [vmem:[#allocation2 + $0xb00] sm:$0xff]
    %v493 = vld [vmem:[#allocation2 + $0xb08] sm:$0xff]
    %v494 = vld [vmem:[#allocation2 + $0xb10] sm:$0xff]
    %v495 = vld [vmem:[#allocation2 + $0xb18] sm:$0xff]
    %v496 = vld [vmem:[#allocation2 + $0xb20] sm:$0xff]
    %v497 = vld [vmem:[#allocation2 + $0xb28] sm:$0xff]
    %v498 = vld [vmem:[#allocation2 + $0xb30] sm:$0xff]
    %v499 = vld [vmem:[#allocation2 + $0xb38] sm:$0xff]
    %v500 = vld [vmem:[#allocation2 + $0xb40] sm:$0xff]
    %v501 = vld [vmem:[#allocation2 + $0xb48] sm:$0xff]
    %v502 = vld [vmem:[#allocation2 + $0xb50] sm:$0xff]
    %v503 = vld [vmem:[#allocation2 + $0xb58] sm:$0xff]
    %v504 = vld [vmem:[#allocation2 + $0xb60] sm:$0xff]
    %v505 = vld [vmem:[#allocation2 + $0xb68] sm:$0xff]
    %v506 = vld [vmem:[#allocation2 + $0xb70] sm:$0xff]
    %v507 = vld [vmem:[#allocation2 + $0xb78] sm:$0xff]
    %v508 = vld [vmem:[#allocation2 + $0xb80] sm:$0xff]
    %v509 = vld [vmem:[#allocation2 + $0xb88] sm:$0xff]
    %v510 = vld [vmem:[#allocation2 + $0xb90] sm:$0xff]
    %v511 = vld [vmem:[#allocation2 + $0xb98] sm:$0xff]
    %v512 = vld [vmem:[#allocation2 + $0xba0] sm:$0xff]
    %v513 = vld [vmem:[#allocation2 + $0xba8] sm:$0xff]
    %v514 = vld [vmem:[#allocation2 + $0xbb0] sm:$0xff]
    %v515 = vld [vmem:[#allocation2 + $0xbb8] sm:$0xff]
    %v516 = vld [vmem:[#allocation2 + $0xbc0] sm:$0xff]
    %v517 = vld [vmem:[#allocation2 + $0xbc8] sm:$0xff]
    %v518 = vld [vmem:[#allocation2 + $0xbd0] sm:$0xff]
    %v519 = vld [vmem:[#allocation2 + $0xbd8] sm:$0xff]
    %v520 = vld [vmem:[#allocation2 + $0xbe0] sm:$0xff]
    %v521 = vld [vmem:[#allocation2 + $0xbe8] sm:$0xff]
    %v522 = vld [vmem:[#allocation2 + $0xbf0] sm:$0xff]
    %v523 = vld [vmem:[#allocation2 + $0xbf8] sm:$0xff]
    %v524 = vld [vmem:[#allocation2 + $0xc00] sm:$0xff]
    %v525 = vld [vmem:[#allocation2 + $0xc08] sm:$0xff]
    %v526 = vld [vmem:[#allocation2 + $0xc10] sm:$0xff]
    %v527 = vld [vmem:[#allocation2 + $0xc18] sm:$0xff]
    %v528 = vld [vmem:[#allocation2 + $0xc20] sm:$0xff]
    %v529 = vld [vmem:[#allocation2 + $0xc28] sm:$0xff]
    %v530 = vld [vmem:[#allocation2 + $0xc30] sm:$0xff]
    %v531 = vld [vmem:[#allocation2 + $0xc38] sm:$0xff]
    %v532 = vld [vmem:[#allocation2 + $0xc40] sm:$0xff]
    %v533 = vld [vmem:[#allocation2 + $0xc48] sm:$0xff]
    %v534 = vld [vmem:[#allocation2 + $0xc50] sm:$0xff]
    %v535 = vld [vmem:[#allocation2 + $0xc58] sm:$0xff]
    %v536 = vld [vmem:[#allocation2 + $0xc60] sm:$0xff]
    %v537 = vld [vmem:[#allocation2 + $0xc68] sm:$0xff]
    %v538 = vld [vmem:[#allocation2 + $0xc70] sm:$0xff]
    %v539 = vld [vmem:[#allocation2 + $0xc78] sm:$0xff]
    %v540 = vld [vmem:[#allocation2 + $0xc80] sm:$0xff]
    %v541 = vld [vmem:[#allocation2 + $0xc88] sm:$0xff]
    %v542 = vld [vmem:[#allocation2 + $0xc90] sm:$0xff]
    %v543 = vld [vmem:[#allocation2 + $0xc98] sm:$0xff]
    %v544 = vld [vmem:[#allocation2 + $0xca0] sm:$0xff]
    %v545 = vld [vmem:[#allocation2 + $0xca8] sm:$0xff]
    %v546 = vld [vmem:[#allocation2 + $0xcb0] sm:$0xff]
    %v547 = vld [vmem:[#allocation2 + $0xcb8] sm:$0xff]
    %v548 = vld [vmem:[#allocation2 + $0xcc0] sm:$0xff]
    %v549 = vld [vmem:[#allocation2 + $0xcc8] sm:$0xff]
    %v550 = vld [vmem:[#allocation2 + $0xcd0] sm:$0xff]
    %v551 = vld [vmem:[#allocation2 + $0xcd8] sm:$0xff]
    %v552 = vld [vmem:[#allocation2 + $0xce0] sm:$0xff]
    %v553 = vld [vmem:[#allocation2 + $0xce8] sm:$0xff]
    %v554 = vld [vmem:[#allocation2 + $0xcf0] sm:$0xff]
    %v555 = vld [vmem:[#allocation2 + $0xcf8] sm:$0xff]
    %v556 = vld [vmem:[#allocation2 + $0xd00] sm:$0xff]
    %v557 = vld [vmem:[#allocation2 + $0xd08] sm:$0xff]
    %v558 = vld [vmem:[#allocation2 + $0xd10] sm:$0xff]
    %v559 = vld [vmem:[#allocation2 + $0xd18] sm:$0xff]
    %v560 = vld [vmem:[#allocation2 + $0xd20] sm:$0xff]
    %v561 = vld [vmem:[#allocation2 + $0xd28] sm:$0xff]
    %v562 = vld [vmem:[#allocation2 + $0xd30] sm:$0xff]
    %v563 = vld [vmem:[#allocation2 + $0xd38] sm:$0xff]
    %v564 = vld [vmem:[#allocation2 + $0xd40] sm:$0xff]
    %v565 = vld [vmem:[#allocation2 + $0xd48] sm:$0xff]
    %v566 = vld [vmem:[#allocation2 + $0xd50] sm:$0xff]
    %v567 = vld [vmem:[#allocation2 + $0xd58] sm:$0xff]
    %v568 = vld [vmem:[#allocation2 + $0xd60] sm:$0xff]
    %v569 = vld [vmem:[#allocation2 + $0xd68] sm:$0xff]
    %v570 = vld [vmem:[#allocation2 + $0xd70] sm:$0xff]
    %v571 = vld [vmem:[#allocation2 + $0xd78] sm:$0xff]
    %v572 = vld [vmem:[#allocation2 + $0xd80] sm:$0xff]
    %v573 = vld [vmem:[#allocation2 + $0xd88] sm:$0xff]
    %v574 = vld [vmem:[#allocation2 + $0xd90] sm:$0xff]
    %v575 = vld [vmem:[#allocation2 + $0xd98] sm:$0xff]
    %v576 = vld [vmem:[#allocation2 + $0xda0] sm:$0xff]
    %v577 = vld [vmem:[#allocation2 + $0xda8] sm:$0xff]
    %v578 = vld [vmem:[#allocation2 + $0xdb0] sm:$0xff]
    %v579 = vld [vmem:[#allocation2 + $0xdb8] sm:$0xff]
    %v580 = vld [vmem:[#allocation2 + $0xdc0] sm:$0xff]
    %v581 = vld [vmem:[#allocation2 + $0xdc8] sm:$0xff]
    %v582 = vld [vmem:[#allocation2 + $0xdd0] sm:$0xff]
    %v583 = vld [vmem:[#allocation2 + $0xdd8] sm:$0xff]
    %v584 = vld [vmem:[#allocation2 + $0xde0] sm:$0xff]
    %v585 = vld [vmem:[#allocation2 + $0xde8] sm:$0xff]
    %v586 = vld [vmem:[#allocation2 + $0xdf0] sm:$0xff]
    %v587 = vld [vmem:[#allocation2 + $0xdf8] sm:$0xff]
    %v588 = vld [vmem:[#allocation2 + $0xe00] sm:$0xff]
    %v589 = vld [vmem:[#allocation2 + $0xe08] sm:$0xff]
    %v590 = vld [vmem:[#allocation2 + $0xe10] sm:$0xff]
    %v591 = vld [vmem:[#allocation2 + $0xe18] sm:$0xff]
    %v592 = vld [vmem:[#allocation2 + $0xe20] sm:$0xff]
    %v593 = vld [vmem:[#allocation2 + $0xe28] sm:$0xff]
    %v594 = vld [vmem:[#allocation2 + $0xe30] sm:$0xff]
    %v595 = vld [vmem:[#allocation2 + $0xe38] sm:$0xff]
    %v596 = vld [vmem:[#allocation2 + $0xe40] sm:$0xff]
    %v597 = vld [vmem:[#allocation2 + $0xe48] sm:$0xff]
    %v598 = vld [vmem:[#allocation2 + $0xe50] sm:$0xff]
    %v599 = vld [vmem:[#allocation2 + $0xe58] sm:$0xff]
    %v600 = vld [vmem:[#allocation2 + $0xe60] sm:$0xff]
    %v601 = vld [vmem:[#allocation2 + $0xe68] sm:$0xff]
    %v602 = vld [vmem:[#allocation2 + $0xe70] sm:$0xff]
    %v603 = vld [vmem:[#allocation2 + $0xe78] sm:$0xff]
    %v604 = vld [vmem:[#allocation2 + $0xe80] sm:$0xff]
    %v605 = vld [vmem:[#allocation2 + $0xe88] sm:$0xff]
    %v606 = vld [vmem:[#allocation2 + $0xe90] sm:$0xff]
    %v607 = vld [vmem:[#allocation2 + $0xe98] sm:$0xff]
    %v608 = vld [vmem:[#allocation2 + $0xea0] sm:$0xff]
    %v609 = vld [vmem:[#allocation2 + $0xea8] sm:$0xff]
    %v610 = vld [vmem:[#allocation2 + $0xeb0] sm:$0xff]
    %v611 = vld [vmem:[#allocation2 + $0xeb8] sm:$0xff]
    %v612 = vld [vmem:[#allocation2 + $0xec0] sm:$0xff]
    %v613 = vld [vmem:[#allocation2 + $0xec8] sm:$0xff]
    %v614 = vld [vmem:[#allocation2 + $0xed0] sm:$0xff]
    %v615 = vld [vmem:[#allocation2 + $0xed8] sm:$0xff]
    %v616 = vld [vmem:[#allocation2 + $0xee0] sm:$0xff]
    %v617 = vld [vmem:[#allocation2 + $0xee8] sm:$0xff]
    %v618 = vld [vmem:[#allocation2 + $0xef0] sm:$0xff]
    %v619 = vld [vmem:[#allocation2 + $0xef8] sm:$0xff]
    %v620 = vld [vmem:[#allocation2 + $0xf00] sm:$0xff]
    %v621 = vld [vmem:[#allocation2 + $0xf08] sm:$0xff]
    %v622 = vld [vmem:[#allocation2 + $0xf10] sm:$0xff]
    %v623 = vld [vmem:[#allocation2 + $0xf18] sm:$0xff]
    %v624 = vld [vmem:[#allocation2 + $0xf20] sm:$0xff]
    %v625 = vld [vmem:[#allocation2 + $0xf28] sm:$0xff]
    %v626 = vld [vmem:[#allocation2 + $0xf30] sm:$0xff]
    %v627 = vld [vmem:[#allocation2 + $0xf38] sm:$0xff]
    %v628 = vld [vmem:[#allocation2 + $0xf40] sm:$0xff]
    %v629 = vld [vmem:[#allocation2 + $0xf48] sm:$0xff]
    %v630 = vld [vmem:[#allocation2 + $0xf50] sm:$0xff]
    %v631 = vld [vmem:[#allocation2 + $0xf58] sm:$0xff]
    %v632 = vld [vmem:[#allocation2 + $0xf60] sm:$0xff]
    %v633 = vld [vmem:[#allocation2 + $0xf68] sm:$0xff]
    %v634 = vld [vmem:[#allocation2 + $0xf70] sm:$0xff]
    %v635 = vld [vmem:[#allocation2 + $0xf78] sm:$0xff]
    %v636 = vld [vmem:[#allocation2 + $0xf80] sm:$0xff]
    %v637 = vld [vmem:[#allocation2 + $0xf88] sm:$0xff]
    %v638 = vld [vmem:[#allocation2 + $0xf90] sm:$0xff]
    %v639 = vld [vmem:[#allocation2 + $0xf98] sm:$0xff]
    %v640 = vld [vmem:[#allocation2 + $0xfa0] sm:$0xff]
    %v641 = vld [vmem:[#allocation2 + $0xfa8] sm:$0xff]
    %v642 = vld [vmem:[#allocation2 + $0xfb0] sm:$0xff]
    %v643 = vld [vmem:[#allocation2 + $0xfb8] sm:$0xff]
    %v644 = vld [vmem:[#allocation2 + $0xfc0] sm:$0xff]
    %v645 = vld [vmem:[#allocation2 + $0xfc8] sm:$0xff]
    %v646 = vld [vmem:[#allocation2 + $0xfd0] sm:$0xff]
    %v647 = vld [vmem:[#allocation2 + $0xfd8] sm:$0xff]
    %v648 = vld [vmem:[#allocation2 + $0xfe0] sm:$0xff]
    %v649 = vld [vmem:[#allocation2 + $0xfe8] sm:$0xff]
    %v650 = vld [vmem:[#allocation2 + $0xff0] sm:$0xff]
    %v651 = vld [vmem:[#allocation2 + $0xff8] sm:$0xff]
    %v652 = vld [vmem:[#allocation2 + $0x1000] sm:$0xff]
    %v653 = vld [vmem:[#allocation2 + $0x1008] sm:$0xff]
    %v654 = vld [vmem:[#allocation2 + $0x1010] sm:$0xff]
    %v655 = vld [vmem:[#allocation2 + $0x1018] sm:$0xff]
    %v656 = vld [vmem:[#allocation2 + $0x1020] sm:$0xff]
    %v657 = vld [vmem:[#allocation2 + $0x1028] sm:$0xff]
    %v658 = vld [vmem:[#allocation2 + $0x1030] sm:$0xff]
    %v659 = vld [vmem:[#allocation2 + $0x1038] sm:$0xff]
    %v660 = vld [vmem:[#allocation2 + $0x1040] sm:$0xff]
    %v661 = vld [vmem:[#allocation2 + $0x1048] sm:$0xff]
    %v662 = vld [vmem:[#allocation2 + $0x1050] sm:$0xff]
    %v663 = vld [vmem:[#allocation2 + $0x1058] sm:$0xff]
    %v664 = vld [vmem:[#allocation2 + $0x1060] sm:$0xff]
    %v665 = vld [vmem:[#allocation2 + $0x1068] sm:$0xff]
    %v666 = vld [vmem:[#allocation2 + $0x1070] sm:$0xff]
    %v667 = vld [vmem:[#allocation2 + $0x1078] sm:$0xff]
    %v668 = vld [vmem:[#allocation2 + $0x1080] sm:$0xff]
    %v669 = vld [vmem:[#allocation2 + $0x1088] sm:$0xff]
    %v670 = vld [vmem:[#allocation2 + $0x1090] sm:$0xff]
    %v671 = vld [vmem:[#allocation2 + $0x1098] sm:$0xff]
    %v672 = vld [vmem:[#allocation2 + $0x10a0] sm:$0xff]
    %v673 = vld [vmem:[#allocation2 + $0x10a8] sm:$0xff]
    %v674 = vld [vmem:[#allocation2 + $0x10b0] sm:$0xff]
    %v675 = vld [vmem:[#allocation2 + $0x10b8] sm:$0xff]
    %v676 = vld [vmem:[#allocation2 + $0x10c0] sm:$0xff]
    %v677 = vld [vmem:[#allocation2 + $0x10c8] sm:$0xff]
    %v678 = vld [vmem:[#allocation2 + $0x10d0] sm:$0xff]
    %v679 = vld [vmem:[#allocation2 + $0x10d8] sm:$0xff]
    %v680 = vld [vmem:[#allocation2 + $0x10e0] sm:$0xff]
    %v681 = vld [vmem:[#allocation2 + $0x10e8] sm:$0xff]
    %v682 = vld [vmem:[#allocation2 + $0x10f0] sm:$0xff]
    %v683 = vld [vmem:[#allocation2 + $0x10f8] sm:$0xff]
    %v684 = vld [vmem:[#allocation2 + $0x1100] sm:$0xff]
    %v685 = vld [vmem:[#allocation2 + $0x1108] sm:$0xff]
    %v686 = vld [vmem:[#allocation2 + $0x1110] sm:$0xff]
    %v687 = vld [vmem:[#allocation2 + $0x1118] sm:$0xff]
    %v688 = vld [vmem:[#allocation2 + $0x1120] sm:$0xff]
    %v689 = vld [vmem:[#allocation2 + $0x1128] sm:$0xff]
    %v690 = vld [vmem:[#allocation2 + $0x1130] sm:$0xff]
    %v691 = vld [vmem:[#allocation2 + $0x1138] sm:$0xff]
    %v692 = vld [vmem:[#allocation2 + $0x1140] sm:$0xff]
    %v693 = vld [vmem:[#allocation2 + $0x1148] sm:$0xff]
    %v694 = vld [vmem:[#allocation2 + $0x1150] sm:$0xff]
    %v695 = vld [vmem:[#allocation2 + $0x1158] sm:$0xff]
    %v696 = vld [vmem:[#allocation2 + $0x1160] sm:$0xff]
    %v697 = vld [vmem:[#allocation2 + $0x1168] sm:$0xff]
    %v698 = vld [vmem:[#allocation2 + $0x1170] sm:$0xff]
    %v699 = vld [vmem:[#allocation2 + $0x1178] sm:$0xff]
    %v700 = vld [vmem:[#allocation2 + $0x1180] sm:$0xff]
    %v701 = vld [vmem:[#allocation2 + $0x1188] sm:$0xff]
    %v702 = vld [vmem:[#allocation2 + $0x1190] sm:$0xff]
    %v703 = vld [vmem:[#allocation2 + $0x1198] sm:$0xff]
    %v704 = vld [vmem:[#allocation2 + $0x11a0] sm:$0xff]
    %v705 = vld [vmem:[#allocation2 + $0x11a8] sm:$0xff]
    %v706 = vld [vmem:[#allocation2 + $0x11b0] sm:$0xff]
    %v707 = vld [vmem:[#allocation2 + $0x11b8] sm:$0xff]
    %v708 = vld [vmem:[#allocation2 + $0x11c0] sm:$0xff]
    %v709 = vld [vmem:[#allocation2 + $0x11c8] sm:$0xff]
    %v710 = vld [vmem:[#allocation2 + $0x11d0] sm:$0xff]
    %v711 = vld [vmem:[#allocation2 + $0x11d8] sm:$0xff]
    %v712 = vld [vmem:[#allocation2 + $0x11e0] sm:$0xff]
    %v713 = vld [vmem:[#allocation2 + $0x11e8] sm:$0xff]
    %v714 = vld [vmem:[#allocation2 + $0x11f0] sm:$0xff]
    %v715 = vld [vmem:[#allocation2 + $0x11f8] sm:$0xff]
    %v716 = vld [vmem:[#allocation5] sm:$0x3f]
    %v718 = vlaneseq
    %v719 = vshrl.u32 %v718, 7
    %v720 = vsub.s32 0, %v719
    %v721 = vrot.slane %v716, %v720
    %v722 = vlaneseq
    %v723 = vshrl.u32 %v722, 7
    %v724 = vsub.s32 1, %v723
    %v725 = vrot.slane %v716, %v724
    %v726 = vlaneseq
    %v727 = vshrl.u32 %v726, 7
    %v728 = vsub.s32 2, %v727
    %v729 = vrot.slane %v716, %v728
    %v730 = vlaneseq
    %v731 = vshrl.u32 %v730, 7
    %v732 = vsub.s32 3, %v731
    %v733 = vrot.slane %v716, %v732
    %v734 = vlaneseq
    %v735 = vshrl.u32 %v734, 7
    %v736 = vsub.s32 4, %v735
    %v737 = vrot.slane %v716, %v736
    %v738 = vlaneseq
    %v739 = vshrl.u32 %v738, 7
    %v740 = vsub.s32 5, %v739
    %v741 = vrot.slane %v716, %v740
    %v754 = vunpack.c.l.b16 %v134
    %v755 = vunpack.c.h.b16 %v134
    %v756 = vunpack.c.l.b16 %v135
    %v757 = vunpack.c.h.b16 %v135
    %v758 = vunpack.c.l.b16 %v136
    %v759 = vunpack.c.h.b16 %v136
    %v760 = vunpack.c.l.b16 %v137
    %v761 = vunpack.c.h.b16 %v137
    %v762 = vunpack.c.l.b16 %v138
    %v763 = vunpack.c.h.b16 %v138
    %v764 = vunpack.c.l.b16 %v139
    %v765 = vunpack.c.h.b16 %v139
    %v766 = vpack.c.b16 %v754, %v754
    %v767 = vpack.c.b16 %v755, %v755
    %v768 = vpack.c.b16 %v756, %v756
    %v769 = vpack.c.b16 %v757, %v757
    %v770 = vpack.c.b16 %v758, %v758
    %v771 = vpack.c.b16 %v759, %v759
    %v772 = vpack.c.b16 %v760, %v760
    %v773 = vpack.c.b16 %v761, %v761
    %v774 = vpack.c.b16 %v762, %v762
    %v775 = vpack.c.b16 %v763, %v763
    %v776 = vpack.c.b16 %v764, %v764
    %v777 = vpack.c.b16 %v765, %v765
    %v1366 = vunpack.c.l.b16 %v140
    %v1367 = vunpack.c.h.b16 %v140
    %v1368 = vunpack.c.l.b16 %v141
    %v1369 = vunpack.c.h.b16 %v141
    %v1370 = vunpack.c.l.b16 %v142
    %v1371 = vunpack.c.h.b16 %v142
    %v1372 = vunpack.c.l.b16 %v143
    %v1373 = vunpack.c.h.b16 %v143
    %v1374 = vunpack.c.l.b16 %v144
    %v1375 = vunpack.c.h.b16 %v144
    %v1376 = vunpack.c.l.b16 %v145
    %v1377 = vunpack.c.h.b16 %v145
    %v1378 = vunpack.c.l.b16 %v146
    %v1379 = vunpack.c.h.b16 %v146
    %v1380 = vunpack.c.l.b16 %v147
    %v1381 = vunpack.c.h.b16 %v147
    %v1382 = vunpack.c.l.b16 %v148
    %v1383 = vunpack.c.h.b16 %v148
    %v1384 = vunpack.c.l.b16 %v149
    %v1385 = vunpack.c.h.b16 %v149
    %v1386 = vunpack.c.l.b16 %v150
    %v1387 = vunpack.c.h.b16 %v150
    %v1388 = vunpack.c.l.b16 %v151
    %v1389 = vunpack.c.h.b16 %v151
    %v1390 = vunpack.c.l.b16 %v152
    %v1391 = vunpack.c.h.b16 %v152
    %v1392 = vunpack.c.l.b16 %v153
    %v1393 = vunpack.c.h.b16 %v153
    %v1394 = vunpack.c.l.b16 %v154
    %v1395 = vunpack.c.h.b16 %v154
    %v1396 = vunpack.c.l.b16 %v155
    %v1397 = vunpack.c.h.b16 %v155
    %v1398 = vunpack.c.l.b16 %v156
    %v1399 = vunpack.c.h.b16 %v156
    %v1400 = vunpack.c.l.b16 %v157
    %v1401 = vunpack.c.h.b16 %v157
    %v1402 = vunpack.c.l.b16 %v158
    %v1403 = vunpack.c.h.b16 %v158
    %v1404 = vunpack.c.l.b16 %v159
    %v1405 = vunpack.c.h.b16 %v159
    %v1406 = vunpack.c.l.b16 %v160
    %v1407 = vunpack.c.h.b16 %v160
    %v1408 = vunpack.c.l.b16 %v161
    %v1409 = vunpack.c.h.b16 %v161
    %v1410 = vunpack.c.l.b16 %v162
    %v1411 = vunpack.c.h.b16 %v162
    %v1412 = vunpack.c.l.b16 %v163
    %v1413 = vunpack.c.h.b16 %v163
    %v1414 = vunpack.c.l.b16 %v164
    %v1415 = vunpack.c.h.b16 %v164
    %v1416 = vunpack.c.l.b16 %v165
    %v1417 = vunpack.c.h.b16 %v165
    %v1418 = vunpack.c.l.b16 %v166
    %v1419 = vunpack.c.h.b16 %v166
    %v1420 = vunpack.c.l.b16 %v167
    %v1421 = vunpack.c.h.b16 %v167
    %v1422 = vunpack.c.l.b16 %v168
    %v1423 = vunpack.c.h.b16 %v168
    %v1424 = vunpack.c.l.b16 %v169
    %v1425 = vunpack.c.h.b16 %v169
    %v1426 = vunpack.c.l.b16 %v170
    %v1427 = vunpack.c.h.b16 %v170
    %v1428 = vunpack.c.l.b16 %v171
    %v1429 = vunpack.c.h.b16 %v171
    %v1430 = vunpack.c.l.b16 %v172
    %v1431 = vunpack.c.h.b16 %v172
    %v1432 = vunpack.c.l.b16 %v173
    %v1433 = vunpack.c.h.b16 %v173
    %v1434 = vunpack.c.l.b16 %v174
    %v1435 = vunpack.c.h.b16 %v174
    %v1436 = vunpack.c.l.b16 %v175
    %v1437 = vunpack.c.h.b16 %v175
    %v1438 = vunpack.c.l.b16 %v176
    %v1439 = vunpack.c.h.b16 %v176
    %v1440 = vunpack.c.l.b16 %v177
    %v1441 = vunpack.c.h.b16 %v177
    %v1442 = vunpack.c.l.b16 %v178
    %v1443 = vunpack.c.h.b16 %v178
    %v1444 = vunpack.c.l.b16 %v179
    %v1445 = vunpack.c.h.b16 %v179
    %v1446 = vunpack.c.l.b16 %v180
    %v1447 = vunpack.c.h.b16 %v180
    %v1448 = vunpack.c.l.b16 %v181
    %v1449 = vunpack.c.h.b16 %v181
    %v1450 = vunpack.c.l.b16 %v182
    %v1451 = vunpack.c.h.b16 %v182
    %v1452 = vunpack.c.l.b16 %v183
    %v1453 = vunpack.c.h.b16 %v183
    %v1454 = vunpack.c.l.b16 %v184
    %v1455 = vunpack.c.h.b16 %v184
    %v1456 = vunpack.c.l.b16 %v185
    %v1457 = vunpack.c.h.b16 %v185
    %v1458 = vunpack.c.l.b16 %v186
    %v1459 = vunpack.c.h.b16 %v186
    %v1460 = vunpack.c.l.b16 %v187
    %v1461 = vunpack.c.h.b16 %v187
    %v1462 = vunpack.c.l.b16 %v188
    %v1463 = vunpack.c.h.b16 %v188
    %v1464 = vunpack.c.l.b16 %v189
    %v1465 = vunpack.c.h.b16 %v189
    %v1466 = vunpack.c.l.b16 %v190
    %v1467 = vunpack.c.h.b16 %v190
    %v1468 = vunpack.c.l.b16 %v191
    %v1469 = vunpack.c.h.b16 %v191
    %v1470 = vunpack.c.l.b16 %v192
    %v1471 = vunpack.c.h.b16 %v192
    %v1472 = vunpack.c.l.b16 %v193
    %v1473 = vunpack.c.h.b16 %v193
    %v1474 = vunpack.c.l.b16 %v194
    %v1475 = vunpack.c.h.b16 %v194
    %v1476 = vunpack.c.l.b16 %v195
    %v1477 = vunpack.c.h.b16 %v195
    %v1478 = vunpack.c.l.b16 %v196
    %v1479 = vunpack.c.h.b16 %v196
    %v1480 = vunpack.c.l.b16 %v197
    %v1481 = vunpack.c.h.b16 %v197
    %v1482 = vunpack.c.l.b16 %v198
    %v1483 = vunpack.c.h.b16 %v198
    %v1484 = vunpack.c.l.b16 %v199
    %v1485 = vunpack.c.h.b16 %v199
    %v1486 = vunpack.c.l.b16 %v200
    %v1487 = vunpack.c.h.b16 %v200
    %v1488 = vunpack.c.l.b16 %v201
    %v1489 = vunpack.c.h.b16 %v201
    %v1490 = vunpack.c.l.b16 %v202
    %v1491 = vunpack.c.h.b16 %v202
    %v1492 = vunpack.c.l.b16 %v203
    %v1493 = vunpack.c.h.b16 %v203
    %v1494 = vunpack.c.l.b16 %v204
    %v1495 = vunpack.c.h.b16 %v204
    %v1496 = vunpack.c.l.b16 %v205
    %v1497 = vunpack.c.h.b16 %v205
    %v1498 = vunpack.c.l.b16 %v206
    %v1499 = vunpack.c.h.b16 %v206
    %v1500 = vunpack.c.l.b16 %v207
    %v1501 = vunpack.c.h.b16 %v207
    %v1502 = vunpack.c.l.b16 %v208
    %v1503 = vunpack.c.h.b16 %v208
    %v1504 = vunpack.c.l.b16 %v209
    %v1505 = vunpack.c.h.b16 %v209
    %v1506 = vunpack.c.l.b16 %v210
    %v1507 = vunpack.c.h.b16 %v210
    %v1508 = vunpack.c.l.b16 %v211
    %v1509 = vunpack.c.h.b16 %v211
    %v1510 = vunpack.c.l.b16 %v212
    %v1511 = vunpack.c.h.b16 %v212
    %v1512 = vunpack.c.l.b16 %v213
    %v1513 = vunpack.c.h.b16 %v213
    %v1514 = vunpack.c.l.b16 %v214
    %v1515 = vunpack.c.h.b16 %v214
    %v1516 = vunpack.c.l.b16 %v215
    %v1517 = vunpack.c.h.b16 %v215
    %v1518 = vunpack.c.l.b16 %v216
    %v1519 = vunpack.c.h.b16 %v216
    %v1520 = vunpack.c.l.b16 %v217
    %v1521 = vunpack.c.h.b16 %v217
    %v1522 = vunpack.c.l.b16 %v218
    %v1523 = vunpack.c.h.b16 %v218
    %v1524 = vunpack.c.l.b16 %v219
    %v1525 = vunpack.c.h.b16 %v219
    %v1526 = vunpack.c.l.b16 %v220
    %v1527 = vunpack.c.h.b16 %v220
    %v1528 = vunpack.c.l.b16 %v221
    %v1529 = vunpack.c.h.b16 %v221
    %v1530 = vunpack.c.l.b16 %v222
    %v1531 = vunpack.c.h.b16 %v222
    %v1532 = vunpack.c.l.b16 %v223
    %v1533 = vunpack.c.h.b16 %v223
    %v1534 = vunpack.c.l.b16 %v224
    %v1535 = vunpack.c.h.b16 %v224
    %v1536 = vunpack.c.l.b16 %v225
    %v1537 = vunpack.c.h.b16 %v225
    %v1538 = vunpack.c.l.b16 %v226
    %v1539 = vunpack.c.h.b16 %v226
    %v1540 = vunpack.c.l.b16 %v227
    %v1541 = vunpack.c.h.b16 %v227
    %v1542 = vunpack.c.l.b16 %v228
    %v1543 = vunpack.c.h.b16 %v228
    %v1544 = vunpack.c.l.b16 %v229
    %v1545 = vunpack.c.h.b16 %v229
    %v1546 = vunpack.c.l.b16 %v230
    %v1547 = vunpack.c.h.b16 %v230
    %v1548 = vunpack.c.l.b16 %v231
    %v1549 = vunpack.c.h.b16 %v231
    %v1550 = vunpack.c.l.b16 %v232
    %v1551 = vunpack.c.h.b16 %v232
    %v1552 = vunpack.c.l.b16 %v233
    %v1553 = vunpack.c.h.b16 %v233
    %v1554 = vunpack.c.l.b16 %v234
    %v1555 = vunpack.c.h.b16 %v234
    %v1556 = vunpack.c.l.b16 %v235
    %v1557 = vunpack.c.h.b16 %v235
    %v1558 = vunpack.c.l.b16 %v236
    %v1559 = vunpack.c.h.b16 %v236
    %v1560 = vunpack.c.l.b16 %v237
    %v1561 = vunpack.c.h.b16 %v237
    %v1562 = vunpack.c.l.b16 %v238
    %v1563 = vunpack.c.h.b16 %v238
    %v1564 = vunpack.c.l.b16 %v239
    %v1565 = vunpack.c.h.b16 %v239
    %v1566 = vunpack.c.l.b16 %v240
    %v1567 = vunpack.c.h.b16 %v240
    %v1568 = vunpack.c.l.b16 %v241
    %v1569 = vunpack.c.h.b16 %v241
    %v1570 = vunpack.c.l.b16 %v242
    %v1571 = vunpack.c.h.b16 %v242
    %v1572 = vunpack.c.l.b16 %v243
    %v1573 = vunpack.c.h.b16 %v243
    %v1574 = vunpack.c.l.b16 %v244
    %v1575 = vunpack.c.h.b16 %v244
    %v1576 = vunpack.c.l.b16 %v245
    %v1577 = vunpack.c.h.b16 %v245
    %v1578 = vunpack.c.l.b16 %v246
    %v1579 = vunpack.c.h.b16 %v246
    %v1580 = vunpack.c.l.b16 %v247
    %v1581 = vunpack.c.h.b16 %v247
    %v1582 = vunpack.c.l.b16 %v248
    %v1583 = vunpack.c.h.b16 %v248
    %v1584 = vunpack.c.l.b16 %v249
    %v1585 = vunpack.c.h.b16 %v249
    %v1586 = vunpack.c.l.b16 %v250
    %v1587 = vunpack.c.h.b16 %v250
    %v1588 = vunpack.c.l.b16 %v251
    %v1589 = vunpack.c.h.b16 %v251
    %v1590 = vunpack.c.l.b16 %v252
    %v1591 = vunpack.c.h.b16 %v252
    %v1592 = vunpack.c.l.b16 %v253
    %v1593 = vunpack.c.h.b16 %v253
    %v1594 = vunpack.c.l.b16 %v254
    %v1595 = vunpack.c.h.b16 %v254
    %v1596 = vunpack.c.l.b16 %v255
    %v1597 = vunpack.c.h.b16 %v255
    %v1598 = vunpack.c.l.b16 %v256
    %v1599 = vunpack.c.h.b16 %v256
    %v1600 = vunpack.c.l.b16 %v257
    %v1601 = vunpack.c.h.b16 %v257
    %v1602 = vunpack.c.l.b16 %v258
    %v1603 = vunpack.c.h.b16 %v258
    %v1604 = vunpack.c.l.b16 %v259
    %v1605 = vunpack.c.h.b16 %v259
    %v1606 = vunpack.c.l.b16 %v260
    %v1607 = vunpack.c.h.b16 %v260
    %v1608 = vunpack.c.l.b16 %v261
    %v1609 = vunpack.c.h.b16 %v261
    %v1610 = vunpack.c.l.b16 %v262
    %v1611 = vunpack.c.h.b16 %v262
    %v1612 = vunpack.c.l.b16 %v263
    %v1613 = vunpack.c.h.b16 %v263
    %v1614 = vunpack.c.l.b16 %v264
    %v1615 = vunpack.c.h.b16 %v264
    %v1616 = vunpack.c.l.b16 %v265
    %v1617 = vunpack.c.h.b16 %v265
    %v1618 = vunpack.c.l.b16 %v266
    %v1619 = vunpack.c.h.b16 %v266
    %v1620 = vunpack.c.l.b16 %v267
    %v1621 = vunpack.c.h.b16 %v267
    %v1622 = vunpack.c.l.b16 %v268
    %v1623 = vunpack.c.h.b16 %v268
    %v1624 = vunpack.c.l.b16 %v269
    %v1625 = vunpack.c.h.b16 %v269
    %v1626 = vunpack.c.l.b16 %v270
    %v1627 = vunpack.c.h.b16 %v270
    %v1628 = vunpack.c.l.b16 %v271
    %v1629 = vunpack.c.h.b16 %v271
    %v1630 = vunpack.c.l.b16 %v272
    %v1631 = vunpack.c.h.b16 %v272
    %v1632 = vunpack.c.l.b16 %v273
    %v1633 = vunpack.c.h.b16 %v273
    %v1634 = vunpack.c.l.b16 %v274
    %v1635 = vunpack.c.h.b16 %v274
    %v1636 = vunpack.c.l.b16 %v275
    %v1637 = vunpack.c.h.b16 %v275
    %v1638 = vunpack.c.l.b16 %v276
    %v1639 = vunpack.c.h.b16 %v276
    %v1640 = vunpack.c.l.b16 %v277
    %v1641 = vunpack.c.h.b16 %v277
    %v1642 = vunpack.c.l.b16 %v278
    %v1643 = vunpack.c.h.b16 %v278
    %v1644 = vunpack.c.l.b16 %v279
    %v1645 = vunpack.c.h.b16 %v279
    %v1646 = vunpack.c.l.b16 %v280
    %v1647 = vunpack.c.h.b16 %v280
    %v1648 = vunpack.c.l.b16 %v281
    %v1649 = vunpack.c.h.b16 %v281
    %v1650 = vunpack.c.l.b16 %v282
    %v1651 = vunpack.c.h.b16 %v282
    %v1652 = vunpack.c.l.b16 %v283
    %v1653 = vunpack.c.h.b16 %v283
    %v1654 = vunpack.c.l.b16 %v284
    %v1655 = vunpack.c.h.b16 %v284
    %v1656 = vunpack.c.l.b16 %v285
    %v1657 = vunpack.c.h.b16 %v285
    %v1658 = vunpack.c.l.b16 %v286
    %v1659 = vunpack.c.h.b16 %v286
    %v1660 = vunpack.c.l.b16 %v287
    %v1661 = vunpack.c.h.b16 %v287
    %v1662 = vunpack.c.l.b16 %v288
    %v1663 = vunpack.c.h.b16 %v288
    %v1664 = vunpack.c.l.b16 %v289
    %v1665 = vunpack.c.h.b16 %v289
    %v1666 = vunpack.c.l.b16 %v290
    %v1667 = vunpack.c.h.b16 %v290
    %v1668 = vunpack.c.l.b16 %v291
    %v1669 = vunpack.c.h.b16 %v291
    %v1670 = vunpack.c.l.b16 %v292
    %v1671 = vunpack.c.h.b16 %v292
    %v1672 = vunpack.c.l.b16 %v293
    %v1673 = vunpack.c.h.b16 %v293
    %v1674 = vunpack.c.l.b16 %v294
    %v1675 = vunpack.c.h.b16 %v294
    %v1676 = vunpack.c.l.b16 %v295
    %v1677 = vunpack.c.h.b16 %v295
    %v1678 = vunpack.c.l.b16 %v296
    %v1679 = vunpack.c.h.b16 %v296
    %v1680 = vunpack.c.l.b16 %v297
    %v1681 = vunpack.c.h.b16 %v297
    %v1682 = vunpack.c.l.b16 %v298
    %v1683 = vunpack.c.h.b16 %v298
    %v1684 = vunpack.c.l.b16 %v299
    %v1685 = vunpack.c.h.b16 %v299
    %v1686 = vunpack.c.l.b16 %v300
    %v1687 = vunpack.c.h.b16 %v300
    %v1688 = vunpack.c.l.b16 %v301
    %v1689 = vunpack.c.h.b16 %v301
    %v1690 = vunpack.c.l.b16 %v302
    %v1691 = vunpack.c.h.b16 %v302
    %v1692 = vunpack.c.l.b16 %v303
    %v1693 = vunpack.c.h.b16 %v303
    %v1694 = vunpack.c.l.b16 %v304
    %v1695 = vunpack.c.h.b16 %v304
    %v1696 = vunpack.c.l.b16 %v305
    %v1697 = vunpack.c.h.b16 %v305
    %v1698 = vunpack.c.l.b16 %v306
    %v1699 = vunpack.c.h.b16 %v306
    %v1700 = vunpack.c.l.b16 %v307
    %v1701 = vunpack.c.h.b16 %v307
    %v1702 = vunpack.c.l.b16 %v308
    %v1703 = vunpack.c.h.b16 %v308
    %v1704 = vunpack.c.l.b16 %v309
    %v1705 = vunpack.c.h.b16 %v309
    %v1706 = vunpack.c.l.b16 %v310
    %v1707 = vunpack.c.h.b16 %v310
    %v1708 = vunpack.c.l.b16 %v311
    %v1709 = vunpack.c.h.b16 %v311
    %v1710 = vunpack.c.l.b16 %v312
    %v1711 = vunpack.c.h.b16 %v312
    %v1712 = vunpack.c.l.b16 %v313
    %v1713 = vunpack.c.h.b16 %v313
    %v1714 = vunpack.c.l.b16 %v314
    %v1715 = vunpack.c.h.b16 %v314
    %v1716 = vunpack.c.l.b16 %v315
    %v1717 = vunpack.c.h.b16 %v315
    %v1718 = vunpack.c.l.b16 %v316
    %v1719 = vunpack.c.h.b16 %v316
    %v1720 = vunpack.c.l.b16 %v317
    %v1721 = vunpack.c.h.b16 %v317
    %v1722 = vunpack.c.l.b16 %v318
    %v1723 = vunpack.c.h.b16 %v318
    %v1724 = vunpack.c.l.b16 %v319
    %v1725 = vunpack.c.h.b16 %v319
    %v1726 = vunpack.c.l.b16 %v320
    %v1727 = vunpack.c.h.b16 %v320
    %v1728 = vunpack.c.l.b16 %v321
    %v1729 = vunpack.c.h.b16 %v321
    %v1730 = vunpack.c.l.b16 %v322
    %v1731 = vunpack.c.h.b16 %v322
    %v1732 = vunpack.c.l.b16 %v323
    %v1733 = vunpack.c.h.b16 %v323
    %v1734 = vunpack.c.l.b16 %v324
    %v1735 = vunpack.c.h.b16 %v324
    %v1736 = vunpack.c.l.b16 %v325
    %v1737 = vunpack.c.h.b16 %v325
    %v1738 = vunpack.c.l.b16 %v326
    %v1739 = vunpack.c.h.b16 %v326
    %v1740 = vunpack.c.l.b16 %v327
    %v1741 = vunpack.c.h.b16 %v327
    %v1742 = vunpack.c.l.b16 %v328
    %v1743 = vunpack.c.h.b16 %v328
    %v1744 = vunpack.c.l.b16 %v329
    %v1745 = vunpack.c.h.b16 %v329
    %v1746 = vunpack.c.l.b16 %v330
    %v1747 = vunpack.c.h.b16 %v330
    %v1748 = vunpack.c.l.b16 %v331
    %v1749 = vunpack.c.h.b16 %v331
    %v1750 = vunpack.c.l.b16 %v332
    %v1751 = vunpack.c.h.b16 %v332
    %v1752 = vunpack.c.l.b16 %v333
    %v1753 = vunpack.c.h.b16 %v333
    %v1754 = vunpack.c.l.b16 %v334
    %v1755 = vunpack.c.h.b16 %v334
    %v1756 = vunpack.c.l.b16 %v335
    %v1757 = vunpack.c.h.b16 %v335
    %v1758 = vunpack.c.l.b16 %v336
    %v1759 = vunpack.c.h.b16 %v336
    %v1760 = vunpack.c.l.b16 %v337
    %v1761 = vunpack.c.h.b16 %v337
    %v1762 = vunpack.c.l.b16 %v338
    %v1763 = vunpack.c.h.b16 %v338
    %v1764 = vunpack.c.l.b16 %v339
    %v1765 = vunpack.c.h.b16 %v339
    %v1766 = vunpack.c.l.b16 %v340
    %v1767 = vunpack.c.h.b16 %v340
    %v1768 = vunpack.c.l.b16 %v341
    %v1769 = vunpack.c.h.b16 %v341
    %v1770 = vunpack.c.l.b16 %v342
    %v1771 = vunpack.c.h.b16 %v342
    %v1772 = vunpack.c.l.b16 %v343
    %v1773 = vunpack.c.h.b16 %v343
    %v1774 = vunpack.c.l.b16 %v344
    %v1775 = vunpack.c.h.b16 %v344
    %v1776 = vunpack.c.l.b16 %v345
    %v1777 = vunpack.c.h.b16 %v345
    %v1778 = vunpack.c.l.b16 %v346
    %v1779 = vunpack.c.h.b16 %v346
    %v1780 = vunpack.c.l.b16 %v347
    %v1781 = vunpack.c.h.b16 %v347
    %v1782 = vunpack.c.l.b16 %v348
    %v1783 = vunpack.c.h.b16 %v348
    %v1784 = vunpack.c.l.b16 %v349
    %v1785 = vunpack.c.h.b16 %v349
    %v1786 = vunpack.c.l.b16 %v350
    %v1787 = vunpack.c.h.b16 %v350
    %v1788 = vunpack.c.l.b16 %v351
    %v1789 = vunpack.c.h.b16 %v351
    %v1790 = vunpack.c.l.b16 %v352
    %v1791 = vunpack.c.h.b16 %v352
    %v1792 = vunpack.c.l.b16 %v353
    %v1793 = vunpack.c.h.b16 %v353
    %v1794 = vunpack.c.l.b16 %v354
    %v1795 = vunpack.c.h.b16 %v354
    %v1796 = vunpack.c.l.b16 %v355
    %v1797 = vunpack.c.h.b16 %v355
    %v1798 = vunpack.c.l.b16 %v356
    %v1799 = vunpack.c.h.b16 %v356
    %v1800 = vunpack.c.l.b16 %v357
    %v1801 = vunpack.c.h.b16 %v357
    %v1802 = vunpack.c.l.b16 %v358
    %v1803 = vunpack.c.h.b16 %v358
    %v1804 = vunpack.c.l.b16 %v359
    %v1805 = vunpack.c.h.b16 %v359
    %v1806 = vunpack.c.l.b16 %v360
    %v1807 = vunpack.c.h.b16 %v360
    %v1808 = vunpack.c.l.b16 %v361
    %v1809 = vunpack.c.h.b16 %v361
    %v1810 = vunpack.c.l.b16 %v362
    %v1811 = vunpack.c.h.b16 %v362
    %v1812 = vunpack.c.l.b16 %v363
    %v1813 = vunpack.c.h.b16 %v363
    %v1814 = vunpack.c.l.b16 %v364
    %v1815 = vunpack.c.h.b16 %v364
    %v1816 = vunpack.c.l.b16 %v365
    %v1817 = vunpack.c.h.b16 %v365
    %v1818 = vunpack.c.l.b16 %v366
    %v1819 = vunpack.c.h.b16 %v366
    %v1820 = vunpack.c.l.b16 %v367
    %v1821 = vunpack.c.h.b16 %v367
    %v1822 = vunpack.c.l.b16 %v368
    %v1823 = vunpack.c.h.b16 %v368
    %v1824 = vunpack.c.l.b16 %v369
    %v1825 = vunpack.c.h.b16 %v369
    %v1826 = vunpack.c.l.b16 %v370
    %v1827 = vunpack.c.h.b16 %v370
    %v1828 = vunpack.c.l.b16 %v371
    %v1829 = vunpack.c.h.b16 %v371
    %v1830 = vunpack.c.l.b16 %v372
    %v1831 = vunpack.c.h.b16 %v372
    %v1832 = vunpack.c.l.b16 %v373
    %v1833 = vunpack.c.h.b16 %v373
    %v1834 = vunpack.c.l.b16 %v374
    %v1835 = vunpack.c.h.b16 %v374
    %v1836 = vunpack.c.l.b16 %v375
    %v1837 = vunpack.c.h.b16 %v375
    %v1838 = vunpack.c.l.b16 %v376
    %v1839 = vunpack.c.h.b16 %v376
    %v1840 = vunpack.c.l.b16 %v377
    %v1841 = vunpack.c.h.b16 %v377
    %v1842 = vunpack.c.l.b16 %v378
    %v1843 = vunpack.c.h.b16 %v378
    %v1844 = vunpack.c.l.b16 %v379
    %v1845 = vunpack.c.h.b16 %v379
    %v1846 = vunpack.c.l.b16 %v380
    %v1847 = vunpack.c.h.b16 %v380
    %v1848 = vunpack.c.l.b16 %v381
    %v1849 = vunpack.c.h.b16 %v381
    %v1850 = vunpack.c.l.b16 %v382
    %v1851 = vunpack.c.h.b16 %v382
    %v1852 = vunpack.c.l.b16 %v383
    %v1853 = vunpack.c.h.b16 %v383
    %v1854 = vunpack.c.l.b16 %v384
    %v1855 = vunpack.c.h.b16 %v384
    %v1856 = vunpack.c.l.b16 %v385
    %v1857 = vunpack.c.h.b16 %v385
    %v1858 = vunpack.c.l.b16 %v386
    %v1859 = vunpack.c.h.b16 %v386
    %v1860 = vunpack.c.l.b16 %v387
    %v1861 = vunpack.c.h.b16 %v387
    %v1862 = vunpack.c.l.b16 %v388
    %v1863 = vunpack.c.h.b16 %v388
    %v1864 = vunpack.c.l.b16 %v389
    %v1865 = vunpack.c.h.b16 %v389
    %v1866 = vunpack.c.l.b16 %v390
    %v1867 = vunpack.c.h.b16 %v390
    %v1868 = vunpack.c.l.b16 %v391
    %v1869 = vunpack.c.h.b16 %v391
    %v1870 = vunpack.c.l.b16 %v392
    %v1871 = vunpack.c.h.b16 %v392
    %v1872 = vunpack.c.l.b16 %v393
    %v1873 = vunpack.c.h.b16 %v393
    %v1874 = vunpack.c.l.b16 %v394
    %v1875 = vunpack.c.h.b16 %v394
    %v1876 = vunpack.c.l.b16 %v395
    %v1877 = vunpack.c.h.b16 %v395
    %v1878 = vunpack.c.l.b16 %v396
    %v1879 = vunpack.c.h.b16 %v396
    %v1880 = vunpack.c.l.b16 %v397
    %v1881 = vunpack.c.h.b16 %v397
    %v1882 = vunpack.c.l.b16 %v398
    %v1883 = vunpack.c.h.b16 %v398
    %v1884 = vunpack.c.l.b16 %v399
    %v1885 = vunpack.c.h.b16 %v399
    %v1886 = vunpack.c.l.b16 %v400
    %v1887 = vunpack.c.h.b16 %v400
    %v1888 = vunpack.c.l.b16 %v401
    %v1889 = vunpack.c.h.b16 %v401
    %v1890 = vunpack.c.l.b16 %v402
    %v1891 = vunpack.c.h.b16 %v402
    %v1892 = vunpack.c.l.b16 %v403
    %v1893 = vunpack.c.h.b16 %v403
    %v1894 = vunpack.c.l.b16 %v404
    %v1895 = vunpack.c.h.b16 %v404
    %v1896 = vunpack.c.l.b16 %v405
    %v1897 = vunpack.c.h.b16 %v405
    %v1898 = vunpack.c.l.b16 %v406
    %v1899 = vunpack.c.h.b16 %v406
    %v1900 = vunpack.c.l.b16 %v407
    %v1901 = vunpack.c.h.b16 %v407
    %v1902 = vunpack.c.l.b16 %v408
    %v1903 = vunpack.c.h.b16 %v408
    %v1904 = vunpack.c.l.b16 %v409
    %v1905 = vunpack.c.h.b16 %v409
    %v1906 = vunpack.c.l.b16 %v410
    %v1907 = vunpack.c.h.b16 %v410
    %v1908 = vunpack.c.l.b16 %v411
    %v1909 = vunpack.c.h.b16 %v411
    %v1910 = vunpack.c.l.b16 %v412
    %v1911 = vunpack.c.h.b16 %v412
    %v1912 = vunpack.c.l.b16 %v413
    %v1913 = vunpack.c.h.b16 %v413
    %v1914 = vunpack.c.l.b16 %v414
    %v1915 = vunpack.c.h.b16 %v414
    %v1916 = vunpack.c.l.b16 %v415
    %v1917 = vunpack.c.h.b16 %v415
    %v1918 = vunpack.c.l.b16 %v416
    %v1919 = vunpack.c.h.b16 %v416
    %v1920 = vunpack.c.l.b16 %v417
    %v1921 = vunpack.c.h.b16 %v417
    %v1922 = vunpack.c.l.b16 %v418
    %v1923 = vunpack.c.h.b16 %v418
    %v1924 = vunpack.c.l.b16 %v419
    %v1925 = vunpack.c.h.b16 %v419
    %v1926 = vunpack.c.l.b16 %v420
    %v1927 = vunpack.c.h.b16 %v420
    %v1928 = vunpack.c.l.b16 %v421
    %v1929 = vunpack.c.h.b16 %v421
    %v1930 = vunpack.c.l.b16 %v422
    %v1931 = vunpack.c.h.b16 %v422
    %v1932 = vunpack.c.l.b16 %v423
    %v1933 = vunpack.c.h.b16 %v423
    %v1934 = vunpack.c.l.b16 %v424
    %v1935 = vunpack.c.h.b16 %v424
    %v1936 = vunpack.c.l.b16 %v425
    %v1937 = vunpack.c.h.b16 %v425
    %v1938 = vunpack.c.l.b16 %v426
    %v1939 = vunpack.c.h.b16 %v426
    %v1940 = vunpack.c.l.b16 %v427
    %v1941 = vunpack.c.h.b16 %v427
    %v1942 = vunpack.c.l.b16 %v428
    %v1943 = vunpack.c.h.b16 %v428
    %v1944 = vunpack.c.l.b16 %v429
    %v1945 = vunpack.c.h.b16 %v429
    %v1946 = vunpack.c.l.b16 %v430
    %v1947 = vunpack.c.h.b16 %v430
    %v1948 = vunpack.c.l.b16 %v431
    %v1949 = vunpack.c.h.b16 %v431
    %v1950 = vunpack.c.l.b16 %v432
    %v1951 = vunpack.c.h.b16 %v432
    %v1952 = vunpack.c.l.b16 %v433
    %v1953 = vunpack.c.h.b16 %v433
    %v1954 = vunpack.c.l.b16 %v434
    %v1955 = vunpack.c.h.b16 %v434
    %v1956 = vunpack.c.l.b16 %v435
    %v1957 = vunpack.c.h.b16 %v435
    %v1958 = vunpack.c.l.b16 %v436
    %v1959 = vunpack.c.h.b16 %v436
    %v1960 = vunpack.c.l.b16 %v437
    %v1961 = vunpack.c.h.b16 %v437
    %v1962 = vunpack.c.l.b16 %v438
    %v1963 = vunpack.c.h.b16 %v438
    %v1964 = vunpack.c.l.b16 %v439
    %v1965 = vunpack.c.h.b16 %v439
    %v1966 = vunpack.c.l.b16 %v440
    %v1967 = vunpack.c.h.b16 %v440
    %v1968 = vunpack.c.l.b16 %v441
    %v1969 = vunpack.c.h.b16 %v441
    %v1970 = vunpack.c.l.b16 %v442
    %v1971 = vunpack.c.h.b16 %v442
    %v1972 = vunpack.c.l.b16 %v443
    %v1973 = vunpack.c.h.b16 %v443
    %v1974 = vunpack.c.l.b16 %v444
    %v1975 = vunpack.c.h.b16 %v444
    %v1976 = vunpack.c.l.b16 %v445
    %v1977 = vunpack.c.h.b16 %v445
    %v1978 = vunpack.c.l.b16 %v446
    %v1979 = vunpack.c.h.b16 %v446
    %v1980 = vunpack.c.l.b16 %v447
    %v1981 = vunpack.c.h.b16 %v447
    %v1982 = vunpack.c.l.b16 %v448
    %v1983 = vunpack.c.h.b16 %v448
    %v1984 = vunpack.c.l.b16 %v449
    %v1985 = vunpack.c.h.b16 %v449
    %v1986 = vunpack.c.l.b16 %v450
    %v1987 = vunpack.c.h.b16 %v450
    %v1988 = vunpack.c.l.b16 %v451
    %v1989 = vunpack.c.h.b16 %v451
    %v1990 = vunpack.c.l.b16 %v452
    %v1991 = vunpack.c.h.b16 %v452
    %v1992 = vunpack.c.l.b16 %v453
    %v1993 = vunpack.c.h.b16 %v453
    %v1994 = vunpack.c.l.b16 %v454
    %v1995 = vunpack.c.h.b16 %v454
    %v1996 = vunpack.c.l.b16 %v455
    %v1997 = vunpack.c.h.b16 %v455
    %v1998 = vunpack.c.l.b16 %v456
    %v1999 = vunpack.c.h.b16 %v456
    %v2000 = vunpack.c.l.b16 %v457
    %v2001 = vunpack.c.h.b16 %v457
    %v2002 = vunpack.c.l.b16 %v458
    %v2003 = vunpack.c.h.b16 %v458
    %v2004 = vunpack.c.l.b16 %v459
    %v2005 = vunpack.c.h.b16 %v459
    %v2006 = vunpack.c.l.b16 %v460
    %v2007 = vunpack.c.h.b16 %v460
    %v2008 = vunpack.c.l.b16 %v461
    %v2009 = vunpack.c.h.b16 %v461
    %v2010 = vunpack.c.l.b16 %v462
    %v2011 = vunpack.c.h.b16 %v462
    %v2012 = vunpack.c.l.b16 %v463
    %v2013 = vunpack.c.h.b16 %v463
    %v2014 = vunpack.c.l.b16 %v464
    %v2015 = vunpack.c.h.b16 %v464
    %v2016 = vunpack.c.l.b16 %v465
    %v2017 = vunpack.c.h.b16 %v465
    %v2018 = vunpack.c.l.b16 %v466
    %v2019 = vunpack.c.h.b16 %v466
    %v2020 = vunpack.c.l.b16 %v467
    %v2021 = vunpack.c.h.b16 %v467
    %v2022 = vunpack.c.l.b16 %v468
    %v2023 = vunpack.c.h.b16 %v468
    %v2024 = vunpack.c.l.b16 %v469
    %v2025 = vunpack.c.h.b16 %v469
    %v2026 = vunpack.c.l.b16 %v470
    %v2027 = vunpack.c.h.b16 %v470
    %v2028 = vunpack.c.l.b16 %v471
    %v2029 = vunpack.c.h.b16 %v471
    %v2030 = vunpack.c.l.b16 %v472
    %v2031 = vunpack.c.h.b16 %v472
    %v2032 = vunpack.c.l.b16 %v473
    %v2033 = vunpack.c.h.b16 %v473
    %v2034 = vunpack.c.l.b16 %v474
    %v2035 = vunpack.c.h.b16 %v474
    %v2036 = vunpack.c.l.b16 %v475
    %v2037 = vunpack.c.h.b16 %v475
    %v2038 = vunpack.c.l.b16 %v476
    %v2039 = vunpack.c.h.b16 %v476
    %v2040 = vunpack.c.l.b16 %v477
    %v2041 = vunpack.c.h.b16 %v477
    %v2042 = vunpack.c.l.b16 %v478
    %v2043 = vunpack.c.h.b16 %v478
    %v2044 = vunpack.c.l.b16 %v479
    %v2045 = vunpack.c.h.b16 %v479
    %v2046 = vunpack.c.l.b16 %v480
    %v2047 = vunpack.c.h.b16 %v480
    %v2048 = vunpack.c.l.b16 %v481
    %v2049 = vunpack.c.h.b16 %v481
    %v2050 = vunpack.c.l.b16 %v482
    %v2051 = vunpack.c.h.b16 %v482
    %v2052 = vunpack.c.l.b16 %v483
    %v2053 = vunpack.c.h.b16 %v483
    %v2054 = vunpack.c.l.b16 %v484
    %v2055 = vunpack.c.h.b16 %v484
    %v2056 = vunpack.c.l.b16 %v485
    %v2057 = vunpack.c.h.b16 %v485
    %v2058 = vunpack.c.l.b16 %v486
    %v2059 = vunpack.c.h.b16 %v486
    %v2060 = vunpack.c.l.b16 %v487
    %v2061 = vunpack.c.h.b16 %v487
    %v2062 = vunpack.c.l.b16 %v488
    %v2063 = vunpack.c.h.b16 %v488
    %v2064 = vunpack.c.l.b16 %v489
    %v2065 = vunpack.c.h.b16 %v489
    %v2066 = vunpack.c.l.b16 %v490
    %v2067 = vunpack.c.h.b16 %v490
    %v2068 = vunpack.c.l.b16 %v491
    %v2069 = vunpack.c.h.b16 %v491
    %v2070 = vunpack.c.l.b16 %v492
    %v2071 = vunpack.c.h.b16 %v492
    %v2072 = vunpack.c.l.b16 %v493
    %v2073 = vunpack.c.h.b16 %v493
    %v2074 = vunpack.c.l.b16 %v494
    %v2075 = vunpack.c.h.b16 %v494
    %v2076 = vunpack.c.l.b16 %v495
    %v2077 = vunpack.c.h.b16 %v495
    %v2078 = vunpack.c.l.b16 %v496
    %v2079 = vunpack.c.h.b16 %v496
    %v2080 = vunpack.c.l.b16 %v497
    %v2081 = vunpack.c.h.b16 %v497
    %v2082 = vunpack.c.l.b16 %v498
    %v2083 = vunpack.c.h.b16 %v498
    %v2084 = vunpack.c.l.b16 %v499
    %v2085 = vunpack.c.h.b16 %v499
    %v2086 = vunpack.c.l.b16 %v500
    %v2087 = vunpack.c.h.b16 %v500
    %v2088 = vunpack.c.l.b16 %v501
    %v2089 = vunpack.c.h.b16 %v501
    %v2090 = vunpack.c.l.b16 %v502
    %v2091 = vunpack.c.h.b16 %v502
    %v2092 = vunpack.c.l.b16 %v503
    %v2093 = vunpack.c.h.b16 %v503
    %v2094 = vunpack.c.l.b16 %v504
    %v2095 = vunpack.c.h.b16 %v504
    %v2096 = vunpack.c.l.b16 %v505
    %v2097 = vunpack.c.h.b16 %v505
    %v2098 = vunpack.c.l.b16 %v506
    %v2099 = vunpack.c.h.b16 %v506
    %v2100 = vunpack.c.l.b16 %v507
    %v2101 = vunpack.c.h.b16 %v507
    %v2102 = vunpack.c.l.b16 %v508
    %v2103 = vunpack.c.h.b16 %v508
    %v2104 = vunpack.c.l.b16 %v509
    %v2105 = vunpack.c.h.b16 %v509
    %v2106 = vunpack.c.l.b16 %v510
    %v2107 = vunpack.c.h.b16 %v510
    %v2108 = vunpack.c.l.b16 %v511
    %v2109 = vunpack.c.h.b16 %v511
    %v2110 = vunpack.c.l.b16 %v512
    %v2111 = vunpack.c.h.b16 %v512
    %v2112 = vunpack.c.l.b16 %v513
    %v2113 = vunpack.c.h.b16 %v513
    %v2114 = vunpack.c.l.b16 %v514
    %v2115 = vunpack.c.h.b16 %v514
    %v2116 = vunpack.c.l.b16 %v515
    %v2117 = vunpack.c.h.b16 %v515
    %v2118 = vunpack.c.l.b16 %v516
    %v2119 = vunpack.c.h.b16 %v516
    %v2120 = vunpack.c.l.b16 %v517
    %v2121 = vunpack.c.h.b16 %v517
    %v2122 = vunpack.c.l.b16 %v518
    %v2123 = vunpack.c.h.b16 %v518
    %v2124 = vunpack.c.l.b16 %v519
    %v2125 = vunpack.c.h.b16 %v519
    %v2126 = vunpack.c.l.b16 %v520
    %v2127 = vunpack.c.h.b16 %v520
    %v2128 = vunpack.c.l.b16 %v521
    %v2129 = vunpack.c.h.b16 %v521
    %v2130 = vunpack.c.l.b16 %v522
    %v2131 = vunpack.c.h.b16 %v522
    %v2132 = vunpack.c.l.b16 %v523
    %v2133 = vunpack.c.h.b16 %v523
    %v2134 = vunpack.c.l.b16 %v524
    %v2135 = vunpack.c.h.b16 %v524
    %v2136 = vunpack.c.l.b16 %v525
    %v2137 = vunpack.c.h.b16 %v525
    %v2138 = vunpack.c.l.b16 %v526
    %v2139 = vunpack.c.h.b16 %v526
    %v2140 = vunpack.c.l.b16 %v527
    %v2141 = vunpack.c.h.b16 %v527
    %v2142 = vunpack.c.l.b16 %v528
    %v2143 = vunpack.c.h.b16 %v528
    %v2144 = vunpack.c.l.b16 %v529
    %v2145 = vunpack.c.h.b16 %v529
    %v2146 = vunpack.c.l.b16 %v530
    %v2147 = vunpack.c.h.b16 %v530
    %v2148 = vunpack.c.l.b16 %v531
    %v2149 = vunpack.c.h.b16 %v531
    %v2150 = vunpack.c.l.b16 %v532
    %v2151 = vunpack.c.h.b16 %v532
    %v2152 = vunpack.c.l.b16 %v533
    %v2153 = vunpack.c.h.b16 %v533
    %v2154 = vunpack.c.l.b16 %v534
    %v2155 = vunpack.c.h.b16 %v534
    %v2156 = vunpack.c.l.b16 %v535
    %v2157 = vunpack.c.h.b16 %v535
    %v2158 = vunpack.c.l.b16 %v536
    %v2159 = vunpack.c.h.b16 %v536
    %v2160 = vunpack.c.l.b16 %v537
    %v2161 = vunpack.c.h.b16 %v537
    %v2162 = vunpack.c.l.b16 %v538
    %v2163 = vunpack.c.h.b16 %v538
    %v2164 = vunpack.c.l.b16 %v539
    %v2165 = vunpack.c.h.b16 %v539
    %v2166 = vunpack.c.l.b16 %v540
    %v2167 = vunpack.c.h.b16 %v540
    %v2168 = vunpack.c.l.b16 %v541
    %v2169 = vunpack.c.h.b16 %v541
    %v2170 = vunpack.c.l.b16 %v542
    %v2171 = vunpack.c.h.b16 %v542
    %v2172 = vunpack.c.l.b16 %v543
    %v2173 = vunpack.c.h.b16 %v543
    %v2174 = vunpack.c.l.b16 %v544
    %v2175 = vunpack.c.h.b16 %v544
    %v2176 = vunpack.c.l.b16 %v545
    %v2177 = vunpack.c.h.b16 %v545
    %v2178 = vunpack.c.l.b16 %v546
    %v2179 = vunpack.c.h.b16 %v546
    %v2180 = vunpack.c.l.b16 %v547
    %v2181 = vunpack.c.h.b16 %v547
    %v2182 = vunpack.c.l.b16 %v548
    %v2183 = vunpack.c.h.b16 %v548
    %v2184 = vunpack.c.l.b16 %v549
    %v2185 = vunpack.c.h.b16 %v549
    %v2186 = vunpack.c.l.b16 %v550
    %v2187 = vunpack.c.h.b16 %v550
    %v2188 = vunpack.c.l.b16 %v551
    %v2189 = vunpack.c.h.b16 %v551
    %v2190 = vunpack.c.l.b16 %v552
    %v2191 = vunpack.c.h.b16 %v552
    %v2192 = vunpack.c.l.b16 %v553
    %v2193 = vunpack.c.h.b16 %v553
    %v2194 = vunpack.c.l.b16 %v554
    %v2195 = vunpack.c.h.b16 %v554
    %v2196 = vunpack.c.l.b16 %v555
    %v2197 = vunpack.c.h.b16 %v555
    %v2198 = vunpack.c.l.b16 %v556
    %v2199 = vunpack.c.h.b16 %v556
    %v2200 = vunpack.c.l.b16 %v557
    %v2201 = vunpack.c.h.b16 %v557
    %v2202 = vunpack.c.l.b16 %v558
    %v2203 = vunpack.c.h.b16 %v558
    %v2204 = vunpack.c.l.b16 %v559
    %v2205 = vunpack.c.h.b16 %v559
    %v2206 = vunpack.c.l.b16 %v560
    %v2207 = vunpack.c.h.b16 %v560
    %v2208 = vunpack.c.l.b16 %v561
    %v2209 = vunpack.c.h.b16 %v561
    %v2210 = vunpack.c.l.b16 %v562
    %v2211 = vunpack.c.h.b16 %v562
    %v2212 = vunpack.c.l.b16 %v563
    %v2213 = vunpack.c.h.b16 %v563
    %v2214 = vunpack.c.l.b16 %v564
    %v2215 = vunpack.c.h.b16 %v564
    %v2216 = vunpack.c.l.b16 %v565
    %v2217 = vunpack.c.h.b16 %v565
    %v2218 = vunpack.c.l.b16 %v566
    %v2219 = vunpack.c.h.b16 %v566
    %v2220 = vunpack.c.l.b16 %v567
    %v2221 = vunpack.c.h.b16 %v567
    %v2222 = vunpack.c.l.b16 %v568
    %v2223 = vunpack.c.h.b16 %v568
    %v2224 = vunpack.c.l.b16 %v569
    %v2225 = vunpack.c.h.b16 %v569
    %v2226 = vunpack.c.l.b16 %v570
    %v2227 = vunpack.c.h.b16 %v570
    %v2228 = vunpack.c.l.b16 %v571
    %v2229 = vunpack.c.h.b16 %v571
    %v2230 = vunpack.c.l.b16 %v572
    %v2231 = vunpack.c.h.b16 %v572
    %v2232 = vunpack.c.l.b16 %v573
    %v2233 = vunpack.c.h.b16 %v573
    %v2234 = vunpack.c.l.b16 %v574
    %v2235 = vunpack.c.h.b16 %v574
    %v2236 = vunpack.c.l.b16 %v575
    %v2237 = vunpack.c.h.b16 %v575
    %v2238 = vunpack.c.l.b16 %v576
    %v2239 = vunpack.c.h.b16 %v576
    %v2240 = vunpack.c.l.b16 %v577
    %v2241 = vunpack.c.h.b16 %v577
    %v2242 = vunpack.c.l.b16 %v578
    %v2243 = vunpack.c.h.b16 %v578
    %v2244 = vunpack.c.l.b16 %v579
    %v2245 = vunpack.c.h.b16 %v579
    %v2246 = vunpack.c.l.b16 %v580
    %v2247 = vunpack.c.h.b16 %v580
    %v2248 = vunpack.c.l.b16 %v581
    %v2249 = vunpack.c.h.b16 %v581
    %v2250 = vunpack.c.l.b16 %v582
    %v2251 = vunpack.c.h.b16 %v582
    %v2252 = vunpack.c.l.b16 %v583
    %v2253 = vunpack.c.h.b16 %v583
    %v2254 = vunpack.c.l.b16 %v584
    %v2255 = vunpack.c.h.b16 %v584
    %v2256 = vunpack.c.l.b16 %v585
    %v2257 = vunpack.c.h.b16 %v585
    %v2258 = vunpack.c.l.b16 %v586
    %v2259 = vunpack.c.h.b16 %v586
    %v2260 = vunpack.c.l.b16 %v587
    %v2261 = vunpack.c.h.b16 %v587
    %v2262 = vunpack.c.l.b16 %v588
    %v2263 = vunpack.c.h.b16 %v588
    %v2264 = vunpack.c.l.b16 %v589
    %v2265 = vunpack.c.h.b16 %v589
    %v2266 = vunpack.c.l.b16 %v590
    %v2267 = vunpack.c.h.b16 %v590
    %v2268 = vunpack.c.l.b16 %v591
    %v2269 = vunpack.c.h.b16 %v591
    %v2270 = vunpack.c.l.b16 %v592
    %v2271 = vunpack.c.h.b16 %v592
    %v2272 = vunpack.c.l.b16 %v593
    %v2273 = vunpack.c.h.b16 %v593
    %v2274 = vunpack.c.l.b16 %v594
    %v2275 = vunpack.c.h.b16 %v594
    %v2276 = vunpack.c.l.b16 %v595
    %v2277 = vunpack.c.h.b16 %v595
    %v2278 = vunpack.c.l.b16 %v596
    %v2279 = vunpack.c.h.b16 %v596
    %v2280 = vunpack.c.l.b16 %v597
    %v2281 = vunpack.c.h.b16 %v597
    %v2282 = vunpack.c.l.b16 %v598
    %v2283 = vunpack.c.h.b16 %v598
    %v2284 = vunpack.c.l.b16 %v599
    %v2285 = vunpack.c.h.b16 %v599
    %v2286 = vunpack.c.l.b16 %v600
    %v2287 = vunpack.c.h.b16 %v600
    %v2288 = vunpack.c.l.b16 %v601
    %v2289 = vunpack.c.h.b16 %v601
    %v2290 = vunpack.c.l.b16 %v602
    %v2291 = vunpack.c.h.b16 %v602
    %v2292 = vunpack.c.l.b16 %v603
    %v2293 = vunpack.c.h.b16 %v603
    %v2294 = vunpack.c.l.b16 %v604
    %v2295 = vunpack.c.h.b16 %v604
    %v2296 = vunpack.c.l.b16 %v605
    %v2297 = vunpack.c.h.b16 %v605
    %v2298 = vunpack.c.l.b16 %v606
    %v2299 = vunpack.c.h.b16 %v606
    %v2300 = vunpack.c.l.b16 %v607
    %v2301 = vunpack.c.h.b16 %v607
    %v2302 = vunpack.c.l.b16 %v608
    %v2303 = vunpack.c.h.b16 %v608
    %v2304 = vunpack.c.l.b16 %v609
    %v2305 = vunpack.c.h.b16 %v609
    %v2306 = vunpack.c.l.b16 %v610
    %v2307 = vunpack.c.h.b16 %v610
    %v2308 = vunpack.c.l.b16 %v611
    %v2309 = vunpack.c.h.b16 %v611
    %v2310 = vunpack.c.l.b16 %v612
    %v2311 = vunpack.c.h.b16 %v612
    %v2312 = vunpack.c.l.b16 %v613
    %v2313 = vunpack.c.h.b16 %v613
    %v2314 = vunpack.c.l.b16 %v614
    %v2315 = vunpack.c.h.b16 %v614
    %v2316 = vunpack.c.l.b16 %v615
    %v2317 = vunpack.c.h.b16 %v615
    %v2318 = vunpack.c.l.b16 %v616
    %v2319 = vunpack.c.h.b16 %v616
    %v2320 = vunpack.c.l.b16 %v617
    %v2321 = vunpack.c.h.b16 %v617
    %v2322 = vunpack.c.l.b16 %v618
    %v2323 = vunpack.c.h.b16 %v618
    %v2324 = vunpack.c.l.b16 %v619
    %v2325 = vunpack.c.h.b16 %v619
    %v2326 = vunpack.c.l.b16 %v620
    %v2327 = vunpack.c.h.b16 %v620
    %v2328 = vunpack.c.l.b16 %v621
    %v2329 = vunpack.c.h.b16 %v621
    %v2330 = vunpack.c.l.b16 %v622
    %v2331 = vunpack.c.h.b16 %v622
    %v2332 = vunpack.c.l.b16 %v623
    %v2333 = vunpack.c.h.b16 %v623
    %v2334 = vunpack.c.l.b16 %v624
    %v2335 = vunpack.c.h.b16 %v624
    %v2336 = vunpack.c.l.b16 %v625
    %v2337 = vunpack.c.h.b16 %v625
    %v2338 = vunpack.c.l.b16 %v626
    %v2339 = vunpack.c.h.b16 %v626
    %v2340 = vunpack.c.l.b16 %v627
    %v2341 = vunpack.c.h.b16 %v627
    %v2342 = vunpack.c.l.b16 %v628
    %v2343 = vunpack.c.h.b16 %v628
    %v2344 = vunpack.c.l.b16 %v629
    %v2345 = vunpack.c.h.b16 %v629
    %v2346 = vunpack.c.l.b16 %v630
    %v2347 = vunpack.c.h.b16 %v630
    %v2348 = vunpack.c.l.b16 %v631
    %v2349 = vunpack.c.h.b16 %v631
    %v2350 = vunpack.c.l.b16 %v632
    %v2351 = vunpack.c.h.b16 %v632
    %v2352 = vunpack.c.l.b16 %v633
    %v2353 = vunpack.c.h.b16 %v633
    %v2354 = vunpack.c.l.b16 %v634
    %v2355 = vunpack.c.h.b16 %v634
    %v2356 = vunpack.c.l.b16 %v635
    %v2357 = vunpack.c.h.b16 %v635
    %v2358 = vunpack.c.l.b16 %v636
    %v2359 = vunpack.c.h.b16 %v636
    %v2360 = vunpack.c.l.b16 %v637
    %v2361 = vunpack.c.h.b16 %v637
    %v2362 = vunpack.c.l.b16 %v638
    %v2363 = vunpack.c.h.b16 %v638
    %v2364 = vunpack.c.l.b16 %v639
    %v2365 = vunpack.c.h.b16 %v639
    %v2366 = vunpack.c.l.b16 %v640
    %v2367 = vunpack.c.h.b16 %v640
    %v2368 = vunpack.c.l.b16 %v641
    %v2369 = vunpack.c.h.b16 %v641
    %v2370 = vunpack.c.l.b16 %v642
    %v2371 = vunpack.c.h.b16 %v642
    %v2372 = vunpack.c.l.b16 %v643
    %v2373 = vunpack.c.h.b16 %v643
    %v2374 = vunpack.c.l.b16 %v644
    %v2375 = vunpack.c.h.b16 %v644
    %v2376 = vunpack.c.l.b16 %v645
    %v2377 = vunpack.c.h.b16 %v645
    %v2378 = vunpack.c.l.b16 %v646
    %v2379 = vunpack.c.h.b16 %v646
    %v2380 = vunpack.c.l.b16 %v647
    %v2381 = vunpack.c.h.b16 %v647
    %v2382 = vunpack.c.l.b16 %v648
    %v2383 = vunpack.c.h.b16 %v648
    %v2384 = vunpack.c.l.b16 %v649
    %v2385 = vunpack.c.h.b16 %v649
    %v2386 = vunpack.c.l.b16 %v650
    %v2387 = vunpack.c.h.b16 %v650
    %v2388 = vunpack.c.l.b16 %v651
    %v2389 = vunpack.c.h.b16 %v651
    %v2390 = vunpack.c.l.b16 %v652
    %v2391 = vunpack.c.h.b16 %v652
    %v2392 = vunpack.c.l.b16 %v653
    %v2393 = vunpack.c.h.b16 %v653
    %v2394 = vunpack.c.l.b16 %v654
    %v2395 = vunpack.c.h.b16 %v654
    %v2396 = vunpack.c.l.b16 %v655
    %v2397 = vunpack.c.h.b16 %v655
    %v2398 = vunpack.c.l.b16 %v656
    %v2399 = vunpack.c.h.b16 %v656
    %v2400 = vunpack.c.l.b16 %v657
    %v2401 = vunpack.c.h.b16 %v657
    %v2402 = vunpack.c.l.b16 %v658
    %v2403 = vunpack.c.h.b16 %v658
    %v2404 = vunpack.c.l.b16 %v659
    %v2405 = vunpack.c.h.b16 %v659
    %v2406 = vunpack.c.l.b16 %v660
    %v2407 = vunpack.c.h.b16 %v660
    %v2408 = vunpack.c.l.b16 %v661
    %v2409 = vunpack.c.h.b16 %v661
    %v2410 = vunpack.c.l.b16 %v662
    %v2411 = vunpack.c.h.b16 %v662
    %v2412 = vunpack.c.l.b16 %v663
    %v2413 = vunpack.c.h.b16 %v663
    %v2414 = vunpack.c.l.b16 %v664
    %v2415 = vunpack.c.h.b16 %v664
    %v2416 = vunpack.c.l.b16 %v665
    %v2417 = vunpack.c.h.b16 %v665
    %v2418 = vunpack.c.l.b16 %v666
    %v2419 = vunpack.c.h.b16 %v666
    %v2420 = vunpack.c.l.b16 %v667
    %v2421 = vunpack.c.h.b16 %v667
    %v2422 = vunpack.c.l.b16 %v668
    %v2423 = vunpack.c.h.b16 %v668
    %v2424 = vunpack.c.l.b16 %v669
    %v2425 = vunpack.c.h.b16 %v669
    %v2426 = vunpack.c.l.b16 %v670
    %v2427 = vunpack.c.h.b16 %v670
    %v2428 = vunpack.c.l.b16 %v671
    %v2429 = vunpack.c.h.b16 %v671
    %v2430 = vunpack.c.l.b16 %v672
    %v2431 = vunpack.c.h.b16 %v672
    %v2432 = vunpack.c.l.b16 %v673
    %v2433 = vunpack.c.h.b16 %v673
    %v2434 = vunpack.c.l.b16 %v674
    %v2435 = vunpack.c.h.b16 %v674
    %v2436 = vunpack.c.l.b16 %v675
    %v2437 = vunpack.c.h.b16 %v675
    %v2438 = vunpack.c.l.b16 %v676
    %v2439 = vunpack.c.h.b16 %v676
    %v2440 = vunpack.c.l.b16 %v677
    %v2441 = vunpack.c.h.b16 %v677
    %v2442 = vunpack.c.l.b16 %v678
    %v2443 = vunpack.c.h.b16 %v678
    %v2444 = vunpack.c.l.b16 %v679
    %v2445 = vunpack.c.h.b16 %v679
    %v2446 = vunpack.c.l.b16 %v680
    %v2447 = vunpack.c.h.b16 %v680
    %v2448 = vunpack.c.l.b16 %v681
    %v2449 = vunpack.c.h.b16 %v681
    %v2450 = vunpack.c.l.b16 %v682
    %v2451 = vunpack.c.h.b16 %v682
    %v2452 = vunpack.c.l.b16 %v683
    %v2453 = vunpack.c.h.b16 %v683
    %v2454 = vunpack.c.l.b16 %v684
    %v2455 = vunpack.c.h.b16 %v684
    %v2456 = vunpack.c.l.b16 %v685
    %v2457 = vunpack.c.h.b16 %v685
    %v2458 = vunpack.c.l.b16 %v686
    %v2459 = vunpack.c.h.b16 %v686
    %v2460 = vunpack.c.l.b16 %v687
    %v2461 = vunpack.c.h.b16 %v687
    %v2462 = vunpack.c.l.b16 %v688
    %v2463 = vunpack.c.h.b16 %v688
    %v2464 = vunpack.c.l.b16 %v689
    %v2465 = vunpack.c.h.b16 %v689
    %v2466 = vunpack.c.l.b16 %v690
    %v2467 = vunpack.c.h.b16 %v690
    %v2468 = vunpack.c.l.b16 %v691
    %v2469 = vunpack.c.h.b16 %v691
    %v2470 = vunpack.c.l.b16 %v692
    %v2471 = vunpack.c.h.b16 %v692
    %v2472 = vunpack.c.l.b16 %v693
    %v2473 = vunpack.c.h.b16 %v693
    %v2474 = vunpack.c.l.b16 %v694
    %v2475 = vunpack.c.h.b16 %v694
    %v2476 = vunpack.c.l.b16 %v695
    %v2477 = vunpack.c.h.b16 %v695
    %v2478 = vunpack.c.l.b16 %v696
    %v2479 = vunpack.c.h.b16 %v696
    %v2480 = vunpack.c.l.b16 %v697
    %v2481 = vunpack.c.h.b16 %v697
    %v2482 = vunpack.c.l.b16 %v698
    %v2483 = vunpack.c.h.b16 %v698
    %v2484 = vunpack.c.l.b16 %v699
    %v2485 = vunpack.c.h.b16 %v699
    %v2486 = vunpack.c.l.b16 %v700
    %v2487 = vunpack.c.h.b16 %v700
    %v2488 = vunpack.c.l.b16 %v701
    %v2489 = vunpack.c.h.b16 %v701
    %v2490 = vunpack.c.l.b16 %v702
    %v2491 = vunpack.c.h.b16 %v702
    %v2492 = vunpack.c.l.b16 %v703
    %v2493 = vunpack.c.h.b16 %v703
    %v2494 = vunpack.c.l.b16 %v704
    %v2495 = vunpack.c.h.b16 %v704
    %v2496 = vunpack.c.l.b16 %v705
    %v2497 = vunpack.c.h.b16 %v705
    %v2498 = vunpack.c.l.b16 %v706
    %v2499 = vunpack.c.h.b16 %v706
    %v2500 = vunpack.c.l.b16 %v707
    %v2501 = vunpack.c.h.b16 %v707
    %v2502 = vunpack.c.l.b16 %v708
    %v2503 = vunpack.c.h.b16 %v708
    %v2504 = vunpack.c.l.b16 %v709
    %v2505 = vunpack.c.h.b16 %v709
    %v2506 = vunpack.c.l.b16 %v710
    %v2507 = vunpack.c.h.b16 %v710
    %v2508 = vunpack.c.l.b16 %v711
    %v2509 = vunpack.c.h.b16 %v711
    %v2510 = vunpack.c.l.b16 %v712
    %v2511 = vunpack.c.h.b16 %v712
    %v2512 = vunpack.c.l.b16 %v713
    %v2513 = vunpack.c.h.b16 %v713
    %v2514 = vunpack.c.l.b16 %v714
    %v2515 = vunpack.c.h.b16 %v714
    %v2516 = vunpack.c.l.b16 %v715
    %v2517 = vunpack.c.h.b16 %v715
    %v2518 = vpack.c.b16 %v1372, %v1366
    %v2519 = vpack.c.b16 %v1373, %v1367
    %v2520 = vpack.c.b16 %v1374, %v1368
    %v2521 = vpack.c.b16 %v1375, %v1369
    %v2522 = vpack.c.b16 %v1376, %v1370
    %v2523 = vpack.c.b16 %v1377, %v1371
    %v2524 = vpack.c.b16 %v1384, %v1378
    %v2525 = vpack.c.b16 %v1385, %v1379
    %v2526 = vpack.c.b16 %v1386, %v1380
    %v2527 = vpack.c.b16 %v1387, %v1381
    %v2528 = vpack.c.b16 %v1388, %v1382
    %v2529 = vpack.c.b16 %v1389, %v1383
    %v2530 = vpack.c.b16 %v1396, %v1390
    %v2531 = vpack.c.b16 %v1397, %v1391
    %v2532 = vpack.c.b16 %v1398, %v1392
    %v2533 = vpack.c.b16 %v1399, %v1393
    %v2534 = vpack.c.b16 %v1400, %v1394
    %v2535 = vpack.c.b16 %v1401, %v1395
    %v2536 = vpack.c.b16 %v1408, %v1402
    %v2537 = vpack.c.b16 %v1409, %v1403
    %v2538 = vpack.c.b16 %v1410, %v1404
    %v2539 = vpack.c.b16 %v1411, %v1405
    %v2540 = vpack.c.b16 %v1412, %v1406
    %v2541 = vpack.c.b16 %v1413, %v1407
    %v2542 = vpack.c.b16 %v1420, %v1414
    %v2543 = vpack.c.b16 %v1421, %v1415
    %v2544 = vpack.c.b16 %v1422, %v1416
    %v2545 = vpack.c.b16 %v1423, %v1417
    %v2546 = vpack.c.b16 %v1424, %v1418
    %v2547 = vpack.c.b16 %v1425, %v1419
    %v2548 = vpack.c.b16 %v1432, %v1426
    %v2549 = vpack.c.b16 %v1433, %v1427
    %v2550 = vpack.c.b16 %v1434, %v1428
    %v2551 = vpack.c.b16 %v1435, %v1429
    %v2552 = vpack.c.b16 %v1436, %v1430
    %v2553 = vpack.c.b16 %v1437, %v1431
    %v2554 = vpack.c.b16 %v1444, %v1438
    %v2555 = vpack.c.b16 %v1445, %v1439
    %v2556 = vpack.c.b16 %v1446, %v1440
    %v2557 = vpack.c.b16 %v1447, %v1441
    %v2558 = vpack.c.b16 %v1448, %v1442
    %v2559 = vpack.c.b16 %v1449, %v1443
    %v2560 = vpack.c.b16 %v1456, %v1450
    %v2561 = vpack.c.b16 %v1457, %v1451
    %v2562 = vpack.c.b16 %v1458, %v1452
    %v2563 = vpack.c.b16 %v1459, %v1453
    %v2564 = vpack.c.b16 %v1460, %v1454
    %v2565 = vpack.c.b16 %v1461, %v1455
    %v2566 = vpack.c.b16 %v1468, %v1462
    %v2567 = vpack.c.b16 %v1469, %v1463
    %v2568 = vpack.c.b16 %v1470, %v1464
    %v2569 = vpack.c.b16 %v1471, %v1465
    %v2570 = vpack.c.b16 %v1472, %v1466
    %v2571 = vpack.c.b16 %v1473, %v1467
    %v2572 = vpack.c.b16 %v1480, %v1474
    %v2573 = vpack.c.b16 %v1481, %v1475
    %v2574 = vpack.c.b16 %v1482, %v1476
    %v2575 = vpack.c.b16 %v1483, %v1477
    %v2576 = vpack.c.b16 %v1484, %v1478
    %v2577 = vpack.c.b16 %v1485, %v1479
    %v2578 = vpack.c.b16 %v1492, %v1486
    %v2579 = vpack.c.b16 %v1493, %v1487
    %v2580 = vpack.c.b16 %v1494, %v1488
    %v2581 = vpack.c.b16 %v1495, %v1489
    %v2582 = vpack.c.b16 %v1496, %v1490
    %v2583 = vpack.c.b16 %v1497, %v1491
    %v2584 = vpack.c.b16 %v1504, %v1498
    %v2585 = vpack.c.b16 %v1505, %v1499
    %v2586 = vpack.c.b16 %v1506, %v1500
    %v2587 = vpack.c.b16 %v1507, %v1501
    %v2588 = vpack.c.b16 %v1508, %v1502
    %v2589 = vpack.c.b16 %v1509, %v1503
    %v2590 = vpack.c.b16 %v1516, %v1510
    %v2591 = vpack.c.b16 %v1517, %v1511
    %v2592 = vpack.c.b16 %v1518, %v1512
    %v2593 = vpack.c.b16 %v1519, %v1513
    %v2594 = vpack.c.b16 %v1520, %v1514
    %v2595 = vpack.c.b16 %v1521, %v1515
    %v2596 = vpack.c.b16 %v1528, %v1522
    %v2597 = vpack.c.b16 %v1529, %v1523
    %v2598 = vpack.c.b16 %v1530, %v1524
    %v2599 = vpack.c.b16 %v1531, %v1525
    %v2600 = vpack.c.b16 %v1532, %v1526
    %v2601 = vpack.c.b16 %v1533, %v1527
    %v2602 = vpack.c.b16 %v1540, %v1534
    %v2603 = vpack.c.b16 %v1541, %v1535
    %v2604 = vpack.c.b16 %v1542, %v1536
    %v2605 = vpack.c.b16 %v1543, %v1537
    %v2606 = vpack.c.b16 %v1544, %v1538
    %v2607 = vpack.c.b16 %v1545, %v1539
    %v2608 = vpack.c.b16 %v1552, %v1546
    %v2609 = vpack.c.b16 %v1553, %v1547
    %v2610 = vpack.c.b16 %v1554, %v1548
    %v2611 = vpack.c.b16 %v1555, %v1549
    %v2612 = vpack.c.b16 %v1556, %v1550
    %v2613 = vpack.c.b16 %v1557, %v1551
    %v2614 = vpack.c.b16 %v1564, %v1558
    %v2615 = vpack.c.b16 %v1565, %v1559
    %v2616 = vpack.c.b16 %v1566, %v1560
    %v2617 = vpack.c.b16 %v1567, %v1561
    %v2618 = vpack.c.b16 %v1568, %v1562
    %v2619 = vpack.c.b16 %v1569, %v1563
    %v2620 = vpack.c.b16 %v1576, %v1570
    %v2621 = vpack.c.b16 %v1577, %v1571
    %v2622 = vpack.c.b16 %v1578, %v1572
    %v2623 = vpack.c.b16 %v1579, %v1573
    %v2624 = vpack.c.b16 %v1580, %v1574
    %v2625 = vpack.c.b16 %v1581, %v1575
    %v2626 = vpack.c.b16 %v1588, %v1582
    %v2627 = vpack.c.b16 %v1589, %v1583
    %v2628 = vpack.c.b16 %v1590, %v1584
    %v2629 = vpack.c.b16 %v1591, %v1585
    %v2630 = vpack.c.b16 %v1592, %v1586
    %v2631 = vpack.c.b16 %v1593, %v1587
    %v2632 = vpack.c.b16 %v1600, %v1594
    %v2633 = vpack.c.b16 %v1601, %v1595
    %v2634 = vpack.c.b16 %v1602, %v1596
    %v2635 = vpack.c.b16 %v1603, %v1597
    %v2636 = vpack.c.b16 %v1604, %v1598
    %v2637 = vpack.c.b16 %v1605, %v1599
    %v2638 = vpack.c.b16 %v1612, %v1606
    %v2639 = vpack.c.b16 %v1613, %v1607
    %v2640 = vpack.c.b16 %v1614, %v1608
    %v2641 = vpack.c.b16 %v1615, %v1609
    %v2642 = vpack.c.b16 %v1616, %v1610
    %v2643 = vpack.c.b16 %v1617, %v1611
    %v2644 = vpack.c.b16 %v1624, %v1618
    %v2645 = vpack.c.b16 %v1625, %v1619
    %v2646 = vpack.c.b16 %v1626, %v1620
    %v2647 = vpack.c.b16 %v1627, %v1621
    %v2648 = vpack.c.b16 %v1628, %v1622
    %v2649 = vpack.c.b16 %v1629, %v1623
    %v2650 = vpack.c.b16 %v1636, %v1630
    %v2651 = vpack.c.b16 %v1637, %v1631
    %v2652 = vpack.c.b16 %v1638, %v1632
    %v2653 = vpack.c.b16 %v1639, %v1633
    %v2654 = vpack.c.b16 %v1640, %v1634
    %v2655 = vpack.c.b16 %v1641, %v1635
    %v2656 = vpack.c.b16 %v1648, %v1642
    %v2657 = vpack.c.b16 %v1649, %v1643
    %v2658 = vpack.c.b16 %v1650, %v1644
    %v2659 = vpack.c.b16 %v1651, %v1645
    %v2660 = vpack.c.b16 %v1652, %v1646
    %v2661 = vpack.c.b16 %v1653, %v1647
    %v2662 = vpack.c.b16 %v1660, %v1654
    %v2663 = vpack.c.b16 %v1661, %v1655
    %v2664 = vpack.c.b16 %v1662, %v1656
    %v2665 = vpack.c.b16 %v1663, %v1657
    %v2666 = vpack.c.b16 %v1664, %v1658
    %v2667 = vpack.c.b16 %v1665, %v1659
    %v2668 = vpack.c.b16 %v1672, %v1666
    %v2669 = vpack.c.b16 %v1673, %v1667
    %v2670 = vpack.c.b16 %v1674, %v1668
    %v2671 = vpack.c.b16 %v1675, %v1669
    %v2672 = vpack.c.b16 %v1676, %v1670
    %v2673 = vpack.c.b16 %v1677, %v1671
    %v2674 = vpack.c.b16 %v1684, %v1678
    %v2675 = vpack.c.b16 %v1685, %v1679
    %v2676 = vpack.c.b16 %v1686, %v1680
    %v2677 = vpack.c.b16 %v1687, %v1681
    %v2678 = vpack.c.b16 %v1688, %v1682
    %v2679 = vpack.c.b16 %v1689, %v1683
    %v2680 = vpack.c.b16 %v1696, %v1690
    %v2681 = vpack.c.b16 %v1697, %v1691
    %v2682 = vpack.c.b16 %v1698, %v1692
    %v2683 = vpack.c.b16 %v1699, %v1693
    %v2684 = vpack.c.b16 %v1700, %v1694
    %v2685 = vpack.c.b16 %v1701, %v1695
    %v2686 = vpack.c.b16 %v1708, %v1702
    %v2687 = vpack.c.b16 %v1709, %v1703
    %v2688 = vpack.c.b16 %v1710, %v1704
    %v2689 = vpack.c.b16 %v1711, %v1705
    %v2690 = vpack.c.b16 %v1712, %v1706
    %v2691 = vpack.c.b16 %v1713, %v1707
    %v2692 = vpack.c.b16 %v1720, %v1714
    %v2693 = vpack.c.b16 %v1721, %v1715
    %v2694 = vpack.c.b16 %v1722, %v1716
    %v2695 = vpack.c.b16 %v1723, %v1717
    %v2696 = vpack.c.b16 %v1724, %v1718
    %v2697 = vpack.c.b16 %v1725, %v1719
    %v2698 = vpack.c.b16 %v1732, %v1726
    %v2699 = vpack.c.b16 %v1733, %v1727
    %v2700 = vpack.c.b16 %v1734, %v1728
    %v2701 = vpack.c.b16 %v1735, %v1729
    %v2702 = vpack.c.b16 %v1736, %v1730
    %v2703 = vpack.c.b16 %v1737, %v1731
    %v2704 = vpack.c.b16 %v1744, %v1738
    %v2705 = vpack.c.b16 %v1745, %v1739
    %v2706 = vpack.c.b16 %v1746, %v1740
    %v2707 = vpack.c.b16 %v1747, %v1741
    %v2708 = vpack.c.b16 %v1748, %v1742
    %v2709 = vpack.c.b16 %v1749, %v1743
    %v2710 = vpack.c.b16 %v1756, %v1750
    %v2711 = vpack.c.b16 %v1757, %v1751
    %v2712 = vpack.c.b16 %v1758, %v1752
    %v2713 = vpack.c.b16 %v1759, %v1753
    %v2714 = vpack.c.b16 %v1760, %v1754
    %v2715 = vpack.c.b16 %v1761, %v1755
    %v2716 = vpack.c.b16 %v1768, %v1762
    %v2717 = vpack.c.b16 %v1769, %v1763
    %v2718 = vpack.c.b16 %v1770, %v1764
    %v2719 = vpack.c.b16 %v1771, %v1765
    %v2720 = vpack.c.b16 %v1772, %v1766
    %v2721 = vpack.c.b16 %v1773, %v1767
    %v2722 = vpack.c.b16 %v1780, %v1774
    %v2723 = vpack.c.b16 %v1781, %v1775
    %v2724 = vpack.c.b16 %v1782, %v1776
    %v2725 = vpack.c.b16 %v1783, %v1777
    %v2726 = vpack.c.b16 %v1784, %v1778
    %v2727 = vpack.c.b16 %v1785, %v1779
    %v2728 = vpack.c.b16 %v1792, %v1786
    %v2729 = vpack.c.b16 %v1793, %v1787
    %v2730 = vpack.c.b16 %v1794, %v1788
    %v2731 = vpack.c.b16 %v1795, %v1789
    %v2732 = vpack.c.b16 %v1796, %v1790
    %v2733 = vpack.c.b16 %v1797, %v1791
    %v2734 = vpack.c.b16 %v1804, %v1798
    %v2735 = vpack.c.b16 %v1805, %v1799
    %v2736 = vpack.c.b16 %v1806, %v1800
    %v2737 = vpack.c.b16 %v1807, %v1801
    %v2738 = vpack.c.b16 %v1808, %v1802
    %v2739 = vpack.c.b16 %v1809, %v1803
    %v2740 = vpack.c.b16 %v1816, %v1810
    %v2741 = vpack.c.b16 %v1817, %v1811
    %v2742 = vpack.c.b16 %v1818, %v1812
    %v2743 = vpack.c.b16 %v1819, %v1813
    %v2744 = vpack.c.b16 %v1820, %v1814
    %v2745 = vpack.c.b16 %v1821, %v1815
    %v2746 = vpack.c.b16 %v1828, %v1822
    %v2747 = vpack.c.b16 %v1829, %v1823
    %v2748 = vpack.c.b16 %v1830, %v1824
    %v2749 = vpack.c.b16 %v1831, %v1825
    %v2750 = vpack.c.b16 %v1832, %v1826
    %v2751 = vpack.c.b16 %v1833, %v1827
    %v2752 = vpack.c.b16 %v1840, %v1834
    %v2753 = vpack.c.b16 %v1841, %v1835
    %v2754 = vpack.c.b16 %v1842, %v1836
    %v2755 = vpack.c.b16 %v1843, %v1837
    %v2756 = vpack.c.b16 %v1844, %v1838
    %v2757 = vpack.c.b16 %v1845, %v1839
    %v2758 = vpack.c.b16 %v1852, %v1846
    %v2759 = vpack.c.b16 %v1853, %v1847
    %v2760 = vpack.c.b16 %v1854, %v1848
    %v2761 = vpack.c.b16 %v1855, %v1849
    %v2762 = vpack.c.b16 %v1856, %v1850
    %v2763 = vpack.c.b16 %v1857, %v1851
    %v2764 = vpack.c.b16 %v1864, %v1858
    %v2765 = vpack.c.b16 %v1865, %v1859
    %v2766 = vpack.c.b16 %v1866, %v1860
    %v2767 = vpack.c.b16 %v1867, %v1861
    %v2768 = vpack.c.b16 %v1868, %v1862
    %v2769 = vpack.c.b16 %v1869, %v1863
    %v2770 = vpack.c.b16 %v1876, %v1870
    %v2771 = vpack.c.b16 %v1877, %v1871
    %v2772 = vpack.c.b16 %v1878, %v1872
    %v2773 = vpack.c.b16 %v1879, %v1873
    %v2774 = vpack.c.b16 %v1880, %v1874
    %v2775 = vpack.c.b16 %v1881, %v1875
    %v2776 = vpack.c.b16 %v1888, %v1882
    %v2777 = vpack.c.b16 %v1889, %v1883
    %v2778 = vpack.c.b16 %v1890, %v1884
    %v2779 = vpack.c.b16 %v1891, %v1885
    %v2780 = vpack.c.b16 %v1892, %v1886
    %v2781 = vpack.c.b16 %v1893, %v1887
    %v2782 = vpack.c.b16 %v1900, %v1894
    %v2783 = vpack.c.b16 %v1901, %v1895
    %v2784 = vpack.c.b16 %v1902, %v1896
    %v2785 = vpack.c.b16 %v1903, %v1897
    %v2786 = vpack.c.b16 %v1904, %v1898
    %v2787 = vpack.c.b16 %v1905, %v1899
    %v2788 = vpack.c.b16 %v1912, %v1906
    %v2789 = vpack.c.b16 %v1913, %v1907
    %v2790 = vpack.c.b16 %v1914, %v1908
    %v2791 = vpack.c.b16 %v1915, %v1909
    %v2792 = vpack.c.b16 %v1916, %v1910
    %v2793 = vpack.c.b16 %v1917, %v1911
    %v2794 = vpack.c.b16 %v1924, %v1918
    %v2795 = vpack.c.b16 %v1925, %v1919
    %v2796 = vpack.c.b16 %v1926, %v1920
    %v2797 = vpack.c.b16 %v1927, %v1921
    %v2798 = vpack.c.b16 %v1928, %v1922
    %v2799 = vpack.c.b16 %v1929, %v1923
    %v2800 = vpack.c.b16 %v1936, %v1930
    %v2801 = vpack.c.b16 %v1937, %v1931
    %v2802 = vpack.c.b16 %v1938, %v1932
    %v2803 = vpack.c.b16 %v1939, %v1933
    %v2804 = vpack.c.b16 %v1940, %v1934
    %v2805 = vpack.c.b16 %v1941, %v1935
    %v2806 = vpack.c.b16 %v1948, %v1942
    %v2807 = vpack.c.b16 %v1949, %v1943
    %v2808 = vpack.c.b16 %v1950, %v1944
    %v2809 = vpack.c.b16 %v1951, %v1945
    %v2810 = vpack.c.b16 %v1952, %v1946
    %v2811 = vpack.c.b16 %v1953, %v1947
    %v2812 = vpack.c.b16 %v1960, %v1954
    %v2813 = vpack.c.b16 %v1961, %v1955
    %v2814 = vpack.c.b16 %v1962, %v1956
    %v2815 = vpack.c.b16 %v1963, %v1957
    %v2816 = vpack.c.b16 %v1964, %v1958
    %v2817 = vpack.c.b16 %v1965, %v1959
    %v2818 = vpack.c.b16 %v1972, %v1966
    %v2819 = vpack.c.b16 %v1973, %v1967
    %v2820 = vpack.c.b16 %v1974, %v1968
    %v2821 = vpack.c.b16 %v1975, %v1969
    %v2822 = vpack.c.b16 %v1976, %v1970
    %v2823 = vpack.c.b16 %v1977, %v1971
    %v2824 = vpack.c.b16 %v1984, %v1978
    %v2825 = vpack.c.b16 %v1985, %v1979
    %v2826 = vpack.c.b16 %v1986, %v1980
    %v2827 = vpack.c.b16 %v1987, %v1981
    %v2828 = vpack.c.b16 %v1988, %v1982
    %v2829 = vpack.c.b16 %v1989, %v1983
    %v2830 = vpack.c.b16 %v1996, %v1990
    %v2831 = vpack.c.b16 %v1997, %v1991
    %v2832 = vpack.c.b16 %v1998, %v1992
    %v2833 = vpack.c.b16 %v1999, %v1993
    %v2834 = vpack.c.b16 %v2000, %v1994
    %v2835 = vpack.c.b16 %v2001, %v1995
    %v2836 = vpack.c.b16 %v2008, %v2002
    %v2837 = vpack.c.b16 %v2009, %v2003
    %v2838 = vpack.c.b16 %v2010, %v2004
    %v2839 = vpack.c.b16 %v2011, %v2005
    %v2840 = vpack.c.b16 %v2012, %v2006
    %v2841 = vpack.c.b16 %v2013, %v2007
    %v2842 = vpack.c.b16 %v2020, %v2014
    %v2843 = vpack.c.b16 %v2021, %v2015
    %v2844 = vpack.c.b16 %v2022, %v2016
    %v2845 = vpack.c.b16 %v2023, %v2017
    %v2846 = vpack.c.b16 %v2024, %v2018
    %v2847 = vpack.c.b16 %v2025, %v2019
    %v2848 = vpack.c.b16 %v2032, %v2026
    %v2849 = vpack.c.b16 %v2033, %v2027
    %v2850 = vpack.c.b16 %v2034, %v2028
    %v2851 = vpack.c.b16 %v2035, %v2029
    %v2852 = vpack.c.b16 %v2036, %v2030
    %v2853 = vpack.c.b16 %v2037, %v2031
    %v2854 = vpack.c.b16 %v2044, %v2038
    %v2855 = vpack.c.b16 %v2045, %v2039
    %v2856 = vpack.c.b16 %v2046, %v2040
    %v2857 = vpack.c.b16 %v2047, %v2041
    %v2858 = vpack.c.b16 %v2048, %v2042
    %v2859 = vpack.c.b16 %v2049, %v2043
    %v2860 = vpack.c.b16 %v2056, %v2050
    %v2861 = vpack.c.b16 %v2057, %v2051
    %v2862 = vpack.c.b16 %v2058, %v2052
    %v2863 = vpack.c.b16 %v2059, %v2053
    %v2864 = vpack.c.b16 %v2060, %v2054
    %v2865 = vpack.c.b16 %v2061, %v2055
    %v2866 = vpack.c.b16 %v2068, %v2062
    %v2867 = vpack.c.b16 %v2069, %v2063
    %v2868 = vpack.c.b16 %v2070, %v2064
    %v2869 = vpack.c.b16 %v2071, %v2065
    %v2870 = vpack.c.b16 %v2072, %v2066
    %v2871 = vpack.c.b16 %v2073, %v2067
    %v2872 = vpack.c.b16 %v2080, %v2074
    %v2873 = vpack.c.b16 %v2081, %v2075
    %v2874 = vpack.c.b16 %v2082, %v2076
    %v2875 = vpack.c.b16 %v2083, %v2077
    %v2876 = vpack.c.b16 %v2084, %v2078
    %v2877 = vpack.c.b16 %v2085, %v2079
    %v2878 = vpack.c.b16 %v2092, %v2086
    %v2879 = vpack.c.b16 %v2093, %v2087
    %v2880 = vpack.c.b16 %v2094, %v2088
    %v2881 = vpack.c.b16 %v2095, %v2089
    %v2882 = vpack.c.b16 %v2096, %v2090
    %v2883 = vpack.c.b16 %v2097, %v2091
    %v2884 = vpack.c.b16 %v2104, %v2098
    %v2885 = vpack.c.b16 %v2105, %v2099
    %v2886 = vpack.c.b16 %v2106, %v2100
    %v2887 = vpack.c.b16 %v2107, %v2101
    %v2888 = vpack.c.b16 %v2108, %v2102
    %v2889 = vpack.c.b16 %v2109, %v2103
    %v2890 = vpack.c.b16 %v2116, %v2110
    %v2891 = vpack.c.b16 %v2117, %v2111
    %v2892 = vpack.c.b16 %v2118, %v2112
    %v2893 = vpack.c.b16 %v2119, %v2113
    %v2894 = vpack.c.b16 %v2120, %v2114
    %v2895 = vpack.c.b16 %v2121, %v2115
    %v2896 = vpack.c.b16 %v2128, %v2122
    %v2897 = vpack.c.b16 %v2129, %v2123
    %v2898 = vpack.c.b16 %v2130, %v2124
    %v2899 = vpack.c.b16 %v2131, %v2125
    %v2900 = vpack.c.b16 %v2132, %v2126
    %v2901 = vpack.c.b16 %v2133, %v2127
    %v2902 = vpack.c.b16 %v2140, %v2134
    %v2903 = vpack.c.b16 %v2141, %v2135
    %v2904 = vpack.c.b16 %v2142, %v2136
    %v2905 = vpack.c.b16 %v2143, %v2137
    %v2906 = vpack.c.b16 %v2144, %v2138
    %v2907 = vpack.c.b16 %v2145, %v2139
    %v2908 = vpack.c.b16 %v2152, %v2146
    %v2909 = vpack.c.b16 %v2153, %v2147
    %v2910 = vpack.c.b16 %v2154, %v2148
    %v2911 = vpack.c.b16 %v2155, %v2149
    %v2912 = vpack.c.b16 %v2156, %v2150
    %v2913 = vpack.c.b16 %v2157, %v2151
    %v2914 = vpack.c.b16 %v2164, %v2158
    %v2915 = vpack.c.b16 %v2165, %v2159
    %v2916 = vpack.c.b16 %v2166, %v2160
    %v2917 = vpack.c.b16 %v2167, %v2161
    %v2918 = vpack.c.b16 %v2168, %v2162
    %v2919 = vpack.c.b16 %v2169, %v2163
    %v2920 = vpack.c.b16 %v2176, %v2170
    %v2921 = vpack.c.b16 %v2177, %v2171
    %v2922 = vpack.c.b16 %v2178, %v2172
    %v2923 = vpack.c.b16 %v2179, %v2173
    %v2924 = vpack.c.b16 %v2180, %v2174
    %v2925 = vpack.c.b16 %v2181, %v2175
    %v2926 = vpack.c.b16 %v2188, %v2182
    %v2927 = vpack.c.b16 %v2189, %v2183
    %v2928 = vpack.c.b16 %v2190, %v2184
    %v2929 = vpack.c.b16 %v2191, %v2185
    %v2930 = vpack.c.b16 %v2192, %v2186
    %v2931 = vpack.c.b16 %v2193, %v2187
    %v2932 = vpack.c.b16 %v2200, %v2194
    %v2933 = vpack.c.b16 %v2201, %v2195
    %v2934 = vpack.c.b16 %v2202, %v2196
    %v2935 = vpack.c.b16 %v2203, %v2197
    %v2936 = vpack.c.b16 %v2204, %v2198
    %v2937 = vpack.c.b16 %v2205, %v2199
    %v2938 = vpack.c.b16 %v2212, %v2206
    %v2939 = vpack.c.b16 %v2213, %v2207
    %v2940 = vpack.c.b16 %v2214, %v2208
    %v2941 = vpack.c.b16 %v2215, %v2209
    %v2942 = vpack.c.b16 %v2216, %v2210
    %v2943 = vpack.c.b16 %v2217, %v2211
    %v2944 = vpack.c.b16 %v2224, %v2218
    %v2945 = vpack.c.b16 %v2225, %v2219
    %v2946 = vpack.c.b16 %v2226, %v2220
    %v2947 = vpack.c.b16 %v2227, %v2221
    %v2948 = vpack.c.b16 %v2228, %v2222
    %v2949 = vpack.c.b16 %v2229, %v2223
    %v2950 = vpack.c.b16 %v2236, %v2230
    %v2951 = vpack.c.b16 %v2237, %v2231
    %v2952 = vpack.c.b16 %v2238, %v2232
    %v2953 = vpack.c.b16 %v2239, %v2233
    %v2954 = vpack.c.b16 %v2240, %v2234
    %v2955 = vpack.c.b16 %v2241, %v2235
    %v2956 = vpack.c.b16 %v2248, %v2242
    %v2957 = vpack.c.b16 %v2249, %v2243
    %v2958 = vpack.c.b16 %v2250, %v2244
    %v2959 = vpack.c.b16 %v2251, %v2245
    %v2960 = vpack.c.b16 %v2252, %v2246
    %v2961 = vpack.c.b16 %v2253, %v2247
    %v2962 = vpack.c.b16 %v2260, %v2254
    %v2963 = vpack.c.b16 %v2261, %v2255
    %v2964 = vpack.c.b16 %v2262, %v2256
    %v2965 = vpack.c.b16 %v2263, %v2257
    %v2966 = vpack.c.b16 %v2264, %v2258
    %v2967 = vpack.c.b16 %v2265, %v2259
    %v2968 = vpack.c.b16 %v2272, %v2266
    %v2969 = vpack.c.b16 %v2273, %v2267
    %v2970 = vpack.c.b16 %v2274, %v2268
    %v2971 = vpack.c.b16 %v2275, %v2269
    %v2972 = vpack.c.b16 %v2276, %v2270
    %v2973 = vpack.c.b16 %v2277, %v2271
    %v2974 = vpack.c.b16 %v2284, %v2278
    %v2975 = vpack.c.b16 %v2285, %v2279
    %v2976 = vpack.c.b16 %v2286, %v2280
    %v2977 = vpack.c.b16 %v2287, %v2281
    %v2978 = vpack.c.b16 %v2288, %v2282
    %v2979 = vpack.c.b16 %v2289, %v2283
    %v2980 = vpack.c.b16 %v2296, %v2290
    %v2981 = vpack.c.b16 %v2297, %v2291
    %v2982 = vpack.c.b16 %v2298, %v2292
    %v2983 = vpack.c.b16 %v2299, %v2293
    %v2984 = vpack.c.b16 %v2300, %v2294
    %v2985 = vpack.c.b16 %v2301, %v2295
    %v2986 = vpack.c.b16 %v2308, %v2302
    %v2987 = vpack.c.b16 %v2309, %v2303
    %v2988 = vpack.c.b16 %v2310, %v2304
    %v2989 = vpack.c.b16 %v2311, %v2305
    %v2990 = vpack.c.b16 %v2312, %v2306
    %v2991 = vpack.c.b16 %v2313, %v2307
    %v2992 = vpack.c.b16 %v2320, %v2314
    %v2993 = vpack.c.b16 %v2321, %v2315
    %v2994 = vpack.c.b16 %v2322, %v2316
    %v2995 = vpack.c.b16 %v2323, %v2317
    %v2996 = vpack.c.b16 %v2324, %v2318
    %v2997 = vpack.c.b16 %v2325, %v2319
    %v2998 = vpack.c.b16 %v2332, %v2326
    %v2999 = vpack.c.b16 %v2333, %v2327
    %v3000 = vpack.c.b16 %v2334, %v2328
    %v3001 = vpack.c.b16 %v2335, %v2329
    %v3002 = vpack.c.b16 %v2336, %v2330
    %v3003 = vpack.c.b16 %v2337, %v2331
    %v3004 = vpack.c.b16 %v2344, %v2338
    %v3005 = vpack.c.b16 %v2345, %v2339
    %v3006 = vpack.c.b16 %v2346, %v2340
    %v3007 = vpack.c.b16 %v2347, %v2341
    %v3008 = vpack.c.b16 %v2348, %v2342
    %v3009 = vpack.c.b16 %v2349, %v2343
    %v3010 = vpack.c.b16 %v2356, %v2350
    %v3011 = vpack.c.b16 %v2357, %v2351
    %v3012 = vpack.c.b16 %v2358, %v2352
    %v3013 = vpack.c.b16 %v2359, %v2353
    %v3014 = vpack.c.b16 %v2360, %v2354
    %v3015 = vpack.c.b16 %v2361, %v2355
    %v3016 = vpack.c.b16 %v2368, %v2362
    %v3017 = vpack.c.b16 %v2369, %v2363
    %v3018 = vpack.c.b16 %v2370, %v2364
    %v3019 = vpack.c.b16 %v2371, %v2365
    %v3020 = vpack.c.b16 %v2372, %v2366
    %v3021 = vpack.c.b16 %v2373, %v2367
    %v3022 = vpack.c.b16 %v2380, %v2374
    %v3023 = vpack.c.b16 %v2381, %v2375
    %v3024 = vpack.c.b16 %v2382, %v2376
    %v3025 = vpack.c.b16 %v2383, %v2377
    %v3026 = vpack.c.b16 %v2384, %v2378
    %v3027 = vpack.c.b16 %v2385, %v2379
    %v3028 = vpack.c.b16 %v2392, %v2386
    %v3029 = vpack.c.b16 %v2393, %v2387
    %v3030 = vpack.c.b16 %v2394, %v2388
    %v3031 = vpack.c.b16 %v2395, %v2389
    %v3032 = vpack.c.b16 %v2396, %v2390
    %v3033 = vpack.c.b16 %v2397, %v2391
    %v3034 = vpack.c.b16 %v2404, %v2398
    %v3035 = vpack.c.b16 %v2405, %v2399
    %v3036 = vpack.c.b16 %v2406, %v2400
    %v3037 = vpack.c.b16 %v2407, %v2401
    %v3038 = vpack.c.b16 %v2408, %v2402
    %v3039 = vpack.c.b16 %v2409, %v2403
    %v3040 = vpack.c.b16 %v2416, %v2410
    %v3041 = vpack.c.b16 %v2417, %v2411
    %v3042 = vpack.c.b16 %v2418, %v2412
    %v3043 = vpack.c.b16 %v2419, %v2413
    %v3044 = vpack.c.b16 %v2420, %v2414
    %v3045 = vpack.c.b16 %v2421, %v2415
    %v3046 = vpack.c.b16 %v2428, %v2422
    %v3047 = vpack.c.b16 %v2429, %v2423
    %v3048 = vpack.c.b16 %v2430, %v2424
    %v3049 = vpack.c.b16 %v2431, %v2425
    %v3050 = vpack.c.b16 %v2432, %v2426
    %v3051 = vpack.c.b16 %v2433, %v2427
    %v3052 = vpack.c.b16 %v2440, %v2434
    %v3053 = vpack.c.b16 %v2441, %v2435
    %v3054 = vpack.c.b16 %v2442, %v2436
    %v3055 = vpack.c.b16 %v2443, %v2437
    %v3056 = vpack.c.b16 %v2444, %v2438
    %v3057 = vpack.c.b16 %v2445, %v2439
    %v3058 = vpack.c.b16 %v2452, %v2446
    %v3059 = vpack.c.b16 %v2453, %v2447
    %v3060 = vpack.c.b16 %v2454, %v2448
    %v3061 = vpack.c.b16 %v2455, %v2449
    %v3062 = vpack.c.b16 %v2456, %v2450
    %v3063 = vpack.c.b16 %v2457, %v2451
    %v3064 = vpack.c.b16 %v2464, %v2458
    %v3065 = vpack.c.b16 %v2465, %v2459
    %v3066 = vpack.c.b16 %v2466, %v2460
    %v3067 = vpack.c.b16 %v2467, %v2461
    %v3068 = vpack.c.b16 %v2468, %v2462
    %v3069 = vpack.c.b16 %v2469, %v2463
    %v3070 = vpack.c.b16 %v2476, %v2470
    %v3071 = vpack.c.b16 %v2477, %v2471
    %v3072 = vpack.c.b16 %v2478, %v2472
    %v3073 = vpack.c.b16 %v2479, %v2473
    %v3074 = vpack.c.b16 %v2480, %v2474
    %v3075 = vpack.c.b16 %v2481, %v2475
    %v3076 = vpack.c.b16 %v2488, %v2482
    %v3077 = vpack.c.b16 %v2489, %v2483
    %v3078 = vpack.c.b16 %v2490, %v2484
    %v3079 = vpack.c.b16 %v2491, %v2485
    %v3080 = vpack.c.b16 %v2492, %v2486
    %v3081 = vpack.c.b16 %v2493, %v2487
    %v3082 = vpack.c.b16 %v2500, %v2494
    %v3083 = vpack.c.b16 %v2501, %v2495
    %v3084 = vpack.c.b16 %v2502, %v2496
    %v3085 = vpack.c.b16 %v2503, %v2497
    %v3086 = vpack.c.b16 %v2504, %v2498
    %v3087 = vpack.c.b16 %v2505, %v2499
    %v3088 = vpack.c.b16 %v2512, %v2506
    %v3089 = vpack.c.b16 %v2513, %v2507
    %v3090 = vpack.c.b16 %v2514, %v2508
    %v3091 = vpack.c.b16 %v2515, %v2509
    %v3092 = vpack.c.b16 %v2516, %v2510
    %v3093 = vpack.c.b16 %v2517, %v2511
    %3670 = vmatprep.subr.bf16.mxu0 %v2519
    %3671 = vmatpush1.bf16.msra.mxu0 %v2518
    %3672 = vmatprep.subr.bf16.mxu0 %v2525
    %3673 = vmatpush1.bf16.msra.mxu0 %v2524
    %3674 = vmatprep.subr.bf16.mxu0 %v2531
    %3675 = vmatpush1.bf16.msra.mxu0 %v2530
    %3676 = vmatprep.subr.bf16.mxu0 %v2537
    %3677 = vmatpush1.bf16.msra.mxu0 %v2536
    %3678 = vmatprep.subr.bf16.mxu0 %v2543
    %3679 = vmatpush1.bf16.msra.mxu0 %v2542
    %3680 = vmatprep.subr.bf16.mxu0 %v2549
    %3681 = vmatpush1.bf16.msra.mxu0 %v2548
    %3682 = vmatprep.subr.bf16.mxu0 %v2555
    %3683 = vmatpush1.bf16.msra.mxu0 %v2554
    %3684 = vmatprep.subr.bf16.mxu0 %v2561
    %3685 = vmatpush1.bf16.msra.mxu0 %v2560
    %3686 = vmatprep.subr.bf16.mxu0 %v2567
    %3687 = vmatpush1.bf16.msra.mxu0 %v2566
    %3688 = vmatprep.subr.bf16.mxu0 %v2573
    %3689 = vmatpush1.bf16.msra.mxu0 %v2572
    %3690 = vmatprep.subr.bf16.mxu0 %v2579
    %3691 = vmatpush1.bf16.msra.mxu0 %v2578
    %3692 = vmatprep.subr.bf16.mxu0 %v2585
    %3693 = vmatpush1.bf16.msra.mxu0 %v2584
    %3694 = vmatprep.subr.bf16.mxu0 %v2591
    %3695 = vmatpush1.bf16.msra.mxu0 %v2590
    %3696 = vmatprep.subr.bf16.mxu0 %v2597
    %3697 = vmatpush1.bf16.msra.mxu0 %v2596
    %3698 = vmatprep.subr.bf16.mxu0 %v2603
    %3699 = vmatpush1.bf16.msra.mxu0 %v2602
    %3700 = vmatprep.subr.bf16.mxu0 %v2609
    %3701 = vmatpush1.bf16.msra.mxu0 %v2608
    %3702 = vmatprep.mubr.bf16.mxu0 %v767
    %3703 = vmatmul.mubr.bf16.gmra.mrb[0].mxu0 %v766
    %v3704 = vpop.f32.mrb[0].mxu0
    %v3705 = vadd.f32 %v721, %v3704
    %v3706 = vpop.f32.mrb[0].mxu0
    %v3707 = vadd.f32 %v725, %v3706
    %v3708 = vpop.f32.mrb[0].mxu0
    %v3709 = vpop.f32.mrb[0].mxu0
    %3710 = vdwg.mxu0
    %3711 = vmatprep.subr.bf16.mxu0 %v2615
    %3712 = vmatpush1.bf16.msra.mxu0 %v2614
    %3713 = vmatprep.subr.bf16.mxu0 %v2621
    %3714 = vmatpush1.bf16.msra.mxu0 %v2620
    %3715 = vmatprep.subr.bf16.mxu0 %v2627
    %3716 = vmatpush1.bf16.msra.mxu0 %v2626
    %3717 = vmatprep.subr.bf16.mxu0 %v2633
    %3718 = vmatpush1.bf16.msra.mxu0 %v2632
    %3719 = vmatprep.subr.bf16.mxu0 %v2639
    %3720 = vmatpush1.bf16.msra.mxu0 %v2638
    %3721 = vmatprep.subr.bf16.mxu0 %v2645
    %3722 = vmatpush1.bf16.msra.mxu0 %v2644
    %3723 = vmatprep.subr.bf16.mxu0 %v2651
    %3724 = vmatpush1.bf16.msra.mxu0 %v2650
    %3725 = vmatprep.subr.bf16.mxu0 %v2657
    %3726 = vmatpush1.bf16.msra.mxu0 %v2656
    %3727 = vmatprep.subr.bf16.mxu0 %v2663
    %3728 = vmatpush1.bf16.msra.mxu0 %v2662
    %3729 = vmatprep.subr.bf16.mxu0 %v2669
    %3730 = vmatpush1.bf16.msra.mxu0 %v2668
    %3731 = vmatprep.subr.bf16.mxu0 %v2675
    %3732 = vmatpush1.bf16.msra.mxu0 %v2674
    %3733 = vmatprep.subr.bf16.mxu0 %v2681
    %3734 = vmatpush1.bf16.msra.mxu0 %v2680
    %3735 = vmatprep.subr.bf16.mxu0 %v2687
    %3736 = vmatpush1.bf16.msra.mxu0 %v2686
    %3737 = vmatprep.subr.bf16.mxu0 %v2693
    %3738 = vmatpush1.bf16.msra.mxu0 %v2692
    %3739 = vmatprep.subr.bf16.mxu0 %v2699
    %3740 = vmatpush1.bf16.msra.mxu0 %v2698
    %3741 = vmatprep.subr.bf16.mxu0 %v2705
    %3742 = vmatpush1.bf16.msra.mxu0 %v2704
    %3743 = vmatprep.mubr.bf16.mxu0 %v769
    %3744 = vmatmul.mubr.bf16.gmra.mrb[0].mxu0 %v768
    %v3745 = vpop.f32.mrb[0].mxu0
    %v3746 = vadd.f32 %v3705, %v3745
    %v3747 = vpop.f32.mrb[0].mxu0
    %v3748 = vadd.f32 %v3707, %v3747
    %v3749 = vpop.f32.mrb[0].mxu0
    %v3750 = vpop.f32.mrb[0].mxu0
    %3751 = vdwg.mxu0
    %3752 = vmatprep.subr.bf16.mxu0 %v2711
    %3753 = vmatpush1.bf16.msra.mxu0 %v2710
    %3754 = vmatprep.subr.bf16.mxu0 %v2717
    %3755 = vmatpush1.bf16.msra.mxu0 %v2716
    %3756 = vmatprep.subr.bf16.mxu0 %v2723
    %3757 = vmatpush1.bf16.msra.mxu0 %v2722
    %3758 = vmatprep.subr.bf16.mxu0 %v2729
    %3759 = vmatpush1.bf16.msra.mxu0 %v2728
    %3760 = vmatprep.subr.bf16.mxu0 %v2735
    %3761 = vmatpush1.bf16.msra.mxu0 %v2734
    %3762 = vmatprep.subr.bf16.mxu0 %v2741
    %3763 = vmatpush1.bf16.msra.mxu0 %v2740
    %3764 = vmatprep.subr.bf16.mxu0 %v2747
    %3765 = vmatpush1.bf16.msra.mxu0 %v2746
    %3766 = vmatprep.subr.bf16.mxu0 %v2753
    %3767 = vmatpush1.bf16.msra.mxu0 %v2752
    %3768 = vmatprep.subr.bf16.mxu0 %v2759
    %3769 = vmatpush1.bf16.msra.mxu0 %v2758
    %3770 = vmatprep.subr.bf16.mxu0 %v2765
    %3771 = vmatpush1.bf16.msra.mxu0 %v2764
    %3772 = vmatprep.subr.bf16.mxu0 %v2771
    %3773 = vmatpush1.bf16.msra.mxu0 %v2770
    %3774 = vmatprep.subr.bf16.mxu0 %v2777
    %3775 = vmatpush1.bf16.msra.mxu0 %v2776
    %3776 = vmatprep.subr.bf16.mxu0 %v2783
    %3777 = vmatpush1.bf16.msra.mxu0 %v2782
    %3778 = vmatprep.subr.bf16.mxu0 %v2789
    %3779 = vmatpush1.bf16.msra.mxu0 %v2788
    %3780 = vmatprep.subr.bf16.mxu0 %v2795
    %3781 = vmatpush1.bf16.msra.mxu0 %v2794
    %3782 = vmatprep.subr.bf16.mxu0 %v2801
    %3783 = vmatpush1.bf16.msra.mxu0 %v2800
    %3784 = vmatprep.mubr.bf16.mxu0 %v771
    %3785 = vmatmul.mubr.bf16.gmra.mrb[0].mxu0 %v770
    %v3786 = vpop.f32.mrb[0].mxu0
    %v3787 = vadd.f32 %v3746, %v3786
    %v3788 = vpop.f32.mrb[0].mxu0
    %v3789 = vadd.f32 %v3748, %v3788
    %v3790 = vpop.f32.mrb[0].mxu0
    %v3791 = vpop.f32.mrb[0].mxu0
    %3792 = vdwg.mxu0
    %3793 = vmatprep.subr.bf16.mxu0 %v2807
    %3794 = vmatpush1.bf16.msra.mxu0 %v2806
    %3795 = vmatprep.subr.bf16.mxu0 %v2813
    %3796 = vmatpush1.bf16.msra.mxu0 %v2812
    %3797 = vmatprep.subr.bf16.mxu0 %v2819
    %3798 = vmatpush1.bf16.msra.mxu0 %v2818
    %3799 = vmatprep.subr.bf16.mxu0 %v2825
    %3800 = vmatpush1.bf16.msra.mxu0 %v2824
    %3801 = vmatprep.subr.bf16.mxu0 %v2831
    %3802 = vmatpush1.bf16.msra.mxu0 %v2830
    %3803 = vmatprep.subr.bf16.mxu0 %v2837
    %3804 = vmatpush1.bf16.msra.mxu0 %v2836
    %3805 = vmatprep.subr.bf16.mxu0 %v2843
    %3806 = vmatpush1.bf16.msra.mxu0 %v2842
    %3807 = vmatprep.subr.bf16.mxu0 %v2849
    %3808 = vmatpush1.bf16.msra.mxu0 %v2848
    %3809 = vmatprep.subr.bf16.mxu0 %v2855
    %3810 = vmatpush1.bf16.msra.mxu0 %v2854
    %3811 = vmatprep.subr.bf16.mxu0 %v2861
    %3812 = vmatpush1.bf16.msra.mxu0 %v2860
    %3813 = vmatprep.subr.bf16.mxu0 %v2867
    %3814 = vmatpush1.bf16.msra.mxu0 %v2866
    %3815 = vmatprep.subr.bf16.mxu0 %v2873
    %3816 = vmatpush1.bf16.msra.mxu0 %v2872
    %3817 = vmatprep.subr.bf16.mxu0 %v2879
    %3818 = vmatpush1.bf16.msra.mxu0 %v2878
    %3819 = vmatprep.subr.bf16.mxu0 %v2885
    %3820 = vmatpush1.bf16.msra.mxu0 %v2884
    %3821 = vmatprep.subr.bf16.mxu0 %v2891
    %3822 = vmatpush1.bf16.msra.mxu0 %v2890
    %3823 = vmatprep.subr.bf16.mxu0 %v2897
    %3824 = vmatpush1.bf16.msra.mxu0 %v2896
    %3825 = vmatprep.mubr.bf16.mxu0 %v773
    %3826 = vmatmul.mubr.bf16.gmra.mrb[0].mxu0 %v772
    %v3827 = vpop.f32.mrb[0].mxu0
    %v3828 = vadd.f32 %v3787, %v3827
    %v3829 = vpop.f32.mrb[0].mxu0
    %v3830 = vadd.f32 %v3789, %v3829
    %v3831 = vpop.f32.mrb[0].mxu0
    %v3832 = vpop.f32.mrb[0].mxu0
    %3833 = vdwg.mxu0
    %3834 = vmatprep.subr.bf16.mxu0 %v2903
    %3835 = vmatpush1.bf16.msra.mxu0 %v2902
    %3836 = vmatprep.subr.bf16.mxu0 %v2909
    %3837 = vmatpush1.bf16.msra.mxu0 %v2908
    %3838 = vmatprep.subr.bf16.mxu0 %v2915
    %3839 = vmatpush1.bf16.msra.mxu0 %v2914
    %3840 = vmatprep.subr.bf16.mxu0 %v2921
    %3841 = vmatpush1.bf16.msra.mxu0 %v2920
    %3842 = vmatprep.subr.bf16.mxu0 %v2927
    %3843 = vmatpush1.bf16.msra.mxu0 %v2926
    %3844 = vmatprep.subr.bf16.mxu0 %v2933
    %3845 = vmatpush1.bf16.msra.mxu0 %v2932
    %3846 = vmatprep.subr.bf16.mxu0 %v2939
    %3847 = vmatpush1.bf16.msra.mxu0 %v2938
    %3848 = vmatprep.subr.bf16.mxu0 %v2945
    %3849 = vmatpush1.bf16.msra.mxu0 %v2944
    %3850 = vmatprep.subr.bf16.mxu0 %v2951
    %3851 = vmatpush1.bf16.msra.mxu0 %v2950
    %3852 = vmatprep.subr.bf16.mxu0 %v2957
    %3853 = vmatpush1.bf16.msra.mxu0 %v2956
    %3854 = vmatprep.subr.bf16.mxu0 %v2963
    %3855 = vmatpush1.bf16.msra.mxu0 %v2962
    %3856 = vmatprep.subr.bf16.mxu0 %v2969
    %3857 = vmatpush1.bf16.msra.mxu0 %v2968
    %3858 = vmatprep.subr.bf16.mxu0 %v2975
    %3859 = vmatpush1.bf16.msra.mxu0 %v2974
    %3860 = vmatprep.subr.bf16.mxu0 %v2981
    %3861 = vmatpush1.bf16.msra.mxu0 %v2980
    %3862 = vmatprep.subr.bf16.mxu0 %v2987
    %3863 = vmatpush1.bf16.msra.mxu0 %v2986
    %3864 = vmatprep.subr.bf16.mxu0 %v2993
    %3865 = vmatpush1.bf16.msra.mxu0 %v2992
    %3866 = vmatprep.mubr.bf16.mxu0 %v775
    %3867 = vmatmul.mubr.bf16.gmra.mrb[0].mxu0 %v774
    %v3868 = vpop.f32.mrb[0].mxu0
    %v3869 = vadd.f32 %v3828, %v3868
    %v3870 = vpop.f32.mrb[0].mxu0
    %v3871 = vadd.f32 %v3830, %v3870
    %v3872 = vpop.f32.mrb[0].mxu0
    %v3873 = vpop.f32.mrb[0].mxu0
    %3874 = vdwg.mxu0
    %3875 = vmatprep.subr.bf16.mxu0 %v2999
    %3876 = vmatpush1.bf16.msra.mxu0 %v2998
    %3877 = vmatprep.subr.bf16.mxu0 %v3005
    %3878 = vmatpush1.bf16.msra.mxu0 %v3004
    %3879 = vmatprep.subr.bf16.mxu0 %v3011
    %3880 = vmatpush1.bf16.msra.mxu0 %v3010
    %3881 = vmatprep.subr.bf16.mxu0 %v3017
    %3882 = vmatpush1.bf16.msra.mxu0 %v3016
    %3883 = vmatprep.subr.bf16.mxu0 %v3023
    %3884 = vmatpush1.bf16.msra.mxu0 %v3022
    %3885 = vmatprep.subr.bf16.mxu0 %v3029
    %3886 = vmatpush1.bf16.msra.mxu0 %v3028
    %3887 = vmatprep.subr.bf16.mxu0 %v3035
    %3888 = vmatpush1.bf16.msra.mxu0 %v3034
    %3889 = vmatprep.subr.bf16.mxu0 %v3041
    %3890 = vmatpush1.bf16.msra.mxu0 %v3040
    %3891 = vmatprep.subr.bf16.mxu0 %v3047
    %3892 = vmatpush1.bf16.msra.mxu0 %v3046
    %3893 = vmatprep.subr.bf16.mxu0 %v3053
    %3894 = vmatpush1.bf16.msra.mxu0 %v3052
    %3895 = vmatprep.subr.bf16.mxu0 %v3059
    %3896 = vmatpush1.bf16.msra.mxu0 %v3058
    %3897 = vmatprep.subr.bf16.mxu0 %v3065
    %3898 = vmatpush1.bf16.msra.mxu0 %v3064
    %3899 = vmatprep.subr.bf16.mxu0 %v3071
    %3900 = vmatpush1.bf16.msra.mxu0 %v3070
    %3901 = vmatprep.subr.bf16.mxu0 %v3077
    %3902 = vmatpush1.bf16.msra.mxu0 %v3076
    %3903 = vmatprep.subr.bf16.mxu0 %v3083
    %3904 = vmatpush1.bf16.msra.mxu0 %v3082
    %3905 = vmatprep.subr.bf16.mxu0 %v3089
    %3906 = vmatpush1.bf16.msra.mxu0 %v3088
    %3907 = vmatprep.mubr.bf16.mxu0 %v777
    %3908 = vmatmul.mubr.bf16.gmra.mrb[0].mxu0 %v776
    %v3909 = vpop.f32.mrb[0].mxu0
    %v3910 = vadd.f32 %v3869, %v3909
    %v3911 = vpop.f32.mrb[0].mxu0
    %v3912 = vadd.f32 %v3871, %v3911
    %v3913 = vpop.f32.mrb[0].mxu0
    %v3914 = vpop.f32.mrb[0].mxu0
    %3915 = vdwg.mxu0
    %3916 = vmatprep.subr.bf16.mxu0 %v2521
    %3917 = vmatpush1.bf16.msra.mxu0 %v2520
    %3918 = vmatprep.subr.bf16.mxu0 %v2527
    %3919 = vmatpush1.bf16.msra.mxu0 %v2526
    %3920 = vmatprep.subr.bf16.mxu0 %v2533
    %3921 = vmatpush1.bf16.msra.mxu0 %v2532
    %3922 = vmatprep.subr.bf16.mxu0 %v2539
    %3923 = vmatpush1.bf16.msra.mxu0 %v2538
    %3924 = vmatprep.subr.bf16.mxu0 %v2545
    %3925 = vmatpush1.bf16.msra.mxu0 %v2544
    %3926 = vmatprep.subr.bf16.mxu0 %v2551
    %3927 = vmatpush1.bf16.msra.mxu0 %v2550
    %3928 = vmatprep.subr.bf16.mxu0 %v2557
    %3929 = vmatpush1.bf16.msra.mxu0 %v2556
    %3930 = vmatprep.subr.bf16.mxu0 %v2563
    %3931 = vmatpush1.bf16.msra.mxu0 %v2562
    %3932 = vmatprep.subr.bf16.mxu0 %v2569
    %3933 = vmatpush1.bf16.msra.mxu0 %v2568
    %3934 = vmatprep.subr.bf16.mxu0 %v2575
    %3935 = vmatpush1.bf16.msra.mxu0 %v2574
    %3936 = vmatprep.subr.bf16.mxu0 %v2581
    %3937 = vmatpush1.bf16.msra.mxu0 %v2580
    %3938 = vmatprep.subr.bf16.mxu0 %v2587
    %3939 = vmatpush1.bf16.msra.mxu0 %v2586
    %3940 = vmatprep.subr.bf16.mxu0 %v2593
    %3941 = vmatpush1.bf16.msra.mxu0 %v2592
    %3942 = vmatprep.subr.bf16.mxu0 %v2599
    %3943 = vmatpush1.bf16.msra.mxu0 %v2598
    %3944 = vmatprep.subr.bf16.mxu0 %v2605
    %3945 = vmatpush1.bf16.msra.mxu0 %v2604
    %3946 = vmatprep.subr.bf16.mxu0 %v2611
    %3947 = vmatpush1.bf16.msra.mxu0 %v2610
    %3948 = vmatprep.mubr.bf16.mxu0 %v767
    %3949 = vmatmul.mubr.bf16.gmra.mrb[0].mxu0 %v766
    %v3950 = vpop.f32.mrb[0].mxu0
    %v3951 = vadd.f32 %v729, %v3950
    %v3952 = vpop.f32.mrb[0].mxu0
    %v3953 = vadd.f32 %v733, %v3952
    %v3954 = vpop.f32.mrb[0].mxu0
    %v3955 = vpop.f32.mrb[0].mxu0
    %3956 = vdwg.mxu0
    %3957 = vmatprep.subr.bf16.mxu0 %v2617
    %3958 = vmatpush1.bf16.msra.mxu0 %v2616
    %3959 = vmatprep.subr.bf16.mxu0 %v2623
    %3960 = vmatpush1.bf16.msra.mxu0 %v2622
    %3961 = vmatprep.subr.bf16.mxu0 %v2629
    %3962 = vmatpush1.bf16.msra.mxu0 %v2628
    %3963 = vmatprep.subr.bf16.mxu0 %v2635
    %3964 = vmatpush1.bf16.msra.mxu0 %v2634
    %3965 = vmatprep.subr.bf16.mxu0 %v2641
    %3966 = vmatpush1.bf16.msra.mxu0 %v2640
    %3967 = vmatprep.subr.bf16.mxu0 %v2647
    %3968 = vmatpush1.bf16.msra.mxu0 %v2646
    %3969 = vmatprep.subr.bf16.mxu0 %v2653
    %3970 = vmatpush1.bf16.msra.mxu0 %v2652
    %3971 = vmatprep.subr.bf16.mxu0 %v2659
    %3972 = vmatpush1.bf16.msra.mxu0 %v2658
    %3973 = vmatprep.subr.bf16.mxu0 %v2665
    %3974 = vmatpush1.bf16.msra.mxu0 %v2664
    %3975 = vmatprep.subr.bf16.mxu0 %v2671
    %3976 = vmatpush1.bf16.msra.mxu0 %v2670
    %3977 = vmatprep.subr.bf16.mxu0 %v2677
    %3978 = vmatpush1.bf16.msra.mxu0 %v2676
    %3979 = vmatprep.subr.bf16.mxu0 %v2683
    %3980 = vmatpush1.bf16.msra.mxu0 %v2682
    %3981 = vmatprep.subr.bf16.mxu0 %v2689
    %3982 = vmatpush1.bf16.msra.mxu0 %v2688
    %3983 = vmatprep.subr.bf16.mxu0 %v2695
    %3984 = vmatpush1.bf16.msra.mxu0 %v2694
    %3985 = vmatprep.subr.bf16.mxu0 %v2701
    %3986 = vmatpush1.bf16.msra.mxu0 %v2700
    %3987 = vmatprep.subr.bf16.mxu0 %v2707
    %3988 = vmatpush1.bf16.msra.mxu0 %v2706
    %3989 = vmatprep.mubr.bf16.mxu0 %v769
    %3990 = vmatmul.mubr.bf16.gmra.mrb[0].mxu0 %v768
    %v3991 = vpop.f32.mrb[0].mxu0
    %v3992 = vadd.f32 %v3951, %v3991
    %v3993 = vpop.f32.mrb[0].mxu0
    %v3994 = vadd.f32 %v3953, %v3993
    %v3995 = vpop.f32.mrb[0].mxu0
    %v3996 = vpop.f32.mrb[0].mxu0
    %3997 = vdwg.mxu0
    %3998 = vmatprep.subr.bf16.mxu0 %v2713
    %3999 = vmatpush1.bf16.msra.mxu0 %v2712
    %4000 = vmatprep.subr.bf16.mxu0 %v2719
    %4001 = vmatpush1.bf16.msra.mxu0 %v2718
    %4002 = vmatprep.subr.bf16.mxu0 %v2725
    %4003 = vmatpush1.bf16.msra.mxu0 %v2724
    %4004 = vmatprep.subr.bf16.mxu0 %v2731
    %4005 = vmatpush1.bf16.msra.mxu0 %v2730
    %4006 = vmatprep.subr.bf16.mxu0 %v2737
    %4007 = vmatpush1.bf16.msra.mxu0 %v2736
    %4008 = vmatprep.subr.bf16.mxu0 %v2743
    %4009 = vmatpush1.bf16.msra.mxu0 %v2742
    %4010 = vmatprep.subr.bf16.mxu0 %v2749
    %4011 = vmatpush1.bf16.msra.mxu0 %v2748
    %4012 = vmatprep.subr.bf16.mxu0 %v2755
    %4013 = vmatpush1.bf16.msra.mxu0 %v2754
    %4014 = vmatprep.subr.bf16.mxu0 %v2761
    %4015 = vmatpush1.bf16.msra.mxu0 %v2760
    %4016 = vmatprep.subr.bf16.mxu0 %v2767
    %4017 = vmatpush1.bf16.msra.mxu0 %v2766
    %4018 = vmatprep.subr.bf16.mxu0 %v2773
    %4019 = vmatpush1.bf16.msra.mxu0 %v2772
    %4020 = vmatprep.subr.bf16.mxu0 %v2779
    %4021 = vmatpush1.bf16.msra.mxu0 %v2778
    %4022 = vmatprep.subr.bf16.mxu0 %v2785
    %4023 = vmatpush1.bf16.msra.mxu0 %v2784
    %4024 = vmatprep.subr.bf16.mxu0 %v2791
    %4025 = vmatpush1.bf16.msra.mxu0 %v2790
    %4026 = vmatprep.subr.bf16.mxu0 %v2797
    %4027 = vmatpush1.bf16.msra.mxu0 %v2796
    %4028 = vmatprep.subr.bf16.mxu0 %v2803
    %4029 = vmatpush1.bf16.msra.mxu0 %v2802
    %4030 = vmatprep.mubr.bf16.mxu0 %v771
    %4031 = vmatmul.mubr.bf16.gmra.mrb[0].mxu0 %v770
    %v4032 = vpop.f32.mrb[0].mxu0
    %v4033 = vadd.f32 %v3992, %v4032
    %v4034 = vpop.f32.mrb[0].mxu0
    %v4035 = vadd.f32 %v3994, %v4034
    %v4036 = vpop.f32.mrb[0].mxu0
    %v4037 = vpop.f32.mrb[0].mxu0
    %4038 = vdwg.mxu0
    %4039 = vmatprep.subr.bf16.mxu0 %v2809
    %4040 = vmatpush1.bf16.msra.mxu0 %v2808
    %4041 = vmatprep.subr.bf16.mxu0 %v2815
    %4042 = vmatpush1.bf16.msra.mxu0 %v2814
    %4043 = vmatprep.subr.bf16.mxu0 %v2821
    %4044 = vmatpush1.bf16.msra.mxu0 %v2820
    %4045 = vmatprep.subr.bf16.mxu0 %v2827
    %4046 = vmatpush1.bf16.msra.mxu0 %v2826
    %4047 = vmatprep.subr.bf16.mxu0 %v2833
    %4048 = vmatpush1.bf16.msra.mxu0 %v2832
    %4049 = vmatprep.subr.bf16.mxu0 %v2839
    %4050 = vmatpush1.bf16.msra.mxu0 %v2838
    %4051 = vmatprep.subr.bf16.mxu0 %v2845
    %4052 = vmatpush1.bf16.msra.mxu0 %v2844
    %4053 = vmatprep.subr.bf16.mxu0 %v2851
    %4054 = vmatpush1.bf16.msra.mxu0 %v2850
    %4055 = vmatprep.subr.bf16.mxu0 %v2857
    %4056 = vmatpush1.bf16.msra.mxu0 %v2856
    %4057 = vmatprep.subr.bf16.mxu0 %v2863
    %4058 = vmatpush1.bf16.msra.mxu0 %v2862
    %4059 = vmatprep.subr.bf16.mxu0 %v2869
    %4060 = vmatpush1.bf16.msra.mxu0 %v2868
    %4061 = vmatprep.subr.bf16.mxu0 %v2875
    %4062 = vmatpush1.bf16.msra.mxu0 %v2874
    %4063 = vmatprep.subr.bf16.mxu0 %v2881
    %4064 = vmatpush1.bf16.msra.mxu0 %v2880
    %4065 = vmatprep.subr.bf16.mxu0 %v2887
    %4066 = vmatpush1.bf16.msra.mxu0 %v2886
    %4067 = vmatprep.subr.bf16.mxu0 %v2893
    %4068 = vmatpush1.bf16.msra.mxu0 %v2892
    %4069 = vmatprep.subr.bf16.mxu0 %v2899
    %4070 = vmatpush1.bf16.msra.mxu0 %v2898
    %4071 = vmatprep.mubr.bf16.mxu0 %v773
    %4072 = vmatmul.mubr.bf16.gmra.mrb[0].mxu0 %v772
    %v4073 = vpop.f32.mrb[0].mxu0
    %v4074 = vadd.f32 %v4033, %v4073
    %v4075 = vpop.f32.mrb[0].mxu0
    %v4076 = vadd.f32 %v4035, %v4075
    %v4077 = vpop.f32.mrb[0].mxu0
    %v4078 = vpop.f32.mrb[0].mxu0
    %4079 = vdwg.mxu0
    %4080 = vmatprep.subr.bf16.mxu0 %v2905
    %4081 = vmatpush1.bf16.msra.mxu0 %v2904
    %4082 = vmatprep.subr.bf16.mxu0 %v2911
    %4083 = vmatpush1.bf16.msra.mxu0 %v2910
    %4084 = vmatprep.subr.bf16.mxu0 %v2917
    %4085 = vmatpush1.bf16.msra.mxu0 %v2916
    %4086 = vmatprep.subr.bf16.mxu0 %v2923
    %4087 = vmatpush1.bf16.msra.mxu0 %v2922
    %4088 = vmatprep.subr.bf16.mxu0 %v2929
    %4089 = vmatpush1.bf16.msra.mxu0 %v2928
    %4090 = vmatprep.subr.bf16.mxu0 %v2935
    %4091 = vmatpush1.bf16.msra.mxu0 %v2934
    %4092 = vmatprep.subr.bf16.mxu0 %v2941
    %4093 = vmatpush1.bf16.msra.mxu0 %v2940
    %4094 = vmatprep.subr.bf16.mxu0 %v2947
    %4095 = vmatpush1.bf16.msra.mxu0 %v2946
    %4096 = vmatprep.subr.bf16.mxu0 %v2953
    %4097 = vmatpush1.bf16.msra.mxu0 %v2952
    %4098 = vmatprep.subr.bf16.mxu0 %v2959
    %4099 = vmatpush1.bf16.msra.mxu0 %v2958
    %4100 = vmatprep.subr.bf16.mxu0 %v2965
    %4101 = vmatpush1.bf16.msra.mxu0 %v2964
    %4102 = vmatprep.subr.bf16.mxu0 %v2971
    %4103 = vmatpush1.bf16.msra.mxu0 %v2970
    %4104 = vmatprep.subr.bf16.mxu0 %v2977
    %4105 = vmatpush1.bf16.msra.mxu0 %v2976
    %4106 = vmatprep.subr.bf16.mxu0 %v2983
    %4107 = vmatpush1.bf16.msra.mxu0 %v2982
    %4108 = vmatprep.subr.bf16.mxu0 %v2989
    %4109 = vmatpush1.bf16.msra.mxu0 %v2988
    %4110 = vmatprep.subr.bf16.mxu0 %v2995
    %4111 = vmatpush1.bf16.msra.mxu0 %v2994
    %4112 = vmatprep.mubr.bf16.mxu0 %v775
    %4113 = vmatmul.mubr.bf16.gmra.mrb[0].mxu0 %v774
    %v4114 = vpop.f32.mrb[0].mxu0
    %v4115 = vadd.f32 %v4074, %v4114
    %v4116 = vpop.f32.mrb[0].mxu0
    %v4117 = vadd.f32 %v4076, %v4116
    %v4118 = vpop.f32.mrb[0].mxu0
    %v4119 = vpop.f32.mrb[0].mxu0
    %4120 = vdwg.mxu0
    %4121 = vmatprep.subr.bf16.mxu0 %v3001
    %4122 = vmatpush1.bf16.msra.mxu0 %v3000
    %4123 = vmatprep.subr.bf16.mxu0 %v3007
    %4124 = vmatpush1.bf16.msra.mxu0 %v3006
    %4125 = vmatprep.subr.bf16.mxu0 %v3013
    %4126 = vmatpush1.bf16.msra.mxu0 %v3012
    %4127 = vmatprep.subr.bf16.mxu0 %v3019
    %4128 = vmatpush1.bf16.msra.mxu0 %v3018
    %4129 = vmatprep.subr.bf16.mxu0 %v3025
    %4130 = vmatpush1.bf16.msra.mxu0 %v3024
    %4131 = vmatprep.subr.bf16.mxu0 %v3031
    %4132 = vmatpush1.bf16.msra.mxu0 %v3030
    %4133 = vmatprep.subr.bf16.mxu0 %v3037
    %4134 = vmatpush1.bf16.msra.mxu0 %v3036
    %4135 = vmatprep.subr.bf16.mxu0 %v3043
    %4136 = vmatpush1.bf16.msra.mxu0 %v3042
    %4137 = vmatprep.subr.bf16.mxu0 %v3049
    %4138 = vmatpush1.bf16.msra.mxu0 %v3048
    %4139 = vmatprep.subr.bf16.mxu0 %v3055
    %4140 = vmatpush1.bf16.msra.mxu0 %v3054
    %4141 = vmatprep.subr.bf16.mxu0 %v3061
    %4142 = vmatpush1.bf16.msra.mxu0 %v3060
    %4143 = vmatprep.subr.bf16.mxu0 %v3067
    %4144 = vmatpush1.bf16.msra.mxu0 %v3066
    %4145 = vmatprep.subr.bf16.mxu0 %v3073
    %4146 = vmatpush1.bf16.msra.mxu0 %v3072
    %4147 = vmatprep.subr.bf16.mxu0 %v3079
    %4148 = vmatpush1.bf16.msra.mxu0 %v3078
    %4149 = vmatprep.subr.bf16.mxu0 %v3085
    %4150 = vmatpush1.bf16.msra.mxu0 %v3084
    %4151 = vmatprep.subr.bf16.mxu0 %v3091
    %4152 = vmatpush1.bf16.msra.mxu0 %v3090
    %4153 = vmatprep.mubr.bf16.mxu0 %v777
    %4154 = vmatmul.mubr.bf16.gmra.mrb[0].mxu0 %v776
    %v4155 = vpop.f32.mrb[0].mxu0
    %v4156 = vadd.f32 %v4115, %v4155
    %v4157 = vpop.f32.mrb[0].mxu0
    %v4158 = vadd.f32 %v4117, %v4157
    %v4159 = vpop.f32.mrb[0].mxu0
    %v4160 = vpop.f32.mrb[0].mxu0
    %4161 = vdwg.mxu0
    %4162 = vmatprep.subr.bf16.mxu0 %v2523
    %4163 = vmatpush1.bf16.msra.mxu0 %v2522
    %4164 = vmatprep.subr.bf16.mxu0 %v2529
    %4165 = vmatpush1.bf16.msra.mxu0 %v2528
    %4166 = vmatprep.subr.bf16.mxu0 %v2535
    %4167 = vmatpush1.bf16.msra.mxu0 %v2534
    %4168 = vmatprep.subr.bf16.mxu0 %v2541
    %4169 = vmatpush1.bf16.msra.mxu0 %v2540
    %4170 = vmatprep.subr.bf16.mxu0 %v2547
    %4171 = vmatpush1.bf16.msra.mxu0 %v2546
    %4172 = vmatprep.subr.bf16.mxu0 %v2553
    %4173 = vmatpush1.bf16.msra.mxu0 %v2552
    %4174 = vmatprep.subr.bf16.mxu0 %v2559
    %4175 = vmatpush1.bf16.msra.mxu0 %v2558
    %4176 = vmatprep.subr.bf16.mxu0 %v2565
    %4177 = vmatpush1.bf16.msra.mxu0 %v2564
    %4178 = vmatprep.subr.bf16.mxu0 %v2571
    %4179 = vmatpush1.bf16.msra.mxu0 %v2570
    %4180 = vmatprep.subr.bf16.mxu0 %v2577
    %4181 = vmatpush1.bf16.msra.mxu0 %v2576
    %4182 = vmatprep.subr.bf16.mxu0 %v2583
    %4183 = vmatpush1.bf16.msra.mxu0 %v2582
    %4184 = vmatprep.subr.bf16.mxu0 %v2589
    %4185 = vmatpush1.bf16.msra.mxu0 %v2588
    %4186 = vmatprep.subr.bf16.mxu0 %v2595
    %4187 = vmatpush1.bf16.msra.mxu0 %v2594
    %4188 = vmatprep.subr.bf16.mxu0 %v2601
    %4189 = vmatpush1.bf16.msra.mxu0 %v2600
    %4190 = vmatprep.subr.bf16.mxu0 %v2607
    %4191 = vmatpush1.bf16.msra.mxu0 %v2606
    %4192 = vmatprep.subr.bf16.mxu0 %v2613
    %4193 = vmatpush1.bf16.msra.mxu0 %v2612
    %4194 = vmatprep.mubr.bf16.mxu0 %v767
    %4195 = vmatmul.mubr.bf16.gmra.mrb[0].mxu0 %v766
    %v4196 = vpop.f32.mrb[0].mxu0
    %v4197 = vadd.f32 %v737, %v4196
    %v4198 = vpop.f32.mrb[0].mxu0
    %v4199 = vadd.f32 %v741, %v4198
    %v4200 = vpop.f32.mrb[0].mxu0
    %v4201 = vpop.f32.mrb[0].mxu0
    %4202 = vdwg.mxu0
    %4203 = vmatprep.subr.bf16.mxu0 %v2619
    %4204 = vmatpush1.bf16.msra.mxu0 %v2618
    %4205 = vmatprep.subr.bf16.mxu0 %v2625
    %4206 = vmatpush1.bf16.msra.mxu0 %v2624
    %4207 = vmatprep.subr.bf16.mxu0 %v2631
    %4208 = vmatpush1.bf16.msra.mxu0 %v2630
    %4209 = vmatprep.subr.bf16.mxu0 %v2637
    %4210 = vmatpush1.bf16.msra.mxu0 %v2636
    %4211 = vmatprep.subr.bf16.mxu0 %v2643
    %4212 = vmatpush1.bf16.msra.mxu0 %v2642
    %4213 = vmatprep.subr.bf16.mxu0 %v2649
    %4214 = vmatpush1.bf16.msra.mxu0 %v2648
    %4215 = vmatprep.subr.bf16.mxu0 %v2655
    %4216 = vmatpush1.bf16.msra.mxu0 %v2654
    %4217 = vmatprep.subr.bf16.mxu0 %v2661
    %4218 = vmatpush1.bf16.msra.mxu0 %v2660
    %4219 = vmatprep.subr.bf16.mxu0 %v2667
    %4220 = vmatpush1.bf16.msra.mxu0 %v2666
    %4221 = vmatprep.subr.bf16.mxu0 %v2673
    %4222 = vmatpush1.bf16.msra.mxu0 %v2672
    %4223 = vmatprep.subr.bf16.mxu0 %v2679
    %4224 = vmatpush1.bf16.msra.mxu0 %v2678
    %4225 = vmatprep.subr.bf16.mxu0 %v2685
    %4226 = vmatpush1.bf16.msra.mxu0 %v2684
    %4227 = vmatprep.subr.bf16.mxu0 %v2691
    %4228 = vmatpush1.bf16.msra.mxu0 %v2690
    %4229 = vmatprep.subr.bf16.mxu0 %v2697
    %4230 = vmatpush1.bf16.msra.mxu0 %v2696
    %4231 = vmatprep.subr.bf16.mxu0 %v2703
    %4232 = vmatpush1.bf16.msra.mxu0 %v2702
    %4233 = vmatprep.subr.bf16.mxu0 %v2709
    %4234 = vmatpush1.bf16.msra.mxu0 %v2708
    %4235 = vmatprep.mubr.bf16.mxu0 %v769
    %4236 = vmatmul.mubr.bf16.gmra.mrb[0].mxu0 %v768
    %v4237 = vpop.f32.mrb[0].mxu0
    %v4238 = vadd.f32 %v4197, %v4237
    %v4239 = vpop.f32.mrb[0].mxu0
    %v4240 = vadd.f32 %v4199, %v4239
    %v4241 = vpop.f32.mrb[0].mxu0
    %v4242 = vpop.f32.mrb[0].mxu0
    %4243 = vdwg.mxu0
    %4244 = vmatprep.subr.bf16.mxu0 %v2715
    %4245 = vmatpush1.bf16.msra.mxu0 %v2714
    %4246 = vmatprep.subr.bf16.mxu0 %v2721
    %4247 = vmatpush1.bf16.msra.mxu0 %v2720
    %4248 = vmatprep.subr.bf16.mxu0 %v2727
    %4249 = vmatpush1.bf16.msra.mxu0 %v2726
    %4250 = vmatprep.subr.bf16.mxu0 %v2733
    %4251 = vmatpush1.bf16.msra.mxu0 %v2732
    %4252 = vmatprep.subr.bf16.mxu0 %v2739
    %4253 = vmatpush1.bf16.msra.mxu0 %v2738
    %4254 = vmatprep.subr.bf16.mxu0 %v2745
    %4255 = vmatpush1.bf16.msra.mxu0 %v2744
    %4256 = vmatprep.subr.bf16.mxu0 %v2751
    %4257 = vmatpush1.bf16.msra.mxu0 %v2750
    %4258 = vmatprep.subr.bf16.mxu0 %v2757
    %4259 = vmatpush1.bf16.msra.mxu0 %v2756
    %4260 = vmatprep.subr.bf16.mxu0 %v2763
    %4261 = vmatpush1.bf16.msra.mxu0 %v2762
    %4262 = vmatprep.subr.bf16.mxu0 %v2769
    %4263 = vmatpush1.bf16.msra.mxu0 %v2768
    %4264 = vmatprep.subr.bf16.mxu0 %v2775
    %4265 = vmatpush1.bf16.msra.mxu0 %v2774
    %4266 = vmatprep.subr.bf16.mxu0 %v2781
    %4267 = vmatpush1.bf16.msra.mxu0 %v2780
    %4268 = vmatprep.subr.bf16.mxu0 %v2787
    %4269 = vmatpush1.bf16.msra.mxu0 %v2786
    %4270 = vmatprep.subr.bf16.mxu0 %v2793
    %4271 = vmatpush1.bf16.msra.mxu0 %v2792
    %4272 = vmatprep.subr.bf16.mxu0 %v2799
    %4273 = vmatpush1.bf16.msra.mxu0 %v2798
    %4274 = vmatprep.subr.bf16.mxu0 %v2805
    %4275 = vmatpush1.bf16.msra.mxu0 %v2804
    %4276 = vmatprep.mubr.bf16.mxu0 %v771
    %4277 = vmatmul.mubr.bf16.gmra.mrb[0].mxu0 %v770
    %v4278 = vpop.f32.mrb[0].mxu0
    %v4279 = vadd.f32 %v4238, %v4278
    %v4280 = vpop.f32.mrb[0].mxu0
    %v4281 = vadd.f32 %v4240, %v4280
    %v4282 = vpop.f32.mrb[0].mxu0
    %v4283 = vpop.f32.mrb[0].mxu0
    %4284 = vdwg.mxu0
    %4285 = vmatprep.subr.bf16.mxu0 %v2811
    %4286 = vmatpush1.bf16.msra.mxu0 %v2810
    %4287 = vmatprep.subr.bf16.mxu0 %v2817
    %4288 = vmatpush1.bf16.msra.mxu0 %v2816
    %4289 = vmatprep.subr.bf16.mxu0 %v2823
    %4290 = vmatpush1.bf16.msra.mxu0 %v2822
    %4291 = vmatprep.subr.bf16.mxu0 %v2829
    %4292 = vmatpush1.bf16.msra.mxu0 %v2828
    %4293 = vmatprep.subr.bf16.mxu0 %v2835
    %4294 = vmatpush1.bf16.msra.mxu0 %v2834
    %4295 = vmatprep.subr.bf16.mxu0 %v2841
    %4296 = vmatpush1.bf16.msra.mxu0 %v2840
    %4297 = vmatprep.subr.bf16.mxu0 %v2847
    %4298 = vmatpush1.bf16.msra.mxu0 %v2846
    %4299 = vmatprep.subr.bf16.mxu0 %v2853
    %4300 = vmatpush1.bf16.msra.mxu0 %v2852
    %4301 = vmatprep.subr.bf16.mxu0 %v2859
    %4302 = vmatpush1.bf16.msra.mxu0 %v2858
    %4303 = vmatprep.subr.bf16.mxu0 %v2865
    %4304 = vmatpush1.bf16.msra.mxu0 %v2864
    %4305 = vmatprep.subr.bf16.mxu0 %v2871
    %4306 = vmatpush1.bf16.msra.mxu0 %v2870
    %4307 = vmatprep.subr.bf16.mxu0 %v2877
    %4308 = vmatpush1.bf16.msra.mxu0 %v2876
    %4309 = vmatprep.subr.bf16.mxu0 %v2883
    %4310 = vmatpush1.bf16.msra.mxu0 %v2882
    %4311 = vmatprep.subr.bf16.mxu0 %v2889
    %4312 = vmatpush1.bf16.msra.mxu0 %v2888
    %4313 = vmatprep.subr.bf16.mxu0 %v2895
    %4314 = vmatpush1.bf16.msra.mxu0 %v2894
    %4315 = vmatprep.subr.bf16.mxu0 %v2901
    %4316 = vmatpush1.bf16.msra.mxu0 %v2900
    %4317 = vmatprep.mubr.bf16.mxu0 %v773
    %4318 = vmatmul.mubr.bf16.gmra.mrb[0].mxu0 %v772
    %v4319 = vpop.f32.mrb[0].mxu0
    %v4320 = vadd.f32 %v4279, %v4319
    %v4321 = vpop.f32.mrb[0].mxu0
    %v4322 = vadd.f32 %v4281, %v4321
    %v4323 = vpop.f32.mrb[0].mxu0
    %v4324 = vpop.f32.mrb[0].mxu0
    %4325 = vdwg.mxu0
    %4326 = vmatprep.subr.bf16.mxu0 %v2907
    %4327 = vmatpush1.bf16.msra.mxu0 %v2906
    %4328 = vmatprep.subr.bf16.mxu0 %v2913
    %4329 = vmatpush1.bf16.msra.mxu0 %v2912
    %4330 = vmatprep.subr.bf16.mxu0 %v2919
    %4331 = vmatpush1.bf16.msra.mxu0 %v2918
    %4332 = vmatprep.subr.bf16.mxu0 %v2925
    %4333 = vmatpush1.bf16.msra.mxu0 %v2924
    %4334 = vmatprep.subr.bf16.mxu0 %v2931
    %4335 = vmatpush1.bf16.msra.mxu0 %v2930
    %4336 = vmatprep.subr.bf16.mxu0 %v2937
    %4337 = vmatpush1.bf16.msra.mxu0 %v2936
    %4338 = vmatprep.subr.bf16.mxu0 %v2943
    %4339 = vmatpush1.bf16.msra.mxu0 %v2942
    %4340 = vmatprep.subr.bf16.mxu0 %v2949
    %4341 = vmatpush1.bf16.msra.mxu0 %v2948
    %4342 = vmatprep.subr.bf16.mxu0 %v2955
    %4343 = vmatpush1.bf16.msra.mxu0 %v2954
    %4344 = vmatprep.subr.bf16.mxu0 %v2961
    %4345 = vmatpush1.bf16.msra.mxu0 %v2960
    %4346 = vmatprep.subr.bf16.mxu0 %v2967
    %4347 = vmatpush1.bf16.msra.mxu0 %v2966
    %4348 = vmatprep.subr.bf16.mxu0 %v2973
    %4349 = vmatpush1.bf16.msra.mxu0 %v2972
    %4350 = vmatprep.subr.bf16.mxu0 %v2979
    %4351 = vmatpush1.bf16.msra.mxu0 %v2978
    %4352 = vmatprep.subr.bf16.mxu0 %v2985
    %4353 = vmatpush1.bf16.msra.mxu0 %v2984
    %4354 = vmatprep.subr.bf16.mxu0 %v2991
    %4355 = vmatpush1.bf16.msra.mxu0 %v2990
    %4356 = vmatprep.subr.bf16.mxu0 %v2997
    %4357 = vmatpush1.bf16.msra.mxu0 %v2996
    %4358 = vmatprep.mubr.bf16.mxu0 %v775
    %4359 = vmatmul.mubr.bf16.gmra.mrb[0].mxu0 %v774
    %v4360 = vpop.f32.mrb[0].mxu0
    %v4361 = vadd.f32 %v4320, %v4360
    %v4362 = vpop.f32.mrb[0].mxu0
    %v4363 = vadd.f32 %v4322, %v4362
    %v4364 = vpop.f32.mrb[0].mxu0
    %v4365 = vpop.f32.mrb[0].mxu0
    %4366 = vdwg.mxu0
    %4367 = vmatprep.subr.bf16.mxu0 %v3003
    %4368 = vmatpush1.bf16.msra.mxu0 %v3002
    %4369 = vmatprep.subr.bf16.mxu0 %v3009
    %4370 = vmatpush1.bf16.msra.mxu0 %v3008
    %4371 = vmatprep.subr.bf16.mxu0 %v3015
    %4372 = vmatpush1.bf16.msra.mxu0 %v3014
    %4373 = vmatprep.subr.bf16.mxu0 %v3021
    %4374 = vmatpush1.bf16.msra.mxu0 %v3020
    %4375 = vmatprep.subr.bf16.mxu0 %v3027
    %4376 = vmatpush1.bf16.msra.mxu0 %v3026
    %4377 = vmatprep.subr.bf16.mxu0 %v3033
    %4378 = vmatpush1.bf16.msra.mxu0 %v3032
    %4379 = vmatprep.subr.bf16.mxu0 %v3039
    %4380 = vmatpush1.bf16.msra.mxu0 %v3038
    %4381 = vmatprep.subr.bf16.mxu0 %v3045
    %4382 = vmatpush1.bf16.msra.mxu0 %v3044
    %4383 = vmatprep.subr.bf16.mxu0 %v3051
    %4384 = vmatpush1.bf16.msra.mxu0 %v3050
    %4385 = vmatprep.subr.bf16.mxu0 %v3057
    %4386 = vmatpush1.bf16.msra.mxu0 %v3056
    %4387 = vmatprep.subr.bf16.mxu0 %v3063
    %4388 = vmatpush1.bf16.msra.mxu0 %v3062
    %4389 = vmatprep.subr.bf16.mxu0 %v3069
    %4390 = vmatpush1.bf16.msra.mxu0 %v3068
    %4391 = vmatprep.subr.bf16.mxu0 %v3075
    %4392 = vmatpush1.bf16.msra.mxu0 %v3074
    %4393 = vmatprep.subr.bf16.mxu0 %v3081
    %4394 = vmatpush1.bf16.msra.mxu0 %v3080
    %4395 = vmatprep.subr.bf16.mxu0 %v3087
    %4396 = vmatpush1.bf16.msra.mxu0 %v3086
    %4397 = vmatprep.subr.bf16.mxu0 %v3093
    %4398 = vmatpush1.bf16.msra.mxu0 %v3092
    %4399 = vmatprep.mubr.bf16.mxu0 %v777
    %4400 = vmatmul.mubr.bf16.gmra.mrb[0].mxu0 %v776
    %v4401 = vpop.f32.mrb[0].mxu0
    %v4402 = vadd.f32 %v4361, %v4401
    %v4403 = vpop.f32.mrb[0].mxu0
    %v4404 = vadd.f32 %v4363, %v4403
    %v4405 = vpop.f32.mrb[0].mxu0
    %v4406 = vpop.f32.mrb[0].mxu0
    %4407 = vdwg.mxu0
    %v4408 = vmax.f32 %v3910, 0.0
    %v4409 = vmax.f32 %v3912, 0.0
    %v4410 = vmax.f32 %v4156, 0.0
    %v4411 = vmax.f32 %v4158, 0.0
    %v4412 = vmax.f32 %v4402, 0.0
    %v4413 = vmax.f32 %v4404, 0.0
    %v4414 = vpack.c.bf16 %v4408, %v4408
    %v4415 = vpack.c.bf16 %v4409, %v4409
    %v4416 = vpack.c.bf16 %v4410, %v4410
    %v4417 = vpack.c.bf16 %v4411, %v4411
    %v4418 = vpack.c.bf16 %v4412, %v4412
    %v4419 = vpack.c.bf16 %v4413, %v4413
    %v4420 = vld [vmem:[#allocation7] sm:$0xff]
    %v4421 = vld [vmem:[#allocation7 + $0x8] sm:$0xff]
    %v4422 = vld [vmem:[#allocation7 + $0x10] sm:$0xff]
    %v4423 = vld [vmem:[#allocation7 + $0x18] sm:$0xff]
    %v4424 = vld [vmem:[#allocation7 + $0x20] sm:$0xff]
    %v4425 = vld [vmem:[#allocation7 + $0x28] sm:$0xff]
    %v4426 = vld [vmem:[#allocation7 + $0x30] sm:$0xff]
    %v4427 = vld [vmem:[#allocation7 + $0x38] sm:$0xff]
    %v4428 = vld [vmem:[#allocation7 + $0x40] sm:$0xff]
    %v4429 = vld [vmem:[#allocation7 + $0x48] sm:$0xff]
    %v4430 = vld [vmem:[#allocation7 + $0x50] sm:$0xff]
    %v4431 = vld [vmem:[#allocation7 + $0x58] sm:$0xff]
    %v4432 = vld [vmem:[#allocation7 + $0x60] sm:$0xff]
    %v4433 = vld [vmem:[#allocation7 + $0x68] sm:$0xff]
    %v4434 = vld [vmem:[#allocation7 + $0x70] sm:$0xff]
    %v4435 = vld [vmem:[#allocation7 + $0x78] sm:$0xff]
    %v4436 = vld [vmem:[#allocation7 + $0x80] sm:$0xff]
    %v4437 = vld [vmem:[#allocation7 + $0x88] sm:$0xff]
    %v4438 = vld [vmem:[#allocation7 + $0x90] sm:$0xff]
    %v4439 = vld [vmem:[#allocation7 + $0x98] sm:$0xff]
    %v4440 = vld [vmem:[#allocation7 + $0xa0] sm:$0xff]
    %v4441 = vld [vmem:[#allocation7 + $0xa8] sm:$0xff]
    %v4442 = vld [vmem:[#allocation7 + $0xb0] sm:$0xff]
    %v4443 = vld [vmem:[#allocation7 + $0xb8] sm:$0xff]
    %v4444 = vld [vmem:[#allocation7 + $0xc0] sm:$0xff]
    %v4445 = vld [vmem:[#allocation7 + $0xc8] sm:$0xff]
    %v4446 = vld [vmem:[#allocation7 + $0xd0] sm:$0xff]
    %v4447 = vld [vmem:[#allocation7 + $0xd8] sm:$0xff]
    %v4448 = vld [vmem:[#allocation7 + $0xe0] sm:$0xff]
    %v4449 = vld [vmem:[#allocation7 + $0xe8] sm:$0xff]
    %v4450 = vld [vmem:[#allocation7 + $0xf0] sm:$0xff]
    %v4451 = vld [vmem:[#allocation7 + $0xf8] sm:$0xff]
    %v4452 = vld [vmem:[#allocation7 + $0x100] sm:$0xff]
    %v4453 = vld [vmem:[#allocation7 + $0x108] sm:$0xff]
    %v4454 = vld [vmem:[#allocation7 + $0x110] sm:$0xff]
    %v4455 = vld [vmem:[#allocation7 + $0x118] sm:$0xff]
    %v4456 = vld [vmem:[#allocation7 + $0x120] sm:$0xff]
    %v4457 = vld [vmem:[#allocation7 + $0x128] sm:$0xff]
    %v4458 = vld [vmem:[#allocation7 + $0x130] sm:$0xff]
    %v4459 = vld [vmem:[#allocation7 + $0x138] sm:$0xff]
    %v4460 = vld [vmem:[#allocation7 + $0x140] sm:$0xff]
    %v4461 = vld [vmem:[#allocation7 + $0x148] sm:$0xff]
    %v4462 = vld [vmem:[#allocation7 + $0x150] sm:$0xff]
    %v4463 = vld [vmem:[#allocation7 + $0x158] sm:$0xff]
    %v4464 = vld [vmem:[#allocation7 + $0x160] sm:$0xff]
    %v4465 = vld [vmem:[#allocation7 + $0x168] sm:$0xff]
    %v4466 = vld [vmem:[#allocation7 + $0x170] sm:$0xff]
    %v4467 = vld [vmem:[#allocation7 + $0x178] sm:$0xff]
    %v4468 = vld [vmem:[#allocation7 + $0x180] sm:$0xff]
    %v4469 = vld [vmem:[#allocation7 + $0x188] sm:$0xff]
    %v4470 = vld [vmem:[#allocation7 + $0x190] sm:$0xff]
    %v4471 = vld [vmem:[#allocation7 + $0x198] sm:$0xff]
    %v4472 = vld [vmem:[#allocation7 + $0x1a0] sm:$0xff]
    %v4473 = vld [vmem:[#allocation7 + $0x1a8] sm:$0xff]
    %v4474 = vld [vmem:[#allocation7 + $0x1b0] sm:$0xff]
    %v4475 = vld [vmem:[#allocation7 + $0x1b8] sm:$0xff]
    %v4476 = vld [vmem:[#allocation7 + $0x1c0] sm:$0xff]
    %v4477 = vld [vmem:[#allocation7 + $0x1c8] sm:$0xff]
    %v4478 = vld [vmem:[#allocation7 + $0x1d0] sm:$0xff]
    %v4479 = vld [vmem:[#allocation7 + $0x1d8] sm:$0xff]
    %v4480 = vld [vmem:[#allocation7 + $0x1e0] sm:$0xff]
    %v4481 = vld [vmem:[#allocation7 + $0x1e8] sm:$0xff]
    %v4482 = vld [vmem:[#allocation7 + $0x1f0] sm:$0xff]
    %v4483 = vld [vmem:[#allocation7 + $0x1f8] sm:$0xff]
    %v4484 = vld [vmem:[#allocation7 + $0x200] sm:$0xff]
    %v4485 = vld [vmem:[#allocation7 + $0x208] sm:$0xff]
    %v4486 = vld [vmem:[#allocation7 + $0x210] sm:$0xff]
    %v4487 = vld [vmem:[#allocation7 + $0x218] sm:$0xff]
    %v4488 = vld [vmem:[#allocation7 + $0x220] sm:$0xff]
    %v4489 = vld [vmem:[#allocation7 + $0x228] sm:$0xff]
    %v4490 = vld [vmem:[#allocation7 + $0x230] sm:$0xff]
    %v4491 = vld [vmem:[#allocation7 + $0x238] sm:$0xff]
    %v4492 = vld [vmem:[#allocation7 + $0x240] sm:$0xff]
    %v4493 = vld [vmem:[#allocation7 + $0x248] sm:$0xff]
    %v4494 = vld [vmem:[#allocation7 + $0x250] sm:$0xff]
    %v4495 = vld [vmem:[#allocation7 + $0x258] sm:$0xff]
    %v4496 = vld [vmem:[#allocation7 + $0x260] sm:$0xff]
    %v4497 = vld [vmem:[#allocation7 + $0x268] sm:$0xff]
    %v4498 = vld [vmem:[#allocation7 + $0x270] sm:$0xff]
    %v4499 = vld [vmem:[#allocation7 + $0x278] sm:$0xff]
    %v4500 = vld [vmem:[#allocation7 + $0x280] sm:$0xff]
    %v4501 = vld [vmem:[#allocation7 + $0x288] sm:$0xff]
    %v4502 = vld [vmem:[#allocation7 + $0x290] sm:$0xff]
    %v4503 = vld [vmem:[#allocation7 + $0x298] sm:$0xff]
    %v4504 = vld [vmem:[#allocation7 + $0x2a0] sm:$0xff]
    %v4505 = vld [vmem:[#allocation7 + $0x2a8] sm:$0xff]
    %v4506 = vld [vmem:[#allocation7 + $0x2b0] sm:$0xff]
    %v4507 = vld [vmem:[#allocation7 + $0x2b8] sm:$0xff]
    %v4508 = vld [vmem:[#allocation7 + $0x2c0] sm:$0xff]
    %v4509 = vld [vmem:[#allocation7 + $0x2c8] sm:$0xff]
    %v4510 = vld [vmem:[#allocation7 + $0x2d0] sm:$0xff]
    %v4511 = vld [vmem:[#allocation7 + $0x2d8] sm:$0xff]
    %v4512 = vld [vmem:[#allocation7 + $0x2e0] sm:$0xff]
    %v4513 = vld [vmem:[#allocation7 + $0x2e8] sm:$0xff]
    %v4514 = vld [vmem:[#allocation7 + $0x2f0] sm:$0xff]
    %v4515 = vld [vmem:[#allocation7 + $0x2f8] sm:$0xff]
    %v4516 = vld [vmem:[#allocation7 + $0x300] sm:$0xff]
    %v4517 = vld [vmem:[#allocation7 + $0x308] sm:$0xff]
    %v4518 = vld [vmem:[#allocation7 + $0x310] sm:$0xff]
    %v4519 = vld [vmem:[#allocation7 + $0x318] sm:$0xff]
    %v4520 = vld [vmem:[#allocation7 + $0x320] sm:$0xff]
    %v4521 = vld [vmem:[#allocation7 + $0x328] sm:$0xff]
    %v4522 = vld [vmem:[#allocation7 + $0x330] sm:$0xff]
    %v4523 = vld [vmem:[#allocation7 + $0x338] sm:$0xff]
    %v4524 = vld [vmem:[#allocation7 + $0x340] sm:$0xff]
    %v4525 = vld [vmem:[#allocation7 + $0x348] sm:$0xff]
    %v4526 = vld [vmem:[#allocation7 + $0x350] sm:$0xff]
    %v4527 = vld [vmem:[#allocation7 + $0x358] sm:$0xff]
    %v4528 = vld [vmem:[#allocation7 + $0x360] sm:$0xff]
    %v4529 = vld [vmem:[#allocation7 + $0x368] sm:$0xff]
    %v4530 = vld [vmem:[#allocation7 + $0x370] sm:$0xff]
    %v4531 = vld [vmem:[#allocation7 + $0x378] sm:$0xff]
    %v4532 = vld [vmem:[#allocation7 + $0x380] sm:$0xff]
    %v4533 = vld [vmem:[#allocation7 + $0x388] sm:$0xff]
    %v4534 = vld [vmem:[#allocation7 + $0x390] sm:$0xff]
    %v4535 = vld [vmem:[#allocation7 + $0x398] sm:$0xff]
    %v4536 = vld [vmem:[#allocation7 + $0x3a0] sm:$0xff]
    %v4537 = vld [vmem:[#allocation7 + $0x3a8] sm:$0xff]
    %v4538 = vld [vmem:[#allocation7 + $0x3b0] sm:$0xff]
    %v4539 = vld [vmem:[#allocation7 + $0x3b8] sm:$0xff]
    %v4540 = vld [vmem:[#allocation7 + $0x3c0] sm:$0xff]
    %v4541 = vld [vmem:[#allocation7 + $0x3c8] sm:$0xff]
    %v4542 = vld [vmem:[#allocation7 + $0x3d0] sm:$0xff]
    %v4543 = vld [vmem:[#allocation7 + $0x3d8] sm:$0xff]
    %v4544 = vld [vmem:[#allocation7 + $0x3e0] sm:$0xff]
    %v4545 = vld [vmem:[#allocation7 + $0x3e8] sm:$0xff]
    %v4546 = vld [vmem:[#allocation7 + $0x3f0] sm:$0xff]
    %v4547 = vld [vmem:[#allocation7 + $0x3f8] sm:$0xff]
    %v4548 = vld [vmem:[#allocation7 + $0x400] sm:$0xff]
    %v4549 = vld [vmem:[#allocation7 + $0x408] sm:$0xff]
    %v4550 = vld [vmem:[#allocation7 + $0x410] sm:$0xff]
    %v4551 = vld [vmem:[#allocation7 + $0x418] sm:$0xff]
    %v4552 = vld [vmem:[#allocation7 + $0x420] sm:$0xff]
    %v4553 = vld [vmem:[#allocation7 + $0x428] sm:$0xff]
    %v4554 = vld [vmem:[#allocation7 + $0x430] sm:$0xff]
    %v4555 = vld [vmem:[#allocation7 + $0x438] sm:$0xff]
    %v4556 = vld [vmem:[#allocation7 + $0x440] sm:$0xff]
    %v4557 = vld [vmem:[#allocation7 + $0x448] sm:$0xff]
    %v4558 = vld [vmem:[#allocation7 + $0x450] sm:$0xff]
    %v4559 = vld [vmem:[#allocation7 + $0x458] sm:$0xff]
    %v4560 = vld [vmem:[#allocation7 + $0x460] sm:$0xff]
    %v4561 = vld [vmem:[#allocation7 + $0x468] sm:$0xff]
    %v4562 = vld [vmem:[#allocation7 + $0x470] sm:$0xff]
    %v4563 = vld [vmem:[#allocation7 + $0x478] sm:$0xff]
    %v4564 = vld [vmem:[#allocation7 + $0x480] sm:$0xff]
    %v4565 = vld [vmem:[#allocation7 + $0x488] sm:$0xff]
    %v4566 = vld [vmem:[#allocation7 + $0x490] sm:$0xff]
    %v4567 = vld [vmem:[#allocation7 + $0x498] sm:$0xff]
    %v4568 = vld [vmem:[#allocation7 + $0x4a0] sm:$0xff]
    %v4569 = vld [vmem:[#allocation7 + $0x4a8] sm:$0xff]
    %v4570 = vld [vmem:[#allocation7 + $0x4b0] sm:$0xff]
    %v4571 = vld [vmem:[#allocation7 + $0x4b8] sm:$0xff]
    %v4572 = vld [vmem:[#allocation7 + $0x4c0] sm:$0xff]
    %v4573 = vld [vmem:[#allocation7 + $0x4c8] sm:$0xff]
    %v4574 = vld [vmem:[#allocation7 + $0x4d0] sm:$0xff]
    %v4575 = vld [vmem:[#allocation7 + $0x4d8] sm:$0xff]
    %v4576 = vld [vmem:[#allocation7 + $0x4e0] sm:$0xff]
    %v4577 = vld [vmem:[#allocation7 + $0x4e8] sm:$0xff]
    %v4578 = vld [vmem:[#allocation7 + $0x4f0] sm:$0xff]
    %v4579 = vld [vmem:[#allocation7 + $0x4f8] sm:$0xff]
    %v4580 = vld [vmem:[#allocation7 + $0x500] sm:$0xff]
    %v4581 = vld [vmem:[#allocation7 + $0x508] sm:$0xff]
    %v4582 = vld [vmem:[#allocation7 + $0x510] sm:$0xff]
    %v4583 = vld [vmem:[#allocation7 + $0x518] sm:$0xff]
    %v4584 = vld [vmem:[#allocation7 + $0x520] sm:$0xff]
    %v4585 = vld [vmem:[#allocation7 + $0x528] sm:$0xff]
    %v4586 = vld [vmem:[#allocation7 + $0x530] sm:$0xff]
    %v4587 = vld [vmem:[#allocation7 + $0x538] sm:$0xff]
    %v4588 = vld [vmem:[#allocation7 + $0x540] sm:$0xff]
    %v4589 = vld [vmem:[#allocation7 + $0x548] sm:$0xff]
    %v4590 = vld [vmem:[#allocation7 + $0x550] sm:$0xff]
    %v4591 = vld [vmem:[#allocation7 + $0x558] sm:$0xff]
    %v4592 = vld [vmem:[#allocation7 + $0x560] sm:$0xff]
    %v4593 = vld [vmem:[#allocation7 + $0x568] sm:$0xff]
    %v4594 = vld [vmem:[#allocation7 + $0x570] sm:$0xff]
    %v4595 = vld [vmem:[#allocation7 + $0x578] sm:$0xff]
    %v4596 = vld [vmem:[#allocation7 + $0x580] sm:$0xff]
    %v4597 = vld [vmem:[#allocation7 + $0x588] sm:$0xff]
    %v4598 = vld [vmem:[#allocation7 + $0x590] sm:$0xff]
    %v4599 = vld [vmem:[#allocation7 + $0x598] sm:$0xff]
    %v4600 = vld [vmem:[#allocation7 + $0x5a0] sm:$0xff]
    %v4601 = vld [vmem:[#allocation7 + $0x5a8] sm:$0xff]
    %v4602 = vld [vmem:[#allocation7 + $0x5b0] sm:$0xff]
    %v4603 = vld [vmem:[#allocation7 + $0x5b8] sm:$0xff]
    %v4604 = vld [vmem:[#allocation7 + $0x5c0] sm:$0xff]
    %v4605 = vld [vmem:[#allocation7 + $0x5c8] sm:$0xff]
    %v4606 = vld [vmem:[#allocation7 + $0x5d0] sm:$0xff]
    %v4607 = vld [vmem:[#allocation7 + $0x5d8] sm:$0xff]
    %v4608 = vld [vmem:[#allocation7 + $0x5e0] sm:$0xff]
    %v4609 = vld [vmem:[#allocation7 + $0x5e8] sm:$0xff]
    %v4610 = vld [vmem:[#allocation7 + $0x5f0] sm:$0xff]
    %v4611 = vld [vmem:[#allocation7 + $0x5f8] sm:$0xff]
    %v4612 = vld [vmem:[#allocation8] sm:$0xf]
    %v4614 = vlaneseq
    %v4615 = vshrl.u32 %v4614, 7
    %v4616 = vsub.s32 0, %v4615
    %v4617 = vrot.slane %v4612, %v4616
    %v4618 = vlaneseq
    %v4619 = vshrl.u32 %v4618, 7
    %v4620 = vsub.s32 1, %v4619
    %v4621 = vrot.slane %v4612, %v4620
    %v4622 = vlaneseq
    %v4623 = vshrl.u32 %v4622, 7
    %v4624 = vsub.s32 2, %v4623
    %v4625 = vrot.slane %v4612, %v4624
    %v4626 = vlaneseq
    %v4627 = vshrl.u32 %v4626, 7
    %v4628 = vsub.s32 3, %v4627
    %v4629 = vrot.slane %v4612, %v4628
    %v4826 = vunpack.c.l.b16 %v4420
    %v4827 = vunpack.c.h.b16 %v4420
    %v4828 = vunpack.c.l.b16 %v4421
    %v4829 = vunpack.c.h.b16 %v4421
    %v4830 = vunpack.c.l.b16 %v4422
    %v4831 = vunpack.c.h.b16 %v4422
    %v4832 = vunpack.c.l.b16 %v4423
    %v4833 = vunpack.c.h.b16 %v4423
    %v4834 = vunpack.c.l.b16 %v4424
    %v4835 = vunpack.c.h.b16 %v4424
    %v4836 = vunpack.c.l.b16 %v4425
    %v4837 = vunpack.c.h.b16 %v4425
    %v4838 = vunpack.c.l.b16 %v4426
    %v4839 = vunpack.c.h.b16 %v4426
    %v4840 = vunpack.c.l.b16 %v4427
    %v4841 = vunpack.c.h.b16 %v4427
    %v4842 = vunpack.c.l.b16 %v4428
    %v4843 = vunpack.c.h.b16 %v4428
    %v4844 = vunpack.c.l.b16 %v4429
    %v4845 = vunpack.c.h.b16 %v4429
    %v4846 = vunpack.c.l.b16 %v4430
    %v4847 = vunpack.c.h.b16 %v4430
    %v4848 = vunpack.c.l.b16 %v4431
    %v4849 = vunpack.c.h.b16 %v4431
    %v4850 = vunpack.c.l.b16 %v4432
    %v4851 = vunpack.c.h.b16 %v4432
    %v4852 = vunpack.c.l.b16 %v4433
    %v4853 = vunpack.c.h.b16 %v4433
    %v4854 = vunpack.c.l.b16 %v4434
    %v4855 = vunpack.c.h.b16 %v4434
    %v4856 = vunpack.c.l.b16 %v4435
    %v4857 = vunpack.c.h.b16 %v4435
    %v4858 = vunpack.c.l.b16 %v4436
    %v4859 = vunpack.c.h.b16 %v4436
    %v4860 = vunpack.c.l.b16 %v4437
    %v4861 = vunpack.c.h.b16 %v4437
    %v4862 = vunpack.c.l.b16 %v4438
    %v4863 = vunpack.c.h.b16 %v4438
    %v4864 = vunpack.c.l.b16 %v4439
    %v4865 = vunpack.c.h.b16 %v4439
    %v4866 = vunpack.c.l.b16 %v4440
    %v4867 = vunpack.c.h.b16 %v4440
    %v4868 = vunpack.c.l.b16 %v4441
    %v4869 = vunpack.c.h.b16 %v4441
    %v4870 = vunpack.c.l.b16 %v4442
    %v4871 = vunpack.c.h.b16 %v4442
    %v4872 = vunpack.c.l.b16 %v4443
    %v4873 = vunpack.c.h.b16 %v4443
    %v4874 = vunpack.c.l.b16 %v4444
    %v4875 = vunpack.c.h.b16 %v4444
    %v4876 = vunpack.c.l.b16 %v4445
    %v4877 = vunpack.c.h.b16 %v4445
    %v4878 = vunpack.c.l.b16 %v4446
    %v4879 = vunpack.c.h.b16 %v4446
    %v4880 = vunpack.c.l.b16 %v4447
    %v4881 = vunpack.c.h.b16 %v4447
    %v4882 = vunpack.c.l.b16 %v4448
    %v4883 = vunpack.c.h.b16 %v4448
    %v4884 = vunpack.c.l.b16 %v4449
    %v4885 = vunpack.c.h.b16 %v4449
    %v4886 = vunpack.c.l.b16 %v4450
    %v4887 = vunpack.c.h.b16 %v4450
    %v4888 = vunpack.c.l.b16 %v4451
    %v4889 = vunpack.c.h.b16 %v4451
    %v4890 = vunpack.c.l.b16 %v4452
    %v4891 = vunpack.c.h.b16 %v4452
    %v4892 = vunpack.c.l.b16 %v4453
    %v4893 = vunpack.c.h.b16 %v4453
    %v4894 = vunpack.c.l.b16 %v4454
    %v4895 = vunpack.c.h.b16 %v4454
    %v4896 = vunpack.c.l.b16 %v4455
    %v4897 = vunpack.c.h.b16 %v4455
    %v4898 = vunpack.c.l.b16 %v4456
    %v4899 = vunpack.c.h.b16 %v4456
    %v4900 = vunpack.c.l.b16 %v4457
    %v4901 = vunpack.c.h.b16 %v4457
    %v4902 = vunpack.c.l.b16 %v4458
    %v4903 = vunpack.c.h.b16 %v4458
    %v4904 = vunpack.c.l.b16 %v4459
    %v4905 = vunpack.c.h.b16 %v4459
    %v4906 = vunpack.c.l.b16 %v4460
    %v4907 = vunpack.c.h.b16 %v4460
    %v4908 = vunpack.c.l.b16 %v4461
    %v4909 = vunpack.c.h.b16 %v4461
    %v4910 = vunpack.c.l.b16 %v4462
    %v4911 = vunpack.c.h.b16 %v4462
    %v4912 = vunpack.c.l.b16 %v4463
    %v4913 = vunpack.c.h.b16 %v4463
    %v4914 = vunpack.c.l.b16 %v4464
    %v4915 = vunpack.c.h.b16 %v4464
    %v4916 = vunpack.c.l.b16 %v4465
    %v4917 = vunpack.c.h.b16 %v4465
    %v4918 = vunpack.c.l.b16 %v4466
    %v4919 = vunpack.c.h.b16 %v4466
    %v4920 = vunpack.c.l.b16 %v4467
    %v4921 = vunpack.c.h.b16 %v4467
    %v4922 = vunpack.c.l.b16 %v4468
    %v4923 = vunpack.c.h.b16 %v4468
    %v4924 = vunpack.c.l.b16 %v4469
    %v4925 = vunpack.c.h.b16 %v4469
    %v4926 = vunpack.c.l.b16 %v4470
    %v4927 = vunpack.c.h.b16 %v4470
    %v4928 = vunpack.c.l.b16 %v4471
    %v4929 = vunpack.c.h.b16 %v4471
    %v4930 = vunpack.c.l.b16 %v4472
    %v4931 = vunpack.c.h.b16 %v4472
    %v4932 = vunpack.c.l.b16 %v4473
    %v4933 = vunpack.c.h.b16 %v4473
    %v4934 = vunpack.c.l.b16 %v4474
    %v4935 = vunpack.c.h.b16 %v4474
    %v4936 = vunpack.c.l.b16 %v4475
    %v4937 = vunpack.c.h.b16 %v4475
    %v4938 = vunpack.c.l.b16 %v4476
    %v4939 = vunpack.c.h.b16 %v4476
    %v4940 = vunpack.c.l.b16 %v4477
    %v4941 = vunpack.c.h.b16 %v4477
    %v4942 = vunpack.c.l.b16 %v4478
    %v4943 = vunpack.c.h.b16 %v4478
    %v4944 = vunpack.c.l.b16 %v4479
    %v4945 = vunpack.c.h.b16 %v4479
    %v4946 = vunpack.c.l.b16 %v4480
    %v4947 = vunpack.c.h.b16 %v4480
    %v4948 = vunpack.c.l.b16 %v4481
    %v4949 = vunpack.c.h.b16 %v4481
    %v4950 = vunpack.c.l.b16 %v4482
    %v4951 = vunpack.c.h.b16 %v4482
    %v4952 = vunpack.c.l.b16 %v4483
    %v4953 = vunpack.c.h.b16 %v4483
    %v4954 = vunpack.c.l.b16 %v4484
    %v4955 = vunpack.c.h.b16 %v4484
    %v4956 = vunpack.c.l.b16 %v4485
    %v4957 = vunpack.c.h.b16 %v4485
    %v4958 = vunpack.c.l.b16 %v4486
    %v4959 = vunpack.c.h.b16 %v4486
    %v4960 = vunpack.c.l.b16 %v4487
    %v4961 = vunpack.c.h.b16 %v4487
    %v4962 = vunpack.c.l.b16 %v4488
    %v4963 = vunpack.c.h.b16 %v4488
    %v4964 = vunpack.c.l.b16 %v4489
    %v4965 = vunpack.c.h.b16 %v4489
    %v4966 = vunpack.c.l.b16 %v4490
    %v4967 = vunpack.c.h.b16 %v4490
    %v4968 = vunpack.c.l.b16 %v4491
    %v4969 = vunpack.c.h.b16 %v4491
    %v4970 = vunpack.c.l.b16 %v4492
    %v4971 = vunpack.c.h.b16 %v4492
    %v4972 = vunpack.c.l.b16 %v4493
    %v4973 = vunpack.c.h.b16 %v4493
    %v4974 = vunpack.c.l.b16 %v4494
    %v4975 = vunpack.c.h.b16 %v4494
    %v4976 = vunpack.c.l.b16 %v4495
    %v4977 = vunpack.c.h.b16 %v4495
    %v4978 = vunpack.c.l.b16 %v4496
    %v4979 = vunpack.c.h.b16 %v4496
    %v4980 = vunpack.c.l.b16 %v4497
    %v4981 = vunpack.c.h.b16 %v4497
    %v4982 = vunpack.c.l.b16 %v4498
    %v4983 = vunpack.c.h.b16 %v4498
    %v4984 = vunpack.c.l.b16 %v4499
    %v4985 = vunpack.c.h.b16 %v4499
    %v4986 = vunpack.c.l.b16 %v4500
    %v4987 = vunpack.c.h.b16 %v4500
    %v4988 = vunpack.c.l.b16 %v4501
    %v4989 = vunpack.c.h.b16 %v4501
    %v4990 = vunpack.c.l.b16 %v4502
    %v4991 = vunpack.c.h.b16 %v4502
    %v4992 = vunpack.c.l.b16 %v4503
    %v4993 = vunpack.c.h.b16 %v4503
    %v4994 = vunpack.c.l.b16 %v4504
    %v4995 = vunpack.c.h.b16 %v4504
    %v4996 = vunpack.c.l.b16 %v4505
    %v4997 = vunpack.c.h.b16 %v4505
    %v4998 = vunpack.c.l.b16 %v4506
    %v4999 = vunpack.c.h.b16 %v4506
    %v5000 = vunpack.c.l.b16 %v4507
    %v5001 = vunpack.c.h.b16 %v4507
    %v5002 = vunpack.c.l.b16 %v4508
    %v5003 = vunpack.c.h.b16 %v4508
    %v5004 = vunpack.c.l.b16 %v4509
    %v5005 = vunpack.c.h.b16 %v4509
    %v5006 = vunpack.c.l.b16 %v4510
    %v5007 = vunpack.c.h.b16 %v4510
    %v5008 = vunpack.c.l.b16 %v4511
    %v5009 = vunpack.c.h.b16 %v4511
    %v5010 = vunpack.c.l.b16 %v4512
    %v5011 = vunpack.c.h.b16 %v4512
    %v5012 = vunpack.c.l.b16 %v4513
    %v5013 = vunpack.c.h.b16 %v4513
    %v5014 = vunpack.c.l.b16 %v4514
    %v5015 = vunpack.c.h.b16 %v4514
    %v5016 = vunpack.c.l.b16 %v4515
    %v5017 = vunpack.c.h.b16 %v4515
    %v5018 = vunpack.c.l.b16 %v4516
    %v5019 = vunpack.c.h.b16 %v4516
    %v5020 = vunpack.c.l.b16 %v4517
    %v5021 = vunpack.c.h.b16 %v4517
    %v5022 = vunpack.c.l.b16 %v4518
    %v5023 = vunpack.c.h.b16 %v4518
    %v5024 = vunpack.c.l.b16 %v4519
    %v5025 = vunpack.c.h.b16 %v4519
    %v5026 = vunpack.c.l.b16 %v4520
    %v5027 = vunpack.c.h.b16 %v4520
    %v5028 = vunpack.c.l.b16 %v4521
    %v5029 = vunpack.c.h.b16 %v4521
    %v5030 = vunpack.c.l.b16 %v4522
    %v5031 = vunpack.c.h.b16 %v4522
    %v5032 = vunpack.c.l.b16 %v4523
    %v5033 = vunpack.c.h.b16 %v4523
    %v5034 = vunpack.c.l.b16 %v4524
    %v5035 = vunpack.c.h.b16 %v4524
    %v5036 = vunpack.c.l.b16 %v4525
    %v5037 = vunpack.c.h.b16 %v4525
    %v5038 = vunpack.c.l.b16 %v4526
    %v5039 = vunpack.c.h.b16 %v4526
    %v5040 = vunpack.c.l.b16 %v4527
    %v5041 = vunpack.c.h.b16 %v4527
    %v5042 = vunpack.c.l.b16 %v4528
    %v5043 = vunpack.c.h.b16 %v4528
    %v5044 = vunpack.c.l.b16 %v4529
    %v5045 = vunpack.c.h.b16 %v4529
    %v5046 = vunpack.c.l.b16 %v4530
    %v5047 = vunpack.c.h.b16 %v4530
    %v5048 = vunpack.c.l.b16 %v4531
    %v5049 = vunpack.c.h.b16 %v4531
    %v5050 = vunpack.c.l.b16 %v4532
    %v5051 = vunpack.c.h.b16 %v4532
    %v5052 = vunpack.c.l.b16 %v4533
    %v5053 = vunpack.c.h.b16 %v4533
    %v5054 = vunpack.c.l.b16 %v4534
    %v5055 = vunpack.c.h.b16 %v4534
    %v5056 = vunpack.c.l.b16 %v4535
    %v5057 = vunpack.c.h.b16 %v4535
    %v5058 = vunpack.c.l.b16 %v4536
    %v5059 = vunpack.c.h.b16 %v4536
    %v5060 = vunpack.c.l.b16 %v4537
    %v5061 = vunpack.c.h.b16 %v4537
    %v5062 = vunpack.c.l.b16 %v4538
    %v5063 = vunpack.c.h.b16 %v4538
    %v5064 = vunpack.c.l.b16 %v4539
    %v5065 = vunpack.c.h.b16 %v4539
    %v5066 = vunpack.c.l.b16 %v4540
    %v5067 = vunpack.c.h.b16 %v4540
    %v5068 = vunpack.c.l.b16 %v4541
    %v5069 = vunpack.c.h.b16 %v4541
    %v5070 = vunpack.c.l.b16 %v4542
    %v5071 = vunpack.c.h.b16 %v4542
    %v5072 = vunpack.c.l.b16 %v4543
    %v5073 = vunpack.c.h.b16 %v4543
    %v5074 = vunpack.c.l.b16 %v4544
    %v5075 = vunpack.c.h.b16 %v4544
    %v5076 = vunpack.c.l.b16 %v4545
    %v5077 = vunpack.c.h.b16 %v4545
    %v5078 = vunpack.c.l.b16 %v4546
    %v5079 = vunpack.c.h.b16 %v4546
    %v5080 = vunpack.c.l.b16 %v4547
    %v5081 = vunpack.c.h.b16 %v4547
    %v5082 = vunpack.c.l.b16 %v4548
    %v5083 = vunpack.c.h.b16 %v4548
    %v5084 = vunpack.c.l.b16 %v4549
    %v5085 = vunpack.c.h.b16 %v4549
    %v5086 = vunpack.c.l.b16 %v4550
    %v5087 = vunpack.c.h.b16 %v4550
    %v5088 = vunpack.c.l.b16 %v4551
    %v5089 = vunpack.c.h.b16 %v4551
    %v5090 = vunpack.c.l.b16 %v4552
    %v5091 = vunpack.c.h.b16 %v4552
    %v5092 = vunpack.c.l.b16 %v4553
    %v5093 = vunpack.c.h.b16 %v4553
    %v5094 = vunpack.c.l.b16 %v4554
    %v5095 = vunpack.c.h.b16 %v4554
    %v5096 = vunpack.c.l.b16 %v4555
    %v5097 = vunpack.c.h.b16 %v4555
    %v5098 = vunpack.c.l.b16 %v4556
    %v5099 = vunpack.c.h.b16 %v4556
    %v5100 = vunpack.c.l.b16 %v4557
    %v5101 = vunpack.c.h.b16 %v4557
    %v5102 = vunpack.c.l.b16 %v4558
    %v5103 = vunpack.c.h.b16 %v4558
    %v5104 = vunpack.c.l.b16 %v4559
    %v5105 = vunpack.c.h.b16 %v4559
    %v5106 = vunpack.c.l.b16 %v4560
    %v5107 = vunpack.c.h.b16 %v4560
    %v5108 = vunpack.c.l.b16 %v4561
    %v5109 = vunpack.c.h.b16 %v4561
    %v5110 = vunpack.c.l.b16 %v4562
    %v5111 = vunpack.c.h.b16 %v4562
    %v5112 = vunpack.c.l.b16 %v4563
    %v5113 = vunpack.c.h.b16 %v4563
    %v5114 = vunpack.c.l.b16 %v4564
    %v5115 = vunpack.c.h.b16 %v4564
    %v5116 = vunpack.c.l.b16 %v4565
    %v5117 = vunpack.c.h.b16 %v4565
    %v5118 = vunpack.c.l.b16 %v4566
    %v5119 = vunpack.c.h.b16 %v4566
    %v5120 = vunpack.c.l.b16 %v4567
    %v5121 = vunpack.c.h.b16 %v4567
    %v5122 = vunpack.c.l.b16 %v4568
    %v5123 = vunpack.c.h.b16 %v4568
    %v5124 = vunpack.c.l.b16 %v4569
    %v5125 = vunpack.c.h.b16 %v4569
    %v5126 = vunpack.c.l.b16 %v4570
    %v5127 = vunpack.c.h.b16 %v4570
    %v5128 = vunpack.c.l.b16 %v4571
    %v5129 = vunpack.c.h.b16 %v4571
    %v5130 = vunpack.c.l.b16 %v4572
    %v5131 = vunpack.c.h.b16 %v4572
    %v5132 = vunpack.c.l.b16 %v4573
    %v5133 = vunpack.c.h.b16 %v4573
    %v5134 = vunpack.c.l.b16 %v4574
    %v5135 = vunpack.c.h.b16 %v4574
    %v5136 = vunpack.c.l.b16 %v4575
    %v5137 = vunpack.c.h.b16 %v4575
    %v5138 = vunpack.c.l.b16 %v4576
    %v5139 = vunpack.c.h.b16 %v4576
    %v5140 = vunpack.c.l.b16 %v4577
    %v5141 = vunpack.c.h.b16 %v4577
    %v5142 = vunpack.c.l.b16 %v4578
    %v5143 = vunpack.c.h.b16 %v4578
    %v5144 = vunpack.c.l.b16 %v4579
    %v5145 = vunpack.c.h.b16 %v4579
    %v5146 = vunpack.c.l.b16 %v4580
    %v5147 = vunpack.c.h.b16 %v4580
    %v5148 = vunpack.c.l.b16 %v4581
    %v5149 = vunpack.c.h.b16 %v4581
    %v5150 = vunpack.c.l.b16 %v4582
    %v5151 = vunpack.c.h.b16 %v4582
    %v5152 = vunpack.c.l.b16 %v4583
    %v5153 = vunpack.c.h.b16 %v4583
    %v5154 = vunpack.c.l.b16 %v4584
    %v5155 = vunpack.c.h.b16 %v4584
    %v5156 = vunpack.c.l.b16 %v4585
    %v5157 = vunpack.c.h.b16 %v4585
    %v5158 = vunpack.c.l.b16 %v4586
    %v5159 = vunpack.c.h.b16 %v4586
    %v5160 = vunpack.c.l.b16 %v4587
    %v5161 = vunpack.c.h.b16 %v4587
    %v5162 = vunpack.c.l.b16 %v4588
    %v5163 = vunpack.c.h.b16 %v4588
    %v5164 = vunpack.c.l.b16 %v4589
    %v5165 = vunpack.c.h.b16 %v4589
    %v5166 = vunpack.c.l.b16 %v4590
    %v5167 = vunpack.c.h.b16 %v4590
    %v5168 = vunpack.c.l.b16 %v4591
    %v5169 = vunpack.c.h.b16 %v4591
    %v5170 = vunpack.c.l.b16 %v4592
    %v5171 = vunpack.c.h.b16 %v4592
    %v5172 = vunpack.c.l.b16 %v4593
    %v5173 = vunpack.c.h.b16 %v4593
    %v5174 = vunpack.c.l.b16 %v4594
    %v5175 = vunpack.c.h.b16 %v4594
    %v5176 = vunpack.c.l.b16 %v4595
    %v5177 = vunpack.c.h.b16 %v4595
    %v5178 = vunpack.c.l.b16 %v4596
    %v5179 = vunpack.c.h.b16 %v4596
    %v5180 = vunpack.c.l.b16 %v4597
    %v5181 = vunpack.c.h.b16 %v4597
    %v5182 = vunpack.c.l.b16 %v4598
    %v5183 = vunpack.c.h.b16 %v4598
    %v5184 = vunpack.c.l.b16 %v4599
    %v5185 = vunpack.c.h.b16 %v4599
    %v5186 = vunpack.c.l.b16 %v4600
    %v5187 = vunpack.c.h.b16 %v4600
    %v5188 = vunpack.c.l.b16 %v4601
    %v5189 = vunpack.c.h.b16 %v4601
    %v5190 = vunpack.c.l.b16 %v4602
    %v5191 = vunpack.c.h.b16 %v4602
    %v5192 = vunpack.c.l.b16 %v4603
    %v5193 = vunpack.c.h.b16 %v4603
    %v5194 = vunpack.c.l.b16 %v4604
    %v5195 = vunpack.c.h.b16 %v4604
    %v5196 = vunpack.c.l.b16 %v4605
    %v5197 = vunpack.c.h.b16 %v4605
    %v5198 = vunpack.c.l.b16 %v4606
    %v5199 = vunpack.c.h.b16 %v4606
    %v5200 = vunpack.c.l.b16 %v4607
    %v5201 = vunpack.c.h.b16 %v4607
    %v5202 = vunpack.c.l.b16 %v4608
    %v5203 = vunpack.c.h.b16 %v4608
    %v5204 = vunpack.c.l.b16 %v4609
    %v5205 = vunpack.c.h.b16 %v4609
    %v5206 = vunpack.c.l.b16 %v4610
    %v5207 = vunpack.c.h.b16 %v4610
    %v5208 = vunpack.c.l.b16 %v4611
    %v5209 = vunpack.c.h.b16 %v4611
    %v5210 = vpack.c.b16 %v4830, %v4826
    %v5211 = vpack.c.b16 %v4831, %v4827
    %v5212 = vpack.c.b16 %v4832, %v4828
    %v5213 = vpack.c.b16 %v4833, %v4829
    %v5214 = vpack.c.b16 %v4838, %v4834
    %v5215 = vpack.c.b16 %v4839, %v4835
    %v5216 = vpack.c.b16 %v4840, %v4836
    %v5217 = vpack.c.b16 %v4841, %v4837
    %v5218 = vpack.c.b16 %v4846, %v4842
    %v5219 = vpack.c.b16 %v4847, %v4843
    %v5220 = vpack.c.b16 %v4848, %v4844
    %v5221 = vpack.c.b16 %v4849, %v4845
    %v5222 = vpack.c.b16 %v4854, %v4850
    %v5223 = vpack.c.b16 %v4855, %v4851
    %v5224 = vpack.c.b16 %v4856, %v4852
    %v5225 = vpack.c.b16 %v4857, %v4853
    %v5226 = vpack.c.b16 %v4862, %v4858
    %v5227 = vpack.c.b16 %v4863, %v4859
    %v5228 = vpack.c.b16 %v4864, %v4860
    %v5229 = vpack.c.b16 %v4865, %v4861
    %v5230 = vpack.c.b16 %v4870, %v4866
    %v5231 = vpack.c.b16 %v4871, %v4867
    %v5232 = vpack.c.b16 %v4872, %v4868
    %v5233 = vpack.c.b16 %v4873, %v4869
    %v5234 = vpack.c.b16 %v4878, %v4874
    %v5235 = vpack.c.b16 %v4879, %v4875
    %v5236 = vpack.c.b16 %v4880, %v4876
    %v5237 = vpack.c.b16 %v4881, %v4877
    %v5238 = vpack.c.b16 %v4886, %v4882
    %v5239 = vpack.c.b16 %v4887, %v4883
    %v5240 = vpack.c.b16 %v4888, %v4884
    %v5241 = vpack.c.b16 %v4889, %v4885
    %v5242 = vpack.c.b16 %v4894, %v4890
    %v5243 = vpack.c.b16 %v4895, %v4891
    %v5244 = vpack.c.b16 %v4896, %v4892
    %v5245 = vpack.c.b16 %v4897, %v4893
    %v5246 = vpack.c.b16 %v4902, %v4898
    %v5247 = vpack.c.b16 %v4903, %v4899
    %v5248 = vpack.c.b16 %v4904, %v4900
    %v5249 = vpack.c.b16 %v4905, %v4901
    %v5250 = vpack.c.b16 %v4910, %v4906
    %v5251 = vpack.c.b16 %v4911, %v4907
    %v5252 = vpack.c.b16 %v4912, %v4908
    %v5253 = vpack.c.b16 %v4913, %v4909
    %v5254 = vpack.c.b16 %v4918, %v4914
    %v5255 = vpack.c.b16 %v4919, %v4915
    %v5256 = vpack.c.b16 %v4920, %v4916
    %v5257 = vpack.c.b16 %v4921, %v4917
    %v5258 = vpack.c.b16 %v4926, %v4922
    %v5259 = vpack.c.b16 %v4927, %v4923
    %v5260 = vpack.c.b16 %v4928, %v4924
    %v5261 = vpack.c.b16 %v4929, %v4925
    %v5262 = vpack.c.b16 %v4934, %v4930
    %v5263 = vpack.c.b16 %v4935, %v4931
    %v5264 = vpack.c.b16 %v4936, %v4932
    %v5265 = vpack.c.b16 %v4937, %v4933
    %v5266 = vpack.c.b16 %v4942, %v4938
    %v5267 = vpack.c.b16 %v4943, %v4939
    %v5268 = vpack.c.b16 %v4944, %v4940
    %v5269 = vpack.c.b16 %v4945, %v4941
    %v5270 = vpack.c.b16 %v4950, %v4946
    %v5271 = vpack.c.b16 %v4951, %v4947
    %v5272 = vpack.c.b16 %v4952, %v4948
    %v5273 = vpack.c.b16 %v4953, %v4949
    %v5274 = vpack.c.b16 %v4958, %v4954
    %v5275 = vpack.c.b16 %v4959, %v4955
    %v5276 = vpack.c.b16 %v4960, %v4956
    %v5277 = vpack.c.b16 %v4961, %v4957
    %v5278 = vpack.c.b16 %v4966, %v4962
    %v5279 = vpack.c.b16 %v4967, %v4963
    %v5280 = vpack.c.b16 %v4968, %v4964
    %v5281 = vpack.c.b16 %v4969, %v4965
    %v5282 = vpack.c.b16 %v4974, %v4970
    %v5283 = vpack.c.b16 %v4975, %v4971
    %v5284 = vpack.c.b16 %v4976, %v4972
    %v5285 = vpack.c.b16 %v4977, %v4973
    %v5286 = vpack.c.b16 %v4982, %v4978
    %v5287 = vpack.c.b16 %v4983, %v4979
    %v5288 = vpack.c.b16 %v4984, %v4980
    %v5289 = vpack.c.b16 %v4985, %v4981
    %v5290 = vpack.c.b16 %v4990, %v4986
    %v5291 = vpack.c.b16 %v4991, %v4987
    %v5292 = vpack.c.b16 %v4992, %v4988
    %v5293 = vpack.c.b16 %v4993, %v4989
    %v5294 = vpack.c.b16 %v4998, %v4994
    %v5295 = vpack.c.b16 %v4999, %v4995
    %v5296 = vpack.c.b16 %v5000, %v4996
    %v5297 = vpack.c.b16 %v5001, %v4997
    %v5298 = vpack.c.b16 %v5006, %v5002
    %v5299 = vpack.c.b16 %v5007, %v5003
    %v5300 = vpack.c.b16 %v5008, %v5004
    %v5301 = vpack.c.b16 %v5009, %v5005
    %v5302 = vpack.c.b16 %v5014, %v5010
    %v5303 = vpack.c.b16 %v5015, %v5011
    %v5304 = vpack.c.b16 %v5016, %v5012
    %v5305 = vpack.c.b16 %v5017, %v5013
    %v5306 = vpack.c.b16 %v5022, %v5018
    %v5307 = vpack.c.b16 %v5023, %v5019
    %v5308 = vpack.c.b16 %v5024, %v5020
    %v5309 = vpack.c.b16 %v5025, %v5021
    %v5310 = vpack.c.b16 %v5030, %v5026
    %v5311 = vpack.c.b16 %v5031, %v5027
    %v5312 = vpack.c.b16 %v5032, %v5028
    %v5313 = vpack.c.b16 %v5033, %v5029
    %v5314 = vpack.c.b16 %v5038, %v5034
    %v5315 = vpack.c.b16 %v5039, %v5035
    %v5316 = vpack.c.b16 %v5040, %v5036
    %v5317 = vpack.c.b16 %v5041, %v5037
    %v5318 = vpack.c.b16 %v5046, %v5042
    %v5319 = vpack.c.b16 %v5047, %v5043
    %v5320 = vpack.c.b16 %v5048, %v5044
    %v5321 = vpack.c.b16 %v5049, %v5045
    %v5322 = vpack.c.b16 %v5054, %v5050
    %v5323 = vpack.c.b16 %v5055, %v5051
    %v5324 = vpack.c.b16 %v5056, %v5052
    %v5325 = vpack.c.b16 %v5057, %v5053
    %v5326 = vpack.c.b16 %v5062, %v5058
    %v5327 = vpack.c.b16 %v5063, %v5059
    %v5328 = vpack.c.b16 %v5064, %v5060
    %v5329 = vpack.c.b16 %v5065, %v5061
    %v5330 = vpack.c.b16 %v5070, %v5066
    %v5331 = vpack.c.b16 %v5071, %v5067
    %v5332 = vpack.c.b16 %v5072, %v5068
    %v5333 = vpack.c.b16 %v5073, %v5069
    %v5334 = vpack.c.b16 %v5078, %v5074
    %v5335 = vpack.c.b16 %v5079, %v5075
    %v5336 = vpack.c.b16 %v5080, %v5076
    %v5337 = vpack.c.b16 %v5081, %v5077
    %v5338 = vpack.c.b16 %v5086, %v5082
    %v5339 = vpack.c.b16 %v5087, %v5083
    %v5340 = vpack.c.b16 %v5088, %v5084
    %v5341 = vpack.c.b16 %v5089, %v5085
    %v5342 = vpack.c.b16 %v5094, %v5090
    %v5343 = vpack.c.b16 %v5095, %v5091
    %v5344 = vpack.c.b16 %v5096, %v5092
    %v5345 = vpack.c.b16 %v5097, %v5093
    %v5346 = vpack.c.b16 %v5102, %v5098
    %v5347 = vpack.c.b16 %v5103, %v5099
    %v5348 = vpack.c.b16 %v5104, %v5100
    %v5349 = vpack.c.b16 %v5105, %v5101
    %v5350 = vpack.c.b16 %v5110, %v5106
    %v5351 = vpack.c.b16 %v5111, %v5107
    %v5352 = vpack.c.b16 %v5112, %v5108
    %v5353 = vpack.c.b16 %v5113, %v5109
    %v5354 = vpack.c.b16 %v5118, %v5114
    %v5355 = vpack.c.b16 %v5119, %v5115
    %v5356 = vpack.c.b16 %v5120, %v5116
    %v5357 = vpack.c.b16 %v5121, %v5117
    %v5358 = vpack.c.b16 %v5126, %v5122
    %v5359 = vpack.c.b16 %v5127, %v5123
    %v5360 = vpack.c.b16 %v5128, %v5124
    %v5361 = vpack.c.b16 %v5129, %v5125
    %v5362 = vpack.c.b16 %v5134, %v5130
    %v5363 = vpack.c.b16 %v5135, %v5131
    %v5364 = vpack.c.b16 %v5136, %v5132
    %v5365 = vpack.c.b16 %v5137, %v5133
    %v5366 = vpack.c.b16 %v5142, %v5138
    %v5367 = vpack.c.b16 %v5143, %v5139
    %v5368 = vpack.c.b16 %v5144, %v5140
    %v5369 = vpack.c.b16 %v5145, %v5141
    %v5370 = vpack.c.b16 %v5150, %v5146
    %v5371 = vpack.c.b16 %v5151, %v5147
    %v5372 = vpack.c.b16 %v5152, %v5148
    %v5373 = vpack.c.b16 %v5153, %v5149
    %v5374 = vpack.c.b16 %v5158, %v5154
    %v5375 = vpack.c.b16 %v5159, %v5155
    %v5376 = vpack.c.b16 %v5160, %v5156
    %v5377 = vpack.c.b16 %v5161, %v5157
    %v5378 = vpack.c.b16 %v5166, %v5162
    %v5379 = vpack.c.b16 %v5167, %v5163
    %v5380 = vpack.c.b16 %v5168, %v5164
    %v5381 = vpack.c.b16 %v5169, %v5165
    %v5382 = vpack.c.b16 %v5174, %v5170
    %v5383 = vpack.c.b16 %v5175, %v5171
    %v5384 = vpack.c.b16 %v5176, %v5172
    %v5385 = vpack.c.b16 %v5177, %v5173
    %v5386 = vpack.c.b16 %v5182, %v5178
    %v5387 = vpack.c.b16 %v5183, %v5179
    %v5388 = vpack.c.b16 %v5184, %v5180
    %v5389 = vpack.c.b16 %v5185, %v5181
    %v5390 = vpack.c.b16 %v5190, %v5186
    %v5391 = vpack.c.b16 %v5191, %v5187
    %v5392 = vpack.c.b16 %v5192, %v5188
    %v5393 = vpack.c.b16 %v5193, %v5189
    %v5394 = vpack.c.b16 %v5198, %v5194
    %v5395 = vpack.c.b16 %v5199, %v5195
    %v5396 = vpack.c.b16 %v5200, %v5196
    %v5397 = vpack.c.b16 %v5201, %v5197
    %v5398 = vpack.c.b16 %v5206, %v5202
    %v5399 = vpack.c.b16 %v5207, %v5203
    %v5400 = vpack.c.b16 %v5208, %v5204
    %v5401 = vpack.c.b16 %v5209, %v5205
    %5594 = vmatprep.subr.bf16.mxu0 %v5211
    %5595 = vmatpush1.bf16.msra.mxu0 %v5210
    %5596 = vmatprep.subr.bf16.mxu0 %v5215
    %5597 = vmatpush1.bf16.msra.mxu0 %v5214
    %5598 = vmatprep.subr.bf16.mxu0 %v5219
    %5599 = vmatpush1.bf16.msra.mxu0 %v5218
    %5600 = vmatprep.subr.bf16.mxu0 %v5223
    %5601 = vmatpush1.bf16.msra.mxu0 %v5222
    %5602 = vmatprep.subr.bf16.mxu0 %v5227
    %5603 = vmatpush1.bf16.msra.mxu0 %v5226
    %5604 = vmatprep.subr.bf16.mxu0 %v5231
    %5605 = vmatpush1.bf16.msra.mxu0 %v5230
    %5606 = vmatprep.subr.bf16.mxu0 %v5235
    %5607 = vmatpush1.bf16.msra.mxu0 %v5234
    %5608 = vmatprep.subr.bf16.mxu0 %v5239
    %5609 = vmatpush1.bf16.msra.mxu0 %v5238
    %5610 = vmatprep.subr.bf16.mxu0 %v5243
    %5611 = vmatpush1.bf16.msra.mxu0 %v5242
    %5612 = vmatprep.subr.bf16.mxu0 %v5247
    %5613 = vmatpush1.bf16.msra.mxu0 %v5246
    %5614 = vmatprep.subr.bf16.mxu0 %v5251
    %5615 = vmatpush1.bf16.msra.mxu0 %v5250
    %5616 = vmatprep.subr.bf16.mxu0 %v5255
    %5617 = vmatpush1.bf16.msra.mxu0 %v5254
    %5618 = vmatprep.subr.bf16.mxu0 %v5259
    %5619 = vmatpush1.bf16.msra.mxu0 %v5258
    %5620 = vmatprep.subr.bf16.mxu0 %v5263
    %5621 = vmatpush1.bf16.msra.mxu0 %v5262
    %5622 = vmatprep.subr.bf16.mxu0 %v5267
    %5623 = vmatpush1.bf16.msra.mxu0 %v5266
    %5624 = vmatprep.subr.bf16.mxu0 %v5271
    %5625 = vmatpush1.bf16.msra.mxu0 %v5270
    %5626 = vmatprep.mubr.bf16.mxu0 %v4415
    %5627 = vmatmul.mubr.bf16.gmra.mrb[0].mxu0 %v4414
    %v5628 = vpop.f32.mrb[0].mxu0
    %v5629 = vadd.f32 %v4617, %v5628
    %v5630 = vpop.f32.mrb[0].mxu0
    %v5631 = vadd.f32 %v4621, %v5630
    %v5632 = vpop.f32.mrb[0].mxu0
    %v5633 = vpop.f32.mrb[0].mxu0
    %5634 = vdwg.mxu0
    %5635 = vmatprep.subr.bf16.mxu0 %v5275
    %5636 = vmatpush1.bf16.msra.mxu0 %v5274
    %5637 = vmatprep.subr.bf16.mxu0 %v5279
    %5638 = vmatpush1.bf16.msra.mxu0 %v5278
    %5639 = vmatprep.subr.bf16.mxu0 %v5283
    %5640 = vmatpush1.bf16.msra.mxu0 %v5282
    %5641 = vmatprep.subr.bf16.mxu0 %v5287
    %5642 = vmatpush1.bf16.msra.mxu0 %v5286
    %5643 = vmatprep.subr.bf16.mxu0 %v5291
    %5644 = vmatpush1.bf16.msra.mxu0 %v5290
    %5645 = vmatprep.subr.bf16.mxu0 %v5295
    %5646 = vmatpush1.bf16.msra.mxu0 %v5294
    %5647 = vmatprep.subr.bf16.mxu0 %v5299
    %5648 = vmatpush1.bf16.msra.mxu0 %v5298
    %5649 = vmatprep.subr.bf16.mxu0 %v5303
    %5650 = vmatpush1.bf16.msra.mxu0 %v5302
    %5651 = vmatprep.subr.bf16.mxu0 %v5307
    %5652 = vmatpush1.bf16.msra.mxu0 %v5306
    %5653 = vmatprep.subr.bf16.mxu0 %v5311
    %5654 = vmatpush1.bf16.msra.mxu0 %v5310
    %5655 = vmatprep.subr.bf16.mxu0 %v5315
    %5656 = vmatpush1.bf16.msra.mxu0 %v5314
    %5657 = vmatprep.subr.bf16.mxu0 %v5319
    %5658 = vmatpush1.bf16.msra.mxu0 %v5318
    %5659 = vmatprep.subr.bf16.mxu0 %v5323
    %5660 = vmatpush1.bf16.msra.mxu0 %v5322
    %5661 = vmatprep.subr.bf16.mxu0 %v5327
    %5662 = vmatpush1.bf16.msra.mxu0 %v5326
    %5663 = vmatprep.subr.bf16.mxu0 %v5331
    %5664 = vmatpush1.bf16.msra.mxu0 %v5330
    %5665 = vmatprep.subr.bf16.mxu0 %v5335
    %5666 = vmatpush1.bf16.msra.mxu0 %v5334
    %5667 = vmatprep.mubr.bf16.mxu0 %v4417
    %5668 = vmatmul.mubr.bf16.gmra.mrb[0].mxu0 %v4416
    %v5669 = vpop.f32.mrb[0].mxu0
    %v5670 = vadd.f32 %v5629, %v5669
    %v5671 = vpop.f32.mrb[0].mxu0
    %v5672 = vadd.f32 %v5631, %v5671
    %v5673 = vpop.f32.mrb[0].mxu0
    %v5674 = vpop.f32.mrb[0].mxu0
    %5675 = vdwg.mxu0
    %5676 = vmatprep.subr.bf16.mxu0 %v5339
    %5677 = vmatpush1.bf16.msra.mxu0 %v5338
    %5678 = vmatprep.subr.bf16.mxu0 %v5343
    %5679 = vmatpush1.bf16.msra.mxu0 %v5342
    %5680 = vmatprep.subr.bf16.mxu0 %v5347
    %5681 = vmatpush1.bf16.msra.mxu0 %v5346
    %5682 = vmatprep.subr.bf16.mxu0 %v5351
    %5683 = vmatpush1.bf16.msra.mxu0 %v5350
    %5684 = vmatprep.subr.bf16.mxu0 %v5355
    %5685 = vmatpush1.bf16.msra.mxu0 %v5354
    %5686 = vmatprep.subr.bf16.mxu0 %v5359
    %5687 = vmatpush1.bf16.msra.mxu0 %v5358
    %5688 = vmatprep.subr.bf16.mxu0 %v5363
    %5689 = vmatpush1.bf16.msra.mxu0 %v5362
    %5690 = vmatprep.subr.bf16.mxu0 %v5367
    %5691 = vmatpush1.bf16.msra.mxu0 %v5366
    %5692 = vmatprep.subr.bf16.mxu0 %v5371
    %5693 = vmatpush1.bf16.msra.mxu0 %v5370
    %5694 = vmatprep.subr.bf16.mxu0 %v5375
    %5695 = vmatpush1.bf16.msra.mxu0 %v5374
    %5696 = vmatprep.subr.bf16.mxu0 %v5379
    %5697 = vmatpush1.bf16.msra.mxu0 %v5378
    %5698 = vmatprep.subr.bf16.mxu0 %v5383
    %5699 = vmatpush1.bf16.msra.mxu0 %v5382
    %5700 = vmatprep.subr.bf16.mxu0 %v5387
    %5701 = vmatpush1.bf16.msra.mxu0 %v5386
    %5702 = vmatprep.subr.bf16.mxu0 %v5391
    %5703 = vmatpush1.bf16.msra.mxu0 %v5390
    %5704 = vmatprep.subr.bf16.mxu0 %v5395
    %5705 = vmatpush1.bf16.msra.mxu0 %v5394
    %5706 = vmatprep.subr.bf16.mxu0 %v5399
    %5707 = vmatpush1.bf16.msra.mxu0 %v5398
    %5708 = vmatprep.mubr.bf16.mxu0 %v4419
    %5709 = vmatmul.mubr.bf16.gmra.mrb[0].mxu0 %v4418
    %v5710 = vpop.f32.mrb[0].mxu0
    %v5711 = vadd.f32 %v5670, %v5710
    %v5712 = vpop.f32.mrb[0].mxu0
    %v5713 = vadd.f32 %v5672, %v5712
    %v5714 = vpop.f32.mrb[0].mxu0
    %v5715 = vpop.f32.mrb[0].mxu0
    %5716 = vdwg.mxu0
    %5717 = vmatprep.subr.bf16.mxu0 %v5213
    %5718 = vmatpush1.bf16.msra.mxu0 %v5212
    %5719 = vmatprep.subr.bf16.mxu0 %v5217
    %5720 = vmatpush1.bf16.msra.mxu0 %v5216
    %5721 = vmatprep.subr.bf16.mxu0 %v5221
    %5722 = vmatpush1.bf16.msra.mxu0 %v5220
    %5723 = vmatprep.subr.bf16.mxu0 %v5225
    %5724 = vmatpush1.bf16.msra.mxu0 %v5224
    %5725 = vmatprep.subr.bf16.mxu0 %v5229
    %5726 = vmatpush1.bf16.msra.mxu0 %v5228
    %5727 = vmatprep.subr.bf16.mxu0 %v5233
    %5728 = vmatpush1.bf16.msra.mxu0 %v5232
    %5729 = vmatprep.subr.bf16.mxu0 %v5237
    %5730 = vmatpush1.bf16.msra.mxu0 %v5236
    %5731 = vmatprep.subr.bf16.mxu0 %v5241
    %5732 = vmatpush1.bf16.msra.mxu0 %v5240
    %5733 = vmatprep.subr.bf16.mxu0 %v5245
    %5734 = vmatpush1.bf16.msra.mxu0 %v5244
    %5735 = vmatprep.subr.bf16.mxu0 %v5249
    %5736 = vmatpush1.bf16.msra.mxu0 %v5248
    %5737 = vmatprep.subr.bf16.mxu0 %v5253
    %5738 = vmatpush1.bf16.msra.mxu0 %v5252
    %5739 = vmatprep.subr.bf16.mxu0 %v5257
    %5740 = vmatpush1.bf16.msra.mxu0 %v5256
    %5741 = vmatprep.subr.bf16.mxu0 %v5261
    %5742 = vmatpush1.bf16.msra.mxu0 %v5260
    %5743 = vmatprep.subr.bf16.mxu0 %v5265
    %5744 = vmatpush1.bf16.msra.mxu0 %v5264
    %5745 = vmatprep.subr.bf16.mxu0 %v5269
    %5746 = vmatpush1.bf16.msra.mxu0 %v5268
    %5747 = vmatprep.subr.bf16.mxu0 %v5273
    %5748 = vmatpush1.bf16.msra.mxu0 %v5272
    %5749 = vmatprep.mubr.bf16.mxu0 %v4415
    %5750 = vmatmul.mubr.bf16.gmra.mrb[0].mxu0 %v4414
    %v5751 = vpop.f32.mrb[0].mxu0
    %v5752 = vadd.f32 %v4625, %v5751
    %v5753 = vpop.f32.mrb[0].mxu0
    %v5754 = vadd.f32 %v4629, %v5753
    %v5755 = vpop.f32.mrb[0].mxu0
    %v5756 = vpop.f32.mrb[0].mxu0
    %5757 = vdwg.mxu0
    %5758 = vmatprep.subr.bf16.mxu0 %v5277
    %5759 = vmatpush1.bf16.msra.mxu0 %v5276
    %5760 = vmatprep.subr.bf16.mxu0 %v5281
    %5761 = vmatpush1.bf16.msra.mxu0 %v5280
    %5762 = vmatprep.subr.bf16.mxu0 %v5285
    %5763 = vmatpush1.bf16.msra.mxu0 %v5284
    %5764 = vmatprep.subr.bf16.mxu0 %v5289
    %5765 = vmatpush1.bf16.msra.mxu0 %v5288
    %5766 = vmatprep.subr.bf16.mxu0 %v5293
    %5767 = vmatpush1.bf16.msra.mxu0 %v5292
    %5768 = vmatprep.subr.bf16.mxu0 %v5297
    %5769 = vmatpush1.bf16.msra.mxu0 %v5296
    %5770 = vmatprep.subr.bf16.mxu0 %v5301
    %5771 = vmatpush1.bf16.msra.mxu0 %v5300
    %5772 = vmatprep.subr.bf16.mxu0 %v5305
    %5773 = vmatpush1.bf16.msra.mxu0 %v5304
    %5774 = vmatprep.subr.bf16.mxu0 %v5309
    %5775 = vmatpush1.bf16.msra.mxu0 %v5308
    %5776 = vmatprep.subr.bf16.mxu0 %v5313
    %5777 = vmatpush1.bf16.msra.mxu0 %v5312
    %5778 = vmatprep.subr.bf16.mxu0 %v5317
    %5779 = vmatpush1.bf16.msra.mxu0 %v5316
    %5780 = vmatprep.subr.bf16.mxu0 %v5321
    %5781 = vmatpush1.bf16.msra.mxu0 %v5320
    %5782 = vmatprep.subr.bf16.mxu0 %v5325
    %5783 = vmatpush1.bf16.msra.mxu0 %v5324
    %5784 = vmatprep.subr.bf16.mxu0 %v5329
    %5785 = vmatpush1.bf16.msra.mxu0 %v5328
    %5786 = vmatprep.subr.bf16.mxu0 %v5333
    %5787 = vmatpush1.bf16.msra.mxu0 %v5332
    %5788 = vmatprep.subr.bf16.mxu0 %v5337
    %5789 = vmatpush1.bf16.msra.mxu0 %v5336
    %5790 = vmatprep.mubr.bf16.mxu0 %v4417
    %5791 = vmatmul.mubr.bf16.gmra.mrb[0].mxu0 %v4416
    %v5792 = vpop.f32.mrb[0].mxu0
    %v5793 = vadd.f32 %v5752, %v5792
    %v5794 = vpop.f32.mrb[0].mxu0
    %v5795 = vadd.f32 %v5754, %v5794
    %v5796 = vpop.f32.mrb[0].mxu0
    %v5797 = vpop.f32.mrb[0].mxu0
    %5798 = vdwg.mxu0
    %5799 = vmatprep.subr.bf16.mxu0 %v5341
    %5800 = vmatpush1.bf16.msra.mxu0 %v5340
    %5801 = vmatprep.subr.bf16.mxu0 %v5345
    %5802 = vmatpush1.bf16.msra.mxu0 %v5344
    %5803 = vmatprep.subr.bf16.mxu0 %v5349
    %5804 = vmatpush1.bf16.msra.mxu0 %v5348
    %5805 = vmatprep.subr.bf16.mxu0 %v5353
    %5806 = vmatpush1.bf16.msra.mxu0 %v5352
    %5807 = vmatprep.subr.bf16.mxu0 %v5357
    %5808 = vmatpush1.bf16.msra.mxu0 %v5356
    %5809 = vmatprep.subr.bf16.mxu0 %v5361
    %5810 = vmatpush1.bf16.msra.mxu0 %v5360
    %5811 = vmatprep.subr.bf16.mxu0 %v5365
    %5812 = vmatpush1.bf16.msra.mxu0 %v5364
    %5813 = vmatprep.subr.bf16.mxu0 %v5369
    %5814 = vmatpush1.bf16.msra.mxu0 %v5368
    %5815 = vmatprep.subr.bf16.mxu0 %v5373
    %5816 = vmatpush1.bf16.msra.mxu0 %v5372
    %5817 = vmatprep.subr.bf16.mxu0 %v5377
    %5818 = vmatpush1.bf16.msra.mxu0 %v5376
    %5819 = vmatprep.subr.bf16.mxu0 %v5381
    %5820 = vmatpush1.bf16.msra.mxu0 %v5380
    %5821 = vmatprep.subr.bf16.mxu0 %v5385
    %5822 = vmatpush1.bf16.msra.mxu0 %v5384
    %5823 = vmatprep.subr.bf16.mxu0 %v5389
    %5824 = vmatpush1.bf16.msra.mxu0 %v5388
    %5825 = vmatprep.subr.bf16.mxu0 %v5393
    %5826 = vmatpush1.bf16.msra.mxu0 %v5392
    %5827 = vmatprep.subr.bf16.mxu0 %v5397
    %5828 = vmatpush1.bf16.msra.mxu0 %v5396
    %5829 = vmatprep.subr.bf16.mxu0 %v5401
    %5830 = vmatpush1.bf16.msra.mxu0 %v5400
    %5831 = vmatprep.mubr.bf16.mxu0 %v4419
    %5832 = vmatmul.mubr.bf16.gmra.mrb[0].mxu0 %v4418
    %v5833 = vpop.f32.mrb[0].mxu0
    %v5834 = vadd.f32 %v5793, %v5833
    %v5835 = vpop.f32.mrb[0].mxu0
    %v5836 = vadd.f32 %v5795, %v5835
    %v5837 = vpop.f32.mrb[0].mxu0
    %v5838 = vpop.f32.mrb[0].mxu0
    %5839 = vdwg.mxu0
    %v5840 = vmax.f32 %v5711, 0.0
    %v5841 = vmax.f32 %v5713, 0.0
    %v5842 = vmax.f32 %v5834, 0.0
    %v5843 = vmax.f32 %v5836, 0.0
    %v5844 = vpack.c.bf16 %v5840, %v5840
    %v5845 = vpack.c.bf16 %v5841, %v5841
    %v5846 = vpack.c.bf16 %v5842, %v5842
    %v5847 = vpack.c.bf16 %v5843, %v5843
    %v5848 = vld [vmem:[#allocation10] sm:$0xff]
    %v5849 = vld [vmem:[#allocation10 + $0x8] sm:$0xff]
    %v5850 = vld [vmem:[#allocation10 + $0x10] sm:$0xff]
    %v5851 = vld [vmem:[#allocation10 + $0x18] sm:$0xff]
    %v5852 = vld [vmem:[#allocation10 + $0x20] sm:$0xff]
    %v5853 = vld [vmem:[#allocation10 + $0x28] sm:$0xff]
    %v5854 = vld [vmem:[#allocation10 + $0x30] sm:$0xff]
    %v5855 = vld [vmem:[#allocation10 + $0x38] sm:$0xff]
    %v5856 = vld [vmem:[#allocation10 + $0x40] sm:$0xff]
    %v5857 = vld [vmem:[#allocation10 + $0x48] sm:$0xff]
    %v5858 = vld [vmem:[#allocation10 + $0x50] sm:$0xff]
    %v5859 = vld [vmem:[#allocation10 + $0x58] sm:$0xff]
    %v5860 = vld [vmem:[#allocation10 + $0x60] sm:$0xff]
    %v5861 = vld [vmem:[#allocation10 + $0x68] sm:$0xff]
    %v5862 = vld [vmem:[#allocation10 + $0x70] sm:$0xff]
    %v5863 = vld [vmem:[#allocation10 + $0x78] sm:$0xff]
    %v5864 = vld [vmem:[#allocation10 + $0x80] sm:$0xff]
    %v5865 = vld [vmem:[#allocation10 + $0x88] sm:$0xff]
    %v5866 = vld [vmem:[#allocation10 + $0x90] sm:$0xff]
    %v5867 = vld [vmem:[#allocation10 + $0x98] sm:$0xff]
    %v5868 = vld [vmem:[#allocation10 + $0xa0] sm:$0xff]
    %v5869 = vld [vmem:[#allocation10 + $0xa8] sm:$0xff]
    %v5870 = vld [vmem:[#allocation10 + $0xb0] sm:$0xff]
    %v5871 = vld [vmem:[#allocation10 + $0xb8] sm:$0xff]
    %v5872 = vld [vmem:[#allocation10 + $0xc0] sm:$0xff]
    %v5873 = vld [vmem:[#allocation10 + $0xc8] sm:$0xff]
    %v5874 = vld [vmem:[#allocation10 + $0xd0] sm:$0xff]
    %v5875 = vld [vmem:[#allocation10 + $0xd8] sm:$0xff]
    %v5876 = vld [vmem:[#allocation10 + $0xe0] sm:$0xff]
    %v5877 = vld [vmem:[#allocation10 + $0xe8] sm:$0xff]
    %v5878 = vld [vmem:[#allocation10 + $0xf0] sm:$0xff]
    %v5879 = vld [vmem:[#allocation10 + $0xf8] sm:$0xff]
    %v5880 = vld [vmem:[#allocation10 + $0x100] sm:$0xff]
    %v5881 = vld [vmem:[#allocation10 + $0x108] sm:$0xff]
    %v5882 = vld [vmem:[#allocation10 + $0x110] sm:$0xff]
    %v5883 = vld [vmem:[#allocation10 + $0x118] sm:$0xff]
    %v5884 = vld [vmem:[#allocation10 + $0x120] sm:$0xff]
    %v5885 = vld [vmem:[#allocation10 + $0x128] sm:$0xff]
    %v5886 = vld [vmem:[#allocation10 + $0x130] sm:$0xff]
    %v5887 = vld [vmem:[#allocation10 + $0x138] sm:$0xff]
    %v5888 = vld [vmem:[#allocation10 + $0x140] sm:$0xff]
    %v5889 = vld [vmem:[#allocation10 + $0x148] sm:$0xff]
    %v5890 = vld [vmem:[#allocation10 + $0x150] sm:$0xff]
    %v5891 = vld [vmem:[#allocation10 + $0x158] sm:$0xff]
    %v5892 = vld [vmem:[#allocation10 + $0x160] sm:$0xff]
    %v5893 = vld [vmem:[#allocation10 + $0x168] sm:$0xff]
    %v5894 = vld [vmem:[#allocation10 + $0x170] sm:$0xff]
    %v5895 = vld [vmem:[#allocation10 + $0x178] sm:$0xff]
    %v5896 = vld [vmem:[#allocation10 + $0x180] sm:$0xff]
    %v5897 = vld [vmem:[#allocation10 + $0x188] sm:$0xff]
    %v5898 = vld [vmem:[#allocation10 + $0x190] sm:$0xff]
    %v5899 = vld [vmem:[#allocation10 + $0x198] sm:$0xff]
    %v5900 = vld [vmem:[#allocation10 + $0x1a0] sm:$0xff]
    %v5901 = vld [vmem:[#allocation10 + $0x1a8] sm:$0xff]
    %v5902 = vld [vmem:[#allocation10 + $0x1b0] sm:$0xff]
    %v5903 = vld [vmem:[#allocation10 + $0x1b8] sm:$0xff]
    %v5904 = vld [vmem:[#allocation10 + $0x1c0] sm:$0xff]
    %v5905 = vld [vmem:[#allocation10 + $0x1c8] sm:$0xff]
    %v5906 = vld [vmem:[#allocation10 + $0x1d0] sm:$0xff]
    %v5907 = vld [vmem:[#allocation10 + $0x1d8] sm:$0xff]
    %v5908 = vld [vmem:[#allocation10 + $0x1e0] sm:$0xff]
    %v5909 = vld [vmem:[#allocation10 + $0x1e8] sm:$0xff]
    %v5910 = vld [vmem:[#allocation10 + $0x1f0] sm:$0xff]
    %v5911 = vld [vmem:[#allocation10 + $0x1f8] sm:$0xff]
    %v5912 = vld [vmem:[#allocation11] sm:$0x3]
    %v5914 = vlaneseq
    %v5915 = vshrl.u32 %v5914, 7
    %v5916 = vsub.s32 0, %v5915
    %v5917 = vrot.slane %v5912, %v5916
    %v5918 = vlaneseq
    %v5919 = vshrl.u32 %v5918, 7
    %v5920 = vsub.s32 1, %v5919
    %v5921 = vrot.slane %v5912, %v5920
    %v5988 = vunpack.c.l.b16 %v5848
    %v5989 = vunpack.c.h.b16 %v5848
    %v5990 = vunpack.c.l.b16 %v5849
    %v5991 = vunpack.c.h.b16 %v5849
    %v5992 = vunpack.c.l.b16 %v5850
    %v5993 = vunpack.c.h.b16 %v5850
    %v5994 = vunpack.c.l.b16 %v5851
    %v5995 = vunpack.c.h.b16 %v5851
    %v5996 = vunpack.c.l.b16 %v5852
    %v5997 = vunpack.c.h.b16 %v5852
    %v5998 = vunpack.c.l.b16 %v5853
    %v5999 = vunpack.c.h.b16 %v5853
    %v6000 = vunpack.c.l.b16 %v5854
    %v6001 = vunpack.c.h.b16 %v5854
    %v6002 = vunpack.c.l.b16 %v5855
    %v6003 = vunpack.c.h.b16 %v5855
    %v6004 = vunpack.c.l.b16 %v5856
    %v6005 = vunpack.c.h.b16 %v5856
    %v6006 = vunpack.c.l.b16 %v5857
    %v6007 = vunpack.c.h.b16 %v5857
    %v6008 = vunpack.c.l.b16 %v5858
    %v6009 = vunpack.c.h.b16 %v5858
    %v6010 = vunpack.c.l.b16 %v5859
    %v6011 = vunpack.c.h.b16 %v5859
    %v6012 = vunpack.c.l.b16 %v5860
    %v6013 = vunpack.c.h.b16 %v5860
    %v6014 = vunpack.c.l.b16 %v5861
    %v6015 = vunpack.c.h.b16 %v5861
    %v6016 = vunpack.c.l.b16 %v5862
    %v6017 = vunpack.c.h.b16 %v5862
    %v6018 = vunpack.c.l.b16 %v5863
    %v6019 = vunpack.c.h.b16 %v5863
    %v6020 = vunpack.c.l.b16 %v5864
    %v6021 = vunpack.c.h.b16 %v5864
    %v6022 = vunpack.c.l.b16 %v5865
    %v6023 = vunpack.c.h.b16 %v5865
    %v6024 = vunpack.c.l.b16 %v5866
    %v6025 = vunpack.c.h.b16 %v5866
    %v6026 = vunpack.c.l.b16 %v5867
    %v6027 = vunpack.c.h.b16 %v5867
    %v6028 = vunpack.c.l.b16 %v5868
    %v6029 = vunpack.c.h.b16 %v5868
    %v6030 = vunpack.c.l.b16 %v5869
    %v6031 = vunpack.c.h.b16 %v5869
    %v6032 = vunpack.c.l.b16 %v5870
    %v6033 = vunpack.c.h.b16 %v5870
    %v6034 = vunpack.c.l.b16 %v5871
    %v6035 = vunpack.c.h.b16 %v5871
    %v6036 = vunpack.c.l.b16 %v5872
    %v6037 = vunpack.c.h.b16 %v5872
    %v6038 = vunpack.c.l.b16 %v5873
    %v6039 = vunpack.c.h.b16 %v5873
    %v6040 = vunpack.c.l.b16 %v5874
    %v6041 = vunpack.c.h.b16 %v5874
    %v6042 = vunpack.c.l.b16 %v5875
    %v6043 = vunpack.c.h.b16 %v5875
    %v6044 = vunpack.c.l.b16 %v5876
    %v6045 = vunpack.c.h.b16 %v5876
    %v6046 = vunpack.c.l.b16 %v5877
    %v6047 = vunpack.c.h.b16 %v5877
    %v6048 = vunpack.c.l.b16 %v5878
    %v6049 = vunpack.c.h.b16 %v5878
    %v6050 = vunpack.c.l.b16 %v5879
    %v6051 = vunpack.c.h.b16 %v5879
    %v6052 = vunpack.c.l.b16 %v5880
    %v6053 = vunpack.c.h.b16 %v5880
    %v6054 = vunpack.c.l.b16 %v5881
    %v6055 = vunpack.c.h.b16 %v5881
    %v6056 = vunpack.c.l.b16 %v5882
    %v6057 = vunpack.c.h.b16 %v5882
    %v6058 = vunpack.c.l.b16 %v5883
    %v6059 = vunpack.c.h.b16 %v5883
    %v6060 = vunpack.c.l.b16 %v5884
    %v6061 = vunpack.c.h.b16 %v5884
    %v6062 = vunpack.c.l.b16 %v5885
    %v6063 = vunpack.c.h.b16 %v5885
    %v6064 = vunpack.c.l.b16 %v5886
    %v6065 = vunpack.c.h.b16 %v5886
    %v6066 = vunpack.c.l.b16 %v5887
    %v6067 = vunpack.c.h.b16 %v5887
    %v6068 = vunpack.c.l.b16 %v5888
    %v6069 = vunpack.c.h.b16 %v5888
    %v6070 = vunpack.c.l.b16 %v5889
    %v6071 = vunpack.c.h.b16 %v5889
    %v6072 = vunpack.c.l.b16 %v5890
    %v6073 = vunpack.c.h.b16 %v5890
    %v6074 = vunpack.c.l.b16 %v5891
    %v6075 = vunpack.c.h.b16 %v5891
    %v6076 = vunpack.c.l.b16 %v5892
    %v6077 = vunpack.c.h.b16 %v5892
    %v6078 = vunpack.c.l.b16 %v5893
    %v6079 = vunpack.c.h.b16 %v5893
    %v6080 = vunpack.c.l.b16 %v5894
    %v6081 = vunpack.c.h.b16 %v5894
    %v6082 = vunpack.c.l.b16 %v5895
    %v6083 = vunpack.c.h.b16 %v5895
    %v6084 = vunpack.c.l.b16 %v5896
    %v6085 = vunpack.c.h.b16 %v5896
    %v6086 = vunpack.c.l.b16 %v5897
    %v6087 = vunpack.c.h.b16 %v5897
    %v6088 = vunpack.c.l.b16 %v5898
    %v6089 = vunpack.c.h.b16 %v5898
    %v6090 = vunpack.c.l.b16 %v5899
    %v6091 = vunpack.c.h.b16 %v5899
    %v6092 = vunpack.c.l.b16 %v5900
    %v6093 = vunpack.c.h.b16 %v5900
    %v6094 = vunpack.c.l.b16 %v5901
    %v6095 = vunpack.c.h.b16 %v5901
    %v6096 = vunpack.c.l.b16 %v5902
    %v6097 = vunpack.c.h.b16 %v5902
    %v6098 = vunpack.c.l.b16 %v5903
    %v6099 = vunpack.c.h.b16 %v5903
    %v6100 = vunpack.c.l.b16 %v5904
    %v6101 = vunpack.c.h.b16 %v5904
    %v6102 = vunpack.c.l.b16 %v5905
    %v6103 = vunpack.c.h.b16 %v5905
    %v6104 = vunpack.c.l.b16 %v5906
    %v6105 = vunpack.c.h.b16 %v5906
    %v6106 = vunpack.c.l.b16 %v5907
    %v6107 = vunpack.c.h.b16 %v5907
    %v6108 = vunpack.c.l.b16 %v5908
    %v6109 = vunpack.c.h.b16 %v5908
    %v6110 = vunpack.c.l.b16 %v5909
    %v6111 = vunpack.c.h.b16 %v5909
    %v6112 = vunpack.c.l.b16 %v5910
    %v6113 = vunpack.c.h.b16 %v5910
    %v6114 = vunpack.c.l.b16 %v5911
    %v6115 = vunpack.c.h.b16 %v5911
    %v6116 = vpack.c.b16 %v5990, %v5988
    %v6117 = vpack.c.b16 %v5991, %v5989
    %v6118 = vpack.c.b16 %v5994, %v5992
    %v6119 = vpack.c.b16 %v5995, %v5993
    %v6120 = vpack.c.b16 %v5998, %v5996
    %v6121 = vpack.c.b16 %v5999, %v5997
    %v6122 = vpack.c.b16 %v6002, %v6000
    %v6123 = vpack.c.b16 %v6003, %v6001
    %v6124 = vpack.c.b16 %v6006, %v6004
    %v6125 = vpack.c.b16 %v6007, %v6005
    %v6126 = vpack.c.b16 %v6010, %v6008
    %v6127 = vpack.c.b16 %v6011, %v6009
    %v6128 = vpack.c.b16 %v6014, %v6012
    %v6129 = vpack.c.b16 %v6015, %v6013
    %v6130 = vpack.c.b16 %v6018, %v6016
    %v6131 = vpack.c.b16 %v6019, %v6017
    %v6132 = vpack.c.b16 %v6022, %v6020
    %v6133 = vpack.c.b16 %v6023, %v6021
    %v6134 = vpack.c.b16 %v6026, %v6024
    %v6135 = vpack.c.b16 %v6027, %v6025
    %v6136 = vpack.c.b16 %v6030, %v6028
    %v6137 = vpack.c.b16 %v6031, %v6029
    %v6138 = vpack.c.b16 %v6034, %v6032
    %v6139 = vpack.c.b16 %v6035, %v6033
    %v6140 = vpack.c.b16 %v6038, %v6036
    %v6141 = vpack.c.b16 %v6039, %v6037
    %v6142 = vpack.c.b16 %v6042, %v6040
    %v6143 = vpack.c.b16 %v6043, %v6041
    %v6144 = vpack.c.b16 %v6046, %v6044
    %v6145 = vpack.c.b16 %v6047, %v6045
    %v6146 = vpack.c.b16 %v6050, %v6048
    %v6147 = vpack.c.b16 %v6051, %v6049
    %v6148 = vpack.c.b16 %v6054, %v6052
    %v6149 = vpack.c.b16 %v6055, %v6053
    %v6150 = vpack.c.b16 %v6058, %v6056
    %v6151 = vpack.c.b16 %v6059, %v6057
    %v6152 = vpack.c.b16 %v6062, %v6060
    %v6153 = vpack.c.b16 %v6063, %v6061
    %v6154 = vpack.c.b16 %v6066, %v6064
    %v6155 = vpack.c.b16 %v6067, %v6065
    %v6156 = vpack.c.b16 %v6070, %v6068
    %v6157 = vpack.c.b16 %v6071, %v6069
    %v6158 = vpack.c.b16 %v6074, %v6072
    %v6159 = vpack.c.b16 %v6075, %v6073
    %v6160 = vpack.c.b16 %v6078, %v6076
    %v6161 = vpack.c.b16 %v6079, %v6077
    %v6162 = vpack.c.b16 %v6082, %v6080
    %v6163 = vpack.c.b16 %v6083, %v6081
    %v6164 = vpack.c.b16 %v6086, %v6084
    %v6165 = vpack.c.b16 %v6087, %v6085
    %v6166 = vpack.c.b16 %v6090, %v6088
    %v6167 = vpack.c.b16 %v6091, %v6089
    %v6168 = vpack.c.b16 %v6094, %v6092
    %v6169 = vpack.c.b16 %v6095, %v6093
    %v6170 = vpack.c.b16 %v6098, %v6096
    %v6171 = vpack.c.b16 %v6099, %v6097
    %v6172 = vpack.c.b16 %v6102, %v6100
    %v6173 = vpack.c.b16 %v6103, %v6101
    %v6174 = vpack.c.b16 %v6106, %v6104
    %v6175 = vpack.c.b16 %v6107, %v6105
    %v6176 = vpack.c.b16 %v6110, %v6108
    %v6177 = vpack.c.b16 %v6111, %v6109
    %v6178 = vpack.c.b16 %v6114, %v6112
    %v6179 = vpack.c.b16 %v6115, %v6113
    %6244 = vmatprep.subr.bf16.mxu0 %v6117
    %6245 = vmatpush1.bf16.msra.mxu0 %v6116
    %6246 = vmatprep.subr.bf16.mxu0 %v6119
    %6247 = vmatpush1.bf16.msra.mxu0 %v6118
    %6248 = vmatprep.subr.bf16.mxu0 %v6121
    %6249 = vmatpush1.bf16.msra.mxu0 %v6120
    %6250 = vmatprep.subr.bf16.mxu0 %v6123
    %6251 = vmatpush1.bf16.msra.mxu0 %v6122
    %6252 = vmatprep.subr.bf16.mxu0 %v6125
    %6253 = vmatpush1.bf16.msra.mxu0 %v6124
    %6254 = vmatprep.subr.bf16.mxu0 %v6127
    %6255 = vmatpush1.bf16.msra.mxu0 %v6126
    %6256 = vmatprep.subr.bf16.mxu0 %v6129
    %6257 = vmatpush1.bf16.msra.mxu0 %v6128
    %6258 = vmatprep.subr.bf16.mxu0 %v6131
    %6259 = vmatpush1.bf16.msra.mxu0 %v6130
    %6260 = vmatprep.subr.bf16.mxu0 %v6133
    %6261 = vmatpush1.bf16.msra.mxu0 %v6132
    %6262 = vmatprep.subr.bf16.mxu0 %v6135
    %6263 = vmatpush1.bf16.msra.mxu0 %v6134
    %6264 = vmatprep.subr.bf16.mxu0 %v6137
    %6265 = vmatpush1.bf16.msra.mxu0 %v6136
    %6266 = vmatprep.subr.bf16.mxu0 %v6139
    %6267 = vmatpush1.bf16.msra.mxu0 %v6138
    %6268 = vmatprep.subr.bf16.mxu0 %v6141
    %6269 = vmatpush1.bf16.msra.mxu0 %v6140
    %6270 = vmatprep.subr.bf16.mxu0 %v6143
    %6271 = vmatpush1.bf16.msra.mxu0 %v6142
    %6272 = vmatprep.subr.bf16.mxu0 %v6145
    %6273 = vmatpush1.bf16.msra.mxu0 %v6144
    %6274 = vmatprep.subr.bf16.mxu0 %v6147
    %6275 = vmatpush1.bf16.msra.mxu0 %v6146
    %6276 = vmatprep.mubr.bf16.mxu0 %v5845
    %6277 = vmatmul.mubr.bf16.gmra.mrb[0].mxu0 %v5844
    %v6278 = vpop.f32.mrb[0].mxu0
    %v6279 = vadd.f32 %v5917, %v6278
    %v6280 = vpop.f32.mrb[0].mxu0
    %v6281 = vadd.f32 %v5921, %v6280
    %v6282 = vpop.f32.mrb[0].mxu0
    %v6283 = vpop.f32.mrb[0].mxu0
    %6284 = vdwg.mxu0
    %6285 = vmatprep.subr.bf16.mxu0 %v6149
    %6286 = vmatpush1.bf16.msra.mxu0 %v6148
    %6287 = vmatprep.subr.bf16.mxu0 %v6151
    %6288 = vmatpush1.bf16.msra.mxu0 %v6150
    %6289 = vmatprep.subr.bf16.mxu0 %v6153
    %6290 = vmatpush1.bf16.msra.mxu0 %v6152
    %6291 = vmatprep.subr.bf16.mxu0 %v6155
    %6292 = vmatpush1.bf16.msra.mxu0 %v6154
    %6293 = vmatprep.subr.bf16.mxu0 %v6157
    %6294 = vmatpush1.bf16.msra.mxu0 %v6156
    %6295 = vmatprep.subr.bf16.mxu0 %v6159
    %6296 = vmatpush1.bf16.msra.mxu0 %v6158
    %6297 = vmatprep.subr.bf16.mxu0 %v6161
    %6298 = vmatpush1.bf16.msra.mxu0 %v6160
    %6299 = vmatprep.subr.bf16.mxu0 %v6163
    %6300 = vmatpush1.bf16.msra.mxu0 %v6162
    %6301 = vmatprep.subr.bf16.mxu0 %v6165
    %6302 = vmatpush1.bf16.msra.mxu0 %v6164
    %6303 = vmatprep.subr.bf16.mxu0 %v6167
    %6304 = vmatpush1.bf16.msra.mxu0 %v6166
    %6305 = vmatprep.subr.bf16.mxu0 %v6169
    %6306 = vmatpush1.bf16.msra.mxu0 %v6168
    %6307 = vmatprep.subr.bf16.mxu0 %v6171
    %6308 = vmatpush1.bf16.msra.mxu0 %v6170
    %6309 = vmatprep.subr.bf16.mxu0 %v6173
    %6310 = vmatpush1.bf16.msra.mxu0 %v6172
    %6311 = vmatprep.subr.bf16.mxu0 %v6175
    %6312 = vmatpush1.bf16.msra.mxu0 %v6174
    %6313 = vmatprep.subr.bf16.mxu0 %v6177
    %6314 = vmatpush1.bf16.msra.mxu0 %v6176
    %6315 = vmatprep.subr.bf16.mxu0 %v6179
    %6316 = vmatpush1.bf16.msra.mxu0 %v6178
    %6317 = vmatprep.mubr.bf16.mxu0 %v5847
    %6318 = vmatmul.mubr.bf16.gmra.mrb[0].mxu0 %v5846
    %v6319 = vpop.f32.mrb[0].mxu0
    %v6320 = vadd.f32 %v6279, %v6319
    %v6321 = vpop.f32.mrb[0].mxu0
    %v6322 = vadd.f32 %v6281, %v6321
    %v6323 = vpop.f32.mrb[0].mxu0
    %v6324 = vpop.f32.mrb[0].mxu0
    %6325 = vdwg.mxu0
    %v6326 = vmax.f32 %v6320, 0.0
    %v6327 = vmax.f32 %v6322, 0.0
    %v6328 = vpack.c.bf16 %v6326, %v6326
    %v6329 = vpack.c.bf16 %v6327, %v6327
    %v6330 = vld [vmem:[#allocation13] sm:$0xff]
    %v6331 = vld [vmem:[#allocation13 + $0x8] sm:$0xff]
    %v6332 = vld [vmem:[#allocation13 + $0x10] sm:$0xff]
    %v6333 = vld [vmem:[#allocation13 + $0x18] sm:$0xff]
    %v6334 = vld [vmem:[#allocation13 + $0x20] sm:$0xff]
    %v6335 = vld [vmem:[#allocation13 + $0x28] sm:$0xff]
    %v6336 = vld [vmem:[#allocation13 + $0x30] sm:$0xff]
    %v6337 = vld [vmem:[#allocation13 + $0x38] sm:$0xff]
    %v6338 = vld [vmem:[#allocation13 + $0x40] sm:$0xff]
    %v6339 = vld [vmem:[#allocation13 + $0x48] sm:$0xff]
    %v6340 = vld [vmem:[#allocation13 + $0x50] sm:$0xff]
    %v6341 = vld [vmem:[#allocation13 + $0x58] sm:$0xff]
    %v6342 = vld [vmem:[#allocation13 + $0x60] sm:$0xff]
    %v6343 = vld [vmem:[#allocation13 + $0x68] sm:$0xff]
    %v6344 = vld [vmem:[#allocation13 + $0x70] sm:$0xff]
    %v6345 = vld [vmem:[#allocation13 + $0x78] sm:$0xff]
    %v6346 = vld [vmem:[#allocation13 + $0x80] sm:$0xff]
    %v6347 = vld [vmem:[#allocation13 + $0x88] sm:$0xff]
    %v6348 = vld [vmem:[#allocation13 + $0x90] sm:$0xff]
    %v6349 = vld [vmem:[#allocation13 + $0x98] sm:$0xff]
    %v6350 = vld [vmem:[#allocation13 + $0xa0] sm:$0xff]
    %v6351 = vld [vmem:[#allocation13 + $0xa8] sm:$0xff]
    %v6352 = vld [vmem:[#allocation13 + $0xb0] sm:$0xff]
    %v6353 = vld [vmem:[#allocation13 + $0xb8] sm:$0xff]
    %v6354 = vld [vmem:[#allocation13 + $0xc0] sm:$0xff]
    %v6355 = vld [vmem:[#allocation13 + $0xc8] sm:$0xff]
    %v6356 = vld [vmem:[#allocation13 + $0xd0] sm:$0xff]
    %v6357 = vld [vmem:[#allocation13 + $0xd8] sm:$0xff]
    %v6358 = vld [vmem:[#allocation13 + $0xe0] sm:$0xff]
    %v6359 = vld [vmem:[#allocation13 + $0xe8] sm:$0xff]
    %v6360 = vld [vmem:[#allocation13 + $0xf0] sm:$0xff]
    %v6361 = vld [vmem:[#allocation13 + $0xf8] sm:$0xff]
    %v6362 = vld [vmem:[#allocation14] sm:$0x3]
    %v6364 = vlaneseq
    %v6365 = vshrl.u32 %v6364, 7
    %v6366 = vsub.s32 0, %v6365
    %v6367 = vrot.slane %v6362, %v6366
    %v6368 = vlaneseq
    %v6369 = vshrl.u32 %v6368, 7
    %v6370 = vsub.s32 1, %v6369
    %v6371 = vrot.slane %v6362, %v6370
    %v6406 = vunpack.c.l.b16 %v6330
    %v6407 = vunpack.c.h.b16 %v6330
    %v6408 = vunpack.c.l.b16 %v6331
    %v6409 = vunpack.c.h.b16 %v6331
    %v6410 = vunpack.c.l.b16 %v6332
    %v6411 = vunpack.c.h.b16 %v6332
    %v6412 = vunpack.c.l.b16 %v6333
    %v6413 = vunpack.c.h.b16 %v6333
    %v6414 = vunpack.c.l.b16 %v6334
    %v6415 = vunpack.c.h.b16 %v6334
    %v6416 = vunpack.c.l.b16 %v6335
    %v6417 = vunpack.c.h.b16 %v6335
    %v6418 = vunpack.c.l.b16 %v6336
    %v6419 = vunpack.c.h.b16 %v6336
    %v6420 = vunpack.c.l.b16 %v6337
    %v6421 = vunpack.c.h.b16 %v6337
    %v6422 = vunpack.c.l.b16 %v6338
    %v6423 = vunpack.c.h.b16 %v6338
    %v6424 = vunpack.c.l.b16 %v6339
    %v6425 = vunpack.c.h.b16 %v6339
    %v6426 = vunpack.c.l.b16 %v6340
    %v6427 = vunpack.c.h.b16 %v6340
    %v6428 = vunpack.c.l.b16 %v6341
    %v6429 = vunpack.c.h.b16 %v6341
    %v6430 = vunpack.c.l.b16 %v6342
    %v6431 = vunpack.c.h.b16 %v6342
    %v6432 = vunpack.c.l.b16 %v6343
    %v6433 = vunpack.c.h.b16 %v6343
    %v6434 = vunpack.c.l.b16 %v6344
    %v6435 = vunpack.c.h.b16 %v6344
    %v6436 = vunpack.c.l.b16 %v6345
    %v6437 = vunpack.c.h.b16 %v6345
    %v6438 = vunpack.c.l.b16 %v6346
    %v6439 = vunpack.c.h.b16 %v6346
    %v6440 = vunpack.c.l.b16 %v6347
    %v6441 = vunpack.c.h.b16 %v6347
    %v6442 = vunpack.c.l.b16 %v6348
    %v6443 = vunpack.c.h.b16 %v6348
    %v6444 = vunpack.c.l.b16 %v6349
    %v6445 = vunpack.c.h.b16 %v6349
    %v6446 = vunpack.c.l.b16 %v6350
    %v6447 = vunpack.c.h.b16 %v6350
    %v6448 = vunpack.c.l.b16 %v6351
    %v6449 = vunpack.c.h.b16 %v6351
    %v6450 = vunpack.c.l.b16 %v6352
    %v6451 = vunpack.c.h.b16 %v6352
    %v6452 = vunpack.c.l.b16 %v6353
    %v6453 = vunpack.c.h.b16 %v6353
    %v6454 = vunpack.c.l.b16 %v6354
    %v6455 = vunpack.c.h.b16 %v6354
    %v6456 = vunpack.c.l.b16 %v6355
    %v6457 = vunpack.c.h.b16 %v6355
    %v6458 = vunpack.c.l.b16 %v6356
    %v6459 = vunpack.c.h.b16 %v6356
    %v6460 = vunpack.c.l.b16 %v6357
    %v6461 = vunpack.c.h.b16 %v6357
    %v6462 = vunpack.c.l.b16 %v6358
    %v6463 = vunpack.c.h.b16 %v6358
    %v6464 = vunpack.c.l.b16 %v6359
    %v6465 = vunpack.c.h.b16 %v6359
    %v6466 = vunpack.c.l.b16 %v6360
    %v6467 = vunpack.c.h.b16 %v6360
    %v6468 = vunpack.c.l.b16 %v6361
    %v6469 = vunpack.c.h.b16 %v6361
    %v6470 = vpack.c.b16 %v6408, %v6406
    %v6471 = vpack.c.b16 %v6409, %v6407
    %v6472 = vpack.c.b16 %v6412, %v6410
    %v6473 = vpack.c.b16 %v6413, %v6411
    %v6474 = vpack.c.b16 %v6416, %v6414
    %v6475 = vpack.c.b16 %v6417, %v6415
    %v6476 = vpack.c.b16 %v6420, %v6418
    %v6477 = vpack.c.b16 %v6421, %v6419
    %v6478 = vpack.c.b16 %v6424, %v6422
    %v6479 = vpack.c.b16 %v6425, %v6423
    %v6480 = vpack.c.b16 %v6428, %v6426
    %v6481 = vpack.c.b16 %v6429, %v6427
    %v6482 = vpack.c.b16 %v6432, %v6430
    %v6483 = vpack.c.b16 %v6433, %v6431
    %v6484 = vpack.c.b16 %v6436, %v6434
    %v6485 = vpack.c.b16 %v6437, %v6435
    %v6486 = vpack.c.b16 %v6440, %v6438
    %v6487 = vpack.c.b16 %v6441, %v6439
    %v6488 = vpack.c.b16 %v6444, %v6442
    %v6489 = vpack.c.b16 %v6445, %v6443
    %v6490 = vpack.c.b16 %v6448, %v6446
    %v6491 = vpack.c.b16 %v6449, %v6447
    %v6492 = vpack.c.b16 %v6452, %v6450
    %v6493 = vpack.c.b16 %v6453, %v6451
    %v6494 = vpack.c.b16 %v6456, %v6454
    %v6495 = vpack.c.b16 %v6457, %v6455
    %v6496 = vpack.c.b16 %v6460, %v6458
    %v6497 = vpack.c.b16 %v6461, %v6459
    %v6498 = vpack.c.b16 %v6464, %v6462
    %v6499 = vpack.c.b16 %v6465, %v6463
    %v6500 = vpack.c.b16 %v6468, %v6466
    %v6501 = vpack.c.b16 %v6469, %v6467
    %6534 = vmatprep.subr.bf16.mxu0 %v6471
    %6535 = vmatpush1.bf16.msra.mxu0 %v6470
    %6536 = vmatprep.subr.bf16.mxu0 %v6473
    %6537 = vmatpush1.bf16.msra.mxu0 %v6472
    %6538 = vmatprep.subr.bf16.mxu0 %v6475
    %6539 = vmatpush1.bf16.msra.mxu0 %v6474
    %6540 = vmatprep.subr.bf16.mxu0 %v6477
    %6541 = vmatpush1.bf16.msra.mxu0 %v6476
    %6542 = vmatprep.subr.bf16.mxu0 %v6479
    %6543 = vmatpush1.bf16.msra.mxu0 %v6478
    %6544 = vmatprep.subr.bf16.mxu0 %v6481
    %6545 = vmatpush1.bf16.msra.mxu0 %v6480
    %6546 = vmatprep.subr.bf16.mxu0 %v6483
    %6547 = vmatpush1.bf16.msra.mxu0 %v6482
    %6548 = vmatprep.subr.bf16.mxu0 %v6485
    %6549 = vmatpush1.bf16.msra.mxu0 %v6484
    %6550 = vmatprep.subr.bf16.mxu0 %v6487
    %6551 = vmatpush1.bf16.msra.mxu0 %v6486
    %6552 = vmatprep.subr.bf16.mxu0 %v6489
    %6553 = vmatpush1.bf16.msra.mxu0 %v6488
    %6554 = vmatprep.subr.bf16.mxu0 %v6491
    %6555 = vmatpush1.bf16.msra.mxu0 %v6490
    %6556 = vmatprep.subr.bf16.mxu0 %v6493
    %6557 = vmatpush1.bf16.msra.mxu0 %v6492
    %6558 = vmatprep.subr.bf16.mxu0 %v6495
    %6559 = vmatpush1.bf16.msra.mxu0 %v6494
    %6560 = vmatprep.subr.bf16.mxu0 %v6497
    %6561 = vmatpush1.bf16.msra.mxu0 %v6496
    %6562 = vmatprep.subr.bf16.mxu0 %v6499
    %6563 = vmatpush1.bf16.msra.mxu0 %v6498
    %6564 = vmatprep.subr.bf16.mxu0 %v6501
    %6565 = vmatpush1.bf16.msra.mxu0 %v6500
    %6566 = vmatprep.mubr.bf16.mxu0 %v6329
    %6567 = vmatmul.mubr.bf16.gmra.mrb[0].mxu0 %v6328
    %v6568 = vpop.f32.mrb[0].mxu0
    %v6569 = vadd.f32 %v6367, %v6568
    %v6570 = vpop.f32.mrb[0].mxu0
    %v6571 = vadd.f32 %v6371, %v6570
    %v6572 = vpop.f32.mrb[0].mxu0
    %v6573 = vpop.f32.mrb[0].mxu0
    %6574 = vdwg.mxu0
    %6575 = vst [vmem:[#allocation16] sm:$0xff] %v6569
    %6576 = vst [vmem:[#allocation16 + $0x8] sm:$0xff] %v6571
    // Predicated region
    $region70: #{mymodel_forward.1} parent=1 // pred_check
      _
    $region71: #{mymodel_forward.1} parent=1 // pred_check_branch
      %6578 = sbr.rel (0) target = $region73
    $region72: #{mymodel_forward.1} parent=1 // pred_region
      %s6580 = ssub.s32 256, 256
      %6581 = vsyncadd [#allocation4], %s6580
      %s6583 = sshll.u32 [#allocation16], 4
      %s6584 = int_to_ptr.vmem [resolvable:$true] %s6583
      %6586 = dma.vmem_to_hbm [thread:$0]  %s6584, 256, %s9, [#allocation4]
    $region73: #{mymodel_forward.1} parent=1 // pred_fallthru
      _
    // Predicated region
    $region74: #{mymodel_forward.1} parent=1 // pred_check
      _
    $region75: #{mymodel_forward.1} parent=1 // pred_check_branch
      %6588 = sbr.rel (0) target = $region77
    $region76: #{mymodel_forward.1} parent=1 // pred_region
      %6589 = dma.done [#allocation4], 256
    $region77: #{mymodel_forward.1} parent=1 // pred_fallthru
      _
    %6590 = vsyncpa [#allocation3], 1
    %6591 = vsyncpa [#allocation6], 1
    %6592 = vsyncpa [#allocation9], 1
    %6593 = vsyncpa [#allocation12], 1
    %6594 = vsyncpa [#allocation15], 1
    %6595 = vsyncpa [#allocation4], 1

</llo_original>
